<compile_context>
chip_gen: v7x
topology: tpu7x:2x2x1
jax: 0.10.0
libtpu: 0.0.40
codegen_flags: <defaults>
</compile_context>

<pallas_src>
import functools

import jax
import jax.numpy as jnp
import numpy as np
from jax import lax
from jax.experimental import pallas as pl
from jax.experimental.pallas import tpu as pltpu


def _round_up(x, m):
    return ((x + m - 1) // m) * m


def _pick_chunk(total, target):
    c = max(1, min(total, target))
    while total % c:
        c -= 1
    return c


def _pick_batch_tiling(batch, batch_tile):
    # Batch rows are padded/tile-aligned to 16 sublanes so the bf16 xin blocks
    # stay multiples of the (16, 128) packed tile.
    if batch_tile is not None:
        bt = _round_up(batch_tile, 16)
        return _round_up(batch, bt), bt
    bp = _round_up(batch, 16)
    if bp <= 256:          # fill MXU rows (256 on v6e/v7x)
        return bp, bp
    # TODO(synk): prefer a 128-row tile on v5e (4x128^2 MXU).
    return _round_up(batch, 256), 256


# ----------------------------------------------------------------------------
# Fused kernel: LSTM stack + time-mean + seq MLP head + intent MLP head.
# ----------------------------------------------------------------------------
def fused_forward_kernel(num_layers, t_total, *args):
    n_in = 1 + 3 * num_layers + 14
    xin_ref = args[0]                                  # (Tc, Bt, In0) bf16
    lstm_refs = args[1:1 + 3 * num_layers]             # per layer: w_ih, w_hh, b
    (w1_ref, b1_ref, w2_ref, b2_ref,
     wi1_ref, bi1_ref, g1_ref, be1_ref,
     wi2_ref, bi2_ref, g2_ref, be2_ref,
     wi3_ref, bi3_ref) = args[1 + 3 * num_layers:n_in]
    xseq_ref = args[n_in]                              # (Bt, Dp) f32
    xint_ref = args[n_in + 1]                          # (Bt, Ip) f32
    zx_scr = args[n_in + 2]                            # (Tc*Bt, 4*Dp) f32
    hst_scr = args[n_in + 3]                           # (L, Bt, Dp) f32
    cst_scr = args[n_in + 4]                           # (L, Bt, Dp) f32
    hsum_scr = args[n_in + 5]                          # (Bt, Dp) f32 time-sum
    hseq_scr = args[n_in + 6] if num_layers > 1 else None  # (Tc, Bt, Dp) bf16

    Tc, Bt, _ = xin_ref.shape
    Dp = w1_ref.shape[0]
    t_chunk = pl.program_id(1)

    # Reset the carried state at the start of each batch tile's time sweep.
    @pl.when(t_chunk == 0)
    def _():
        hst_scr[...] = jnp.zeros_like(hst_scr)
        cst_scr[...] = jnp.zeros_like(cst_scr)
        hsum_scr[...] = jnp.zeros_like(hsum_scr)

    cur = xin_ref[...]                                 # (Tc, Bt, In) bf16
    for l in range(num_layers):
        wih_ref, whh_ref, b_ref = lstm_refs[3 * l:3 * l + 3]
        in_dim = wih_ref.shape[0]
        last = (l == num_layers - 1)

        # Hoisted per-chunk input projection + bias fold: one big MXU matmul,
        # landed in VMEM scratch so the recurrence reads it via pl.ds.
        zx_scr[...] = (jnp.dot(cur.reshape(Tc * Bt, in_dim).astype(wih_ref.dtype),
                               wih_ref[...],
                               preferred_element_type=jnp.float32)
                       + b_ref[...])

        whh = whh_ref[...]                             # resident (Dp, 4*Dp) bf16
        carry0 = (hst_scr[l], cst_scr[l],
                  hsum_scr[...] if last else jnp.zeros((Bt, Dp), jnp.float32))

        def step(t, carry, last=last):
            h, c, hs = carry
            r0 = pl.multiple_of(t * Bt, 8)
            z = zx_scr[pl.ds(r0, Bt), :] + jnp.dot(
                h.astype(whh.dtype), whh, preferred_element_type=jnp.float32)
            # Gate layout after init-time reordering: [i | f | o | g(tanh)],
            # so one wide sigmoid covers all three sigmoid gates.
            zs = jax.nn.sigmoid(z[:, :3 * Dp])
            i_g = zs[:, 0 * Dp:1 * Dp]
            f_g = zs[:, 1 * Dp:2 * Dp]
            o_g = zs[:, 2 * Dp:3 * Dp]
            g_g = jnp.tanh(z[:, 3 * Dp:4 * Dp])
            c = f_g * c + i_g * g_g
            h = o_g * jnp.tanh(c)
            if last:
                hs = hs + h                            # running time-sum
            else:
                hseq_scr[t] = h.astype(hseq_scr.dtype)  # bf16 for the next layer
            return (h, c, hs)

        h, c, hs = lax.fori_loop(0, Tc, step, carry0,
                                 unroll=True if Tc <= 16 else 4)
        hst_scr[l] = h
        cst_scr[l] = c
        if last:
            hsum_scr[...] = hs
        else:
            cur = hseq_scr[...]

    # Heads run once, on the last time chunk of each batch tile.
    @pl.when(t_chunk == pl.num_programs(1) - 1)
    def _():
        mt = (hsum_scr[...] * (1.0 / t_total)).astype(w1_ref.dtype)

        # ---- sequence head: Linear -> ReLU -> Linear, then final ReLU ----
        h1 = jnp.maximum(
            jnp.dot(mt, w1_ref[...], preferred_element_type=jnp.float32)
            + b1_ref[...], 0.0)
        s = jnp.dot(h1.astype(w2_ref.dtype), w2_ref[...],
                    preferred_element_type=jnp.float32) + b2_ref[...]
        xseq_ref[...] = jnp.maximum(s, 0.0)

        def layernorm(y, gamma, beta):
            mu = jnp.mean(y, axis=-1, keepdims=True)
            var = jnp.mean(jnp.square(y - mu), axis=-1, keepdims=True)
            return (y - mu) * lax.rsqrt(var + 1e-5) * gamma + beta

        # ---- intent head: Linear -> LN -> ReLU -> Linear -> LN -> ReLU -> Linear
        a1 = jnp.dot(mt, wi1_ref[...],
                     preferred_element_type=jnp.float32) + bi1_ref[...]
        a1 = jnp.maximum(layernorm(a1, g1_ref[...], be1_ref[...]), 0.0)
        a2 = jnp.dot(a1.astype(wi2_ref.dtype), wi2_ref[...],
                     preferred_element_type=jnp.float32) + bi2_ref[...]
        a2 = jnp.maximum(layernorm(a2, g2_ref[...], be2_ref[...]), 0.0)
        xint_ref[...] = (jnp.dot(a2.astype(wi3_ref.dtype), wi3_ref[...],
                                 preferred_element_type=jnp.float32)
                         + bi3_ref[...])


def fused_forward(xin_pad, lstm_params, mlp_params, intent_params,
                  *, batch_tile, time_chunk):
    T, Bp, In0 = xin_pad.shape
    num_layers = len(lstm_params)
    Dp = mlp_params[0].shape[0]
    Ip = intent_params[8].shape[1]
    Bt, Tc = batch_tile, time_chunk
    nb, nt = Bp // Bt, T // Tc

    flat_lstm = tuple(p for layer in lstm_params for p in layer)
    args = (xin_pad,) + flat_lstm + tuple(mlp_params) + tuple(intent_params)

    def const_spec(arr):                       # weights: DMA'd once, resident
        zeros = (0,) * arr.ndim
        return pl.BlockSpec(arr.shape, lambda b, t, _z=zeros: _z)

    in_specs = [pl.BlockSpec((Tc, Bt, In0), lambda b, t: (t, b, 0))]
    in_specs += [const_spec(a) for a in args[1:]]
    out_specs = (pl.BlockSpec((Bt, Dp), lambda b, t: (b, 0)),
                 pl.BlockSpec((Bt, Ip), lambda b, t: (b, 0)))

    scratch = [pltpu.VMEM((Tc * Bt, 4 * Dp), jnp.float32),    # zx chunk
               pltpu.VMEM((num_layers, Bt, Dp), jnp.float32),  # h state
               pltpu.VMEM((num_layers, Bt, Dp), jnp.float32),  # c state
               pltpu.VMEM((Bt, Dp), jnp.float32)]              # running time-sum
    if num_layers > 1:
        scratch.append(pltpu.VMEM((Tc, Bt, Dp), jnp.bfloat16))  # inter-layer hseq

    return pl.pallas_call(
        functools.partial(fused_forward_kernel, num_layers, T),
        out_shape=(jax.ShapeDtypeStruct((Bp, Dp), jnp.float32),
                   jax.ShapeDtypeStruct((Bp, Ip), jnp.float32)),
        grid_spec=pltpu.PrefetchScalarGridSpec(
            num_scalar_prefetch=0,
            grid=(nb, nt),
            in_specs=in_specs,
            out_specs=out_specs,
            scratch_shapes=scratch),
        compiler_params=pltpu.CompilerParams(
            dimension_semantics=("parallel", "arbitrary"),
            vmem_limit_bytes=32 * 1024 * 1024),
    )(*args)


# ----------------------------------------------------------------------------
# Parameter init (xavier-uniform, biases zero, like the module's init_weights).
# Returns (padded kernel params, unpadded reference params).
# Padding is zero-filled; padded lanes of h/c/mean/outputs stay exactly zero.
# ----------------------------------------------------------------------------
def _xavier(key, fan_in, fan_out, shape):
    limit = (6.0 / (fan_in + fan_out)) ** 0.5
    return jax.random.uniform(key, shape, jnp.float32, -limit, limit)


def init_params(key, num_classes, hidden_size, col_dim, reg_dim,
                num_layers, intent_num):
    D = col_dim * reg_dim
    Dp = _round_up(D, 128)
    Ip = _round_up(intent_num, 128)
    in0 = D * hidden_size
    keys = iter(jax.random.split(key, 8 + 2 * num_layers))

    emb = _xavier(next(keys), num_classes, hidden_size,
                  (num_classes, hidden_size))

    # PyTorch gate order (i, f, g, o) -> kernel order (i, f, o, g): the three
    # sigmoid gates become contiguous lanes [0, 3*Dp), tanh gate [3*Dp, 4*Dp).
    gate_perm = (0, 1, 3, 2)

    def pad_gate_cols(w):                      # (In, 4*D) -> (In, 4*Dp)
        out = jnp.zeros((w.shape[0], 4 * Dp), jnp.float32)
        for k in range(4):
            p = gate_perm[k]
            out = out.at[:, p * Dp:p * Dp + D].set(w[:, k * D:(k + 1) * D])
        return out

    lstm, lstm_ref = [], []
    for l in range(num_layers):
        layer_in = in0 if l == 0 else D
        layer_in_p = in0 if l == 0 else Dp
        w_ih = _xavier(next(keys), layer_in, 4 * D, (layer_in, 4 * D))
        w_hh = _xavier(next(keys), D, 4 * D, (D, 4 * D))
        wih_p = (jnp.zeros((layer_in_p, 4 * Dp), jnp.float32)
                 .at[:layer_in, :].set(pad_gate_cols(w_ih)).astype(jnp.bfloat16))
        whh_p = (jnp.zeros((Dp, 4 * Dp), jnp.float32)
                 .at[:D, :].set(pad_gate_cols(w_hh)).astype(jnp.bfloat16))
        b_p = jnp.zeros((1, 4 * Dp), jnp.float32)        # b_ih + b_hh == 0
        lstm.append((wih_p, whh_p, b_p))
        lstm_ref.append((w_ih.astype(jnp.bfloat16), w_hh.astype(jnp.bfloat16),
                         jnp.zeros((4 * D,), jnp.float32)))

    # seq MLP: Linear(D,D) -> ReLU -> Linear(D,D)   (weights stored (in,out))
    w1 = _xavier(next(keys), D, D, (D, D))
    w2 = _xavier(next(keys), D, D, (D, D))
    mlp = (jnp.zeros((Dp, Dp), jnp.float32).at[:D, :D].set(w1).astype(jnp.bfloat16),
           jnp.zeros((1, Dp), jnp.float32),
           jnp.zeros((Dp, Dp), jnp.float32).at[:D, :D].set(w2).astype(jnp.bfloat16),
           jnp.zeros((1, Dp), jnp.float32))
    mlp_ref = (w1.astype(jnp.bfloat16), jnp.zeros((D,), jnp.float32),
               w2.astype(jnp.bfloat16), jnp.zeros((D,), jnp.float32))

    # intent MLP: Linear(D,512)->LN->ReLU->Drop->Linear(512,256)->LN->ReLU
    #             ->Drop->Linear(256,intent_num)
    wi1 = _xavier(next(keys), D, 512, (D, 512))
    wi2 = _xavier(next(keys), 512, 256, (512, 256))
    wi3 = _xavier(next(keys), 256, intent_num, (256, intent_num))
    intent = (
        jnp.zeros((Dp, 512), jnp.float32).at[:D, :].set(wi1).astype(jnp.bfloat16),
        jnp.zeros((1, 512), jnp.float32),
        jnp.ones((1, 512), jnp.float32), jnp.zeros((1, 512), jnp.float32),
        wi2.astype(jnp.bfloat16),
        jnp.zeros((1, 256), jnp.float32),
        jnp.ones((1, 256), jnp.float32), jnp.zeros((1, 256), jnp.float32),
        jnp.zeros((256, Ip), jnp.float32).at[:, :intent_num].set(wi3)
        .astype(jnp.bfloat16),
        jnp.zeros((1, Ip), jnp.float32),
    )
    intent_ref = (
        wi1.astype(jnp.bfloat16), jnp.zeros((512,), jnp.float32),
        jnp.ones((512,), jnp.float32), jnp.zeros((512,), jnp.float32),
        wi2.astype(jnp.bfloat16), jnp.zeros((256,), jnp.float32),
        jnp.ones((256,), jnp.float32), jnp.zeros((256,), jnp.float32),
        wi3.astype(jnp.bfloat16), jnp.zeros((intent_num,), jnp.float32),
    )

    params = dict(embedding=emb, lstm=lstm, mlp=mlp, intent=intent)
    ref = dict(lstm=lstm_ref, mlp=mlp_ref, intent=intent_ref)
    return params, ref


# ----------------------------------------------------------------------------
# Full forward (mirrors SimplifiedLSTMRNN.forward, model_type='lstm').
# ----------------------------------------------------------------------------
@functools.partial(jax.jit,
                   static_argnames=("hidden_size", "seq_dim", "intent_num",
                                    "batch_tile", "time_chunk"))
def forward(x_idx, mask, params, *, hidden_size, seq_dim, intent_num,
            batch_tile=None, time_chunk=None):
    del mask  # the reference forward never uses it
    B, T, data_dim = x_idx.shape
    emb = jnp.take(params["embedding"], x_idx, axis=0)          # (B,T,dd,H)
    xin = emb.reshape(B, T, data_dim * hidden_size)
    # time-major + bf16: halves HBM->VMEM bytes of the biggest activation
    xin = jnp.transpose(xin, (1, 0, 2)).astype(jnp.bfloat16)    # (T,B,In0)

    Bp, Bt = _pick_batch_tiling(B, batch_tile)
    if Bp != B:
        xin = jnp.pad(xin, ((0, 0), (0, Bp - B), (0, 0)))
    Tc = _pick_chunk(T, 32 if time_chunk is None else time_chunk)

    x_seq_p, x_int_p = fused_forward(xin, params["lstm"], params["mlp"],
                                     params["intent"],
                                     batch_tile=Bt, time_chunk=Tc)
    return x_seq_p[:B, :seq_dim], x_int_p[:B, :intent_num]


# ----------------------------------------------------------------------------
# Pure-JAX reference (original PyTorch layout / gate order, unpadded weights),
# mirroring the kernel's bf16-operand matmuls for a tight numeric comparison.
# ----------------------------------------------------------------------------
def reference_forward(x_idx, embedding, ref, hidden_size):
    B, T, dd = x_idx.shape
    x = jnp.take(embedding, x_idx, axis=0).reshape(B, T, dd * hidden_size)
    D = ref["mlp"][0].shape[0]

    def bdot(a, w):
        return jnp.dot(a.astype(jnp.bfloat16), w,
                       preferred_element_type=jnp.float32)

    for (w_ih, w_hh, b) in ref["lstm"]:
        h = jnp.zeros((B, D), jnp.float32)
        c = jnp.zeros((B, D), jnp.float32)
        hs = []
        for t in range(T):
            z = bdot(x[:, t], w_ih) + bdot(h, w_hh) + b
            i = jax.nn.sigmoid(z[:, 0 * D:1 * D])
            f = jax.nn.sigmoid(z[:, 1 * D:2 * D])
            g = jnp.tanh(z[:, 2 * D:3 * D])
            o = jax.nn.sigmoid(z[:, 3 * D:4 * D])
            c = f * c + i * g
            h = o * jnp.tanh(c)
            hs.append(h)
        x = jnp.stack(hs, axis=1)
    m = jnp.mean(x, axis=1)

    w1, b1, w2, b2 = ref["mlp"]
    x_seq = jnp.maximum(bdot(jnp.maximum(bdot(m, w1) + b1, 0.0), w2) + b2, 0.0)

    def ln(y, g_, b_):
        mu = jnp.mean(y, axis=-1, keepdims=True)
        var = jnp.mean(jnp.square(y - mu), axis=-1, keepdims=True)
        return (y - mu) * lax.rsqrt(var + 1e-5) * g_ + b_

    wi1, bi1, g1, be1, wi2, bi2, g2, be2, wi3, bi3 = ref["intent"]
    a1 = jnp.maximum(ln(bdot(m, wi1) + bi1, g1, be1), 0.0)
    a2 = jnp.maximum(ln(bdot(a1, wi2) + bi2, g2, be2), 0.0)
    x_int = bdot(a2, wi3) + bi3
    return x_seq, x_int


if __name__ == "__main__":
    def run_case(batch, seq_len, num_layers, batch_tile, time_chunk):
        col_dim, reg_dim = 4, 4          # data_dim = 16
        hidden_size = 8                  # -> LSTM input_size = 16 * 8 = 128
        num_classes = 16
        intent_num = 5
        D = col_dim * reg_dim

        key = jax.random.PRNGKey(0)
        kp, kx = jax.random.split(key)
        params, ref = init_params(kp, num_classes, hidden_size, col_dim,
                                  reg_dim, num_layers, intent_num)
        x = jax.random.randint(kx, (batch, seq_len, D), 0, num_classes,
                               dtype=jnp.int32)
        mask = jnp.ones((batch, seq_len), jnp.float32)

        x_seq, x_int = forward(x, mask, params, hidden_size=hidden_size,
                               seq_dim=D, intent_num=intent_num,
                               batch_tile=batch_tile, time_chunk=time_chunk)
        jax.block_until_ready((x_seq, x_int))
        assert x_seq.shape == (batch, D) and x_int.shape == (batch, intent_num)

        r_seq, r_int = reference_forward(x, params["embedding"], ref,
                                         hidden_size)
        np.testing.assert_allclose(np.asarray(x_seq), np.asarray(r_seq),
                                   rtol=2e-2, atol=2e-2)
        np.testing.assert_allclose(np.asarray(x_int), np.asarray(r_int),
                                   rtol=2e-2, atol=2e-2)

    # 1 LSTM layer, one batch tile, two time chunks (exercises state carry).
    run_case(batch=2, seq_len=8, num_layers=1, batch_tile=None, time_chunk=4)
    # 2 LSTM layers, two batch tiles ('parallel' axis), two time chunks.
    run_case(batch=20, seq_len=8, num_layers=2, batch_tile=16, time_chunk=4)
    print("KERNEL_OK")
</pallas_src>

<mosaic_0001>
module attributes {stable_mosaic.version = 11 : i64} {
  func.func @fused_forward_kernel(%arg0: i32, %arg1: i32, %arg2: memref<4x16x128xbf16, #tpu.memory_space<vmem>>, %arg3: memref<128x512xbf16, #tpu.memory_space<vmem>>, %arg4: memref<128x512xbf16, #tpu.memory_space<vmem>>, %arg5: memref<1x512xf32, #tpu.memory_space<vmem>>, %arg6: memref<128x128xbf16, #tpu.memory_space<vmem>>, %arg7: memref<1x128xf32, #tpu.memory_space<vmem>>, %arg8: memref<128x128xbf16, #tpu.memory_space<vmem>>, %arg9: memref<1x128xf32, #tpu.memory_space<vmem>>, %arg10: memref<128x512xbf16, #tpu.memory_space<vmem>>, %arg11: memref<1x512xf32, #tpu.memory_space<vmem>>, %arg12: memref<1x512xf32, #tpu.memory_space<vmem>>, %arg13: memref<1x512xf32, #tpu.memory_space<vmem>>, %arg14: memref<512x256xbf16, #tpu.memory_space<vmem>>, %arg15: memref<1x256xf32, #tpu.memory_space<vmem>>, %arg16: memref<1x256xf32, #tpu.memory_space<vmem>>, %arg17: memref<1x256xf32, #tpu.memory_space<vmem>>, %arg18: memref<256x128xbf16, #tpu.memory_space<vmem>>, %arg19: memref<1x128xf32, #tpu.memory_space<vmem>>, %arg20: memref<16x128xf32, #tpu.memory_space<vmem>>, %arg21: memref<16x128xf32, #tpu.memory_space<vmem>>, %arg22: memref<64x512xf32, #tpu.memory_space<vmem>>, %arg23: memref<1x16x128xf32, #tpu.memory_space<vmem>>, %arg24: memref<1x16x128xf32, #tpu.memory_space<vmem>>, %arg25: memref<16x128xf32, #tpu.memory_space<vmem>>) attributes {dimension_semantics = [#tpu.dimension_semantics<parallel>, #tpu.dimension_semantics<arbitrary>], iteration_bounds = array<i64: 1, 2>, scalar_prefetch = 0 : i64, scratch_operands = 4 : i64, tpu.core_type = #tpu.core_type<tc>, window_params = [{transform_indices = @transform_0, window_bounds = array<i64: 4, 16, 128>}, {pipeline_mode = #tpu.pipeline_mode<synchronous>, transform_indices = @transform_1, window_bounds = array<i64: 128, 512>}, {pipeline_mode = #tpu.pipeline_mode<synchronous>, transform_indices = @transform_2, window_bounds = array<i64: 128, 512>}, {pipeline_mode = #tpu.pipeline_mode<synchronous>, transform_indices = @transform_3, window_bounds = array<i64: 1, 512>}, {pipeline_mode = #tpu.pipeline_mode<synchronous>, transform_indices = @transform_4, window_bounds = array<i64: 128, 128>}, {pipeline_mode = #tpu.pipeline_mode<synchronous>, transform_indices = @transform_5, window_bounds = array<i64: 1, 128>}, {pipeline_mode = #tpu.pipeline_mode<synchronous>, transform_indices = @transform_6, window_bounds = array<i64: 128, 128>}, {pipeline_mode = #tpu.pipeline_mode<synchronous>, transform_indices = @transform_7, window_bounds = array<i64: 1, 128>}, {pipeline_mode = #tpu.pipeline_mode<synchronous>, transform_indices = @transform_8, window_bounds = array<i64: 128, 512>}, {pipeline_mode = #tpu.pipeline_mode<synchronous>, transform_indices = @transform_9, window_bounds = array<i64: 1, 512>}, {pipeline_mode = #tpu.pipeline_mode<synchronous>, transform_indices = @transform_10, window_bounds = array<i64: 1, 512>}, {pipeline_mode = #tpu.pipeline_mode<synchronous>, transform_indices = @transform_11, window_bounds = array<i64: 1, 512>}, {pipeline_mode = #tpu.pipeline_mode<synchronous>, transform_indices = @transform_12, window_bounds = array<i64: 512, 256>}, {pipeline_mode = #tpu.pipeline_mode<synchronous>, transform_indices = @transform_13, window_bounds = array<i64: 1, 256>}, {pipeline_mode = #tpu.pipeline_mode<synchronous>, transform_indices = @transform_14, window_bounds = array<i64: 1, 256>}, {pipeline_mode = #tpu.pipeline_mode<synchronous>, transform_indices = @transform_15, window_bounds = array<i64: 1, 256>}, {pipeline_mode = #tpu.pipeline_mode<synchronous>, transform_indices = @transform_16, window_bounds = array<i64: 256, 128>}, {pipeline_mode = #tpu.pipeline_mode<synchronous>, transform_indices = @transform_17, window_bounds = array<i64: 1, 128>}, {transform_indices = @transform_18, window_bounds = array<i64: 16, 128>}, {transform_indices = @transform_19, window_bounds = array<i64: 16, 128>}]} {
    %c0_i32 = arith.constant 0 : i32
    %0 = arith.cmpi eq, %arg1, %c0_i32 : i32
    %1 = arith.extui %0 : i1 to i32
    %c0_i32_0 = arith.constant 0 : i32
    %2 = arith.cmpi ne, %1, %c0_i32_0 : i32
    scf.if %2 {
      %cst_45 = arith.constant 0.000000e+00 : f32
      %123 = vector.broadcast %cst_45 : f32 to vector<1x16x128xf32>
      %c0_46 = arith.constant 0 : index
      %c0_47 = arith.constant 0 : index
      %c0_48 = arith.constant 0 : index
      %124 = vector.load %arg23[%c0_46, %c0_47, %c0_48] : memref<1x16x128xf32, #tpu.memory_space<vmem>>, vector<1x16x128xf32>
      tpu.vector_store %arg23[%c0_46, %c0_47, %c0_48], %123 {strides = array<i32>} : memref<1x16x128xf32, #tpu.memory_space<vmem>>, vector<1x16x128xf32>,
      %cst_49 = arith.constant 0.000000e+00 : f32
      %125 = vector.broadcast %cst_49 : f32 to vector<1x16x128xf32>
      %c0_50 = arith.constant 0 : index
      %c0_51 = arith.constant 0 : index
      %c0_52 = arith.constant 0 : index
      %126 = vector.load %arg24[%c0_50, %c0_51, %c0_52] : memref<1x16x128xf32, #tpu.memory_space<vmem>>, vector<1x16x128xf32>
      tpu.vector_store %arg24[%c0_50, %c0_51, %c0_52], %125 {strides = array<i32>} : memref<1x16x128xf32, #tpu.memory_space<vmem>>, vector<1x16x128xf32>,
      %cst_53 = arith.constant 0.000000e+00 : f32
      %127 = vector.broadcast %cst_53 : f32 to vector<16x128xf32>
      %c0_54 = arith.constant 0 : index
      %c0_55 = arith.constant 0 : index
      %128 = vector.load %arg25[%c0_54, %c0_55] : memref<16x128xf32, #tpu.memory_space<vmem>>, vector<16x128xf32>
      tpu.vector_store %arg25[%c0_54, %c0_55], %127 {strides = array<i32>} : memref<16x128xf32, #tpu.memory_space<vmem>>, vector<16x128xf32>,
    } else {
    }
    %c0 = arith.constant 0 : index
    %c0_1 = arith.constant 0 : index
    %c0_2 = arith.constant 0 : index
    %3 = vector.load %arg2[%c0, %c0_1, %c0_2] : memref<4x16x128xbf16, #tpu.memory_space<vmem>>, vector<4x16x128xbf16>
    %4 = vector.shape_cast %3 : vector<4x16x128xbf16> to vector<64x128xbf16>
    %c0_3 = arith.constant 0 : index
    %c0_4 = arith.constant 0 : index
    %5 = vector.load %arg3[%c0_3, %c0_4] : memref<128x512xbf16, #tpu.memory_space<vmem>>, vector<128x512xbf16>
    %cst = arith.constant dense<0.000000e+00> : vector<64x512xf32>
    %6 = tpu.matmul %4, %5, %cst {dimension_numbers = #tpu.dot_dimension_numbers<[1], [0], [0], [1], [0, 0, 1, 1], [], []>} : vector<64x128xbf16>, vector<128x512xbf16>, vector<64x512xf32> -> vector<64x512xf32>
    %c0_5 = arith.constant 0 : index
    %c0_6 = arith.constant 0 : index
    %7 = vector.load %arg5[%c0_5, %c0_6] : memref<1x512xf32, #tpu.memory_space<vmem>>, vector<1x512xf32>
    %8 = vector.broadcast %7 : vector<1x512xf32> to vector<64x512xf32>
    %9 = arith.addf %6, %8 : vector<64x512xf32>
    %c0_7 = arith.constant 0 : index
    %c0_8 = arith.constant 0 : index
    %10 = vector.load %arg22[%c0_7, %c0_8] : memref<64x512xf32, #tpu.memory_space<vmem>>, vector<64x512xf32>
    tpu.vector_store %arg22[%c0_7, %c0_8], %9 {strides = array<i32>} : memref<64x512xf32, #tpu.memory_space<vmem>>, vector<64x512xf32>,
    %c0_9 = arith.constant 0 : index
    %c0_10 = arith.constant 0 : index
    %11 = vector.load %arg4[%c0_9, %c0_10] : memref<128x512xbf16, #tpu.memory_space<vmem>>, vector<128x512xbf16>
    %c0_11 = arith.constant 0 : index
    %c0_12 = arith.constant 0 : index
    %c0_13 = arith.constant 0 : index
    %12 = vector.load %arg23[%c0_11, %c0_12, %c0_13] : memref<1x16x128xf32, #tpu.memory_space<vmem>>, vector<1x16x128xf32>
    %13 = vector.shape_cast %12 : vector<1x16x128xf32> to vector<16x128xf32>
    %c0_14 = arith.constant 0 : index
    %c0_15 = arith.constant 0 : index
    %c0_16 = arith.constant 0 : index
    %14 = vector.load %arg24[%c0_14, %c0_15, %c0_16] : memref<1x16x128xf32, #tpu.memory_space<vmem>>, vector<1x16x128xf32>
    %15 = vector.shape_cast %14 : vector<1x16x128xf32> to vector<16x128xf32>
    %c0_17 = arith.constant 0 : index
    %c0_18 = arith.constant 0 : index
    %16 = vector.load %arg25[%c0_17, %c0_18] : memref<16x128xf32, #tpu.memory_space<vmem>>, vector<16x128xf32>
    %c0_i32_19 = arith.constant 0 : i32
    %c16_i32 = arith.constant 16 : i32
    %17 = arith.muli %c0_i32_19, %c16_i32 : i32
    %18 = tpu.assume_multiple %17, 8 : i32
    %19 = arith.index_cast %18 : i32 to index
    %c0_20 = arith.constant 0 : index
    %20 = vector.load %arg22[%19, %c0_20] : memref<64x512xf32, #tpu.memory_space<vmem>>, vector<16x512xf32>
    %21 = arith.truncf %13 : vector<16x128xf32> to vector<16x128xbf16>
    %cst_21 = arith.constant dense<0.000000e+00> : vector<16x512xf32>
    %22 = tpu.matmul %21, %11, %cst_21 {dimension_numbers = #tpu.dot_dimension_numbers<[1], [0], [0], [1], [0, 0, 1, 1], [], []>} : vector<16x128xbf16>, vector<128x512xbf16>, vector<16x512xf32> -> vector<16x512xf32>
    %23 = arith.addf %20, %22 : vector<16x512xf32>
    %24 = vector.extract_strided_slice %23 {offsets = [0, 0], sizes = [16, 384], strides = [1, 1]} : vector<16x512xf32> to vector<16x384xf32>
    %25 = arith.negf %24 : vector<16x384xf32>
    %26 = math.exp %25 : vector<16x384xf32>
    %cst_22 = arith.constant 1.000000e+00 : f32
    %27 = vector.broadcast %cst_22 : f32 to vector<16x384xf32>
    %28 = arith.addf %27, %26 : vector<16x384xf32>
    %29 = arith.divf %27, %28 : vector<16x384xf32>
    %30 = vector.extract_strided_slice %29 {offsets = [0, 0], sizes = [16, 128], strides = [1, 1]} : vector<16x384xf32> to vector<16x128xf32>
    %31 = vector.extract_strided_slice %29 {offsets = [0, 128], sizes = [16, 128], strides = [1, 1]} : vector<16x384xf32> to vector<16x128xf32>
    %32 = vector.extract_strided_slice %29 {offsets = [0, 256], sizes = [16, 128], strides = [1, 1]} : vector<16x384xf32> to vector<16x128xf32>
    %33 = vector.extract_strided_slice %23 {offsets = [0, 384], sizes = [16, 128], strides = [1, 1]} : vector<16x512xf32> to vector<16x128xf32>
    %34 = math.tanh %33 : vector<16x128xf32>
    %35 = arith.mulf %31, %15 : vector<16x128xf32>
    %36 = arith.mulf %30, %34 : vector<16x128xf32>
    %37 = arith.addf %35, %36 : vector<16x128xf32>
    %38 = math.tanh %37 : vector<16x128xf32>
    %39 = arith.mulf %32, %38 : vector<16x128xf32>
    %40 = arith.addf %16, %39 : vector<16x128xf32>
    %c1_i32 = arith.constant 1 : i32
    %c16_i32_23 = arith.constant 16 : i32
    %41 = arith.muli %c1_i32, %c16_i32_23 : i32
    %42 = tpu.assume_multiple %41, 8 : i32
    %43 = arith.index_cast %42 : i32 to index
    %c0_24 = arith.constant 0 : index
    %44 = vector.load %arg22[%43, %c0_24] : memref<64x512xf32, #tpu.memory_space<vmem>>, vector<16x512xf32>
    %45 = arith.truncf %39 : vector<16x128xf32> to vector<16x128xbf16>
    %cst_25 = arith.constant dense<0.000000e+00> : vector<16x512xf32>
    %46 = tpu.matmul %45, %11, %cst_25 {dimension_numbers = #tpu.dot_dimension_numbers<[1], [0], [0], [1], [0, 0, 1, 1], [], []>} : vector<16x128xbf16>, vector<128x512xbf16>, vector<16x512xf32> -> vector<16x512xf32>
    %47 = arith.addf %44, %46 : vector<16x512xf32>
    %48 = vector.extract_strided_slice %47 {offsets = [0, 0], sizes = [16, 384], strides = [1, 1]} : vector<16x512xf32> to vector<16x384xf32>
    %49 = arith.negf %48 : vector<16x384xf32>
    %50 = math.exp %49 : vector<16x384xf32>
    %cst_26 = arith.constant 1.000000e+00 : f32
    %51 = vector.broadcast %cst_26 : f32 to vector<16x384xf32>
    %52 = arith.addf %51, %50 : vector<16x384xf32>
    %53 = arith.divf %51, %52 : vector<16x384xf32>
    %54 = vector.extract_strided_slice %53 {offsets = [0, 0], sizes = [16, 128], strides = [1, 1]} : vector<16x384xf32> to vector<16x128xf32>
    %55 = vector.extract_strided_slice %53 {offsets = [0, 128], sizes = [16, 128], strides = [1, 1]} : vector<16x384xf32> to vector<16x128xf32>
    %56 = vector.extract_strided_slice %53 {offsets = [0, 256], sizes = [16, 128], strides = [1, 1]} : vector<16x384xf32> to vector<16x128xf32>
    %57 = vector.extract_strided_slice %47 {offsets = [0, 384], sizes = [16, 128], strides = [1, 1]} : vector<16x512xf32> to vector<16x128xf32>
    %58 = math.tanh %57 : vector<16x128xf32>
    %59 = arith.mulf %55, %37 : vector<16x128xf32>
    %60 = arith.mulf %54, %58 : vector<16x128xf32>
    %61 = arith.addf %59, %60 : vector<16x128xf32>
    %62 = math.tanh %61 : vector<16x128xf32>
    %63 = arith.mulf %56, %62 : vector<16x128xf32>
    %64 = arith.addf %40, %63 : vector<16x128xf32>
    %c2_i32 = arith.constant 2 : i32
    %c16_i32_27 = arith.constant 16 : i32
    %65 = arith.muli %c2_i32, %c16_i32_27 : i32
    %66 = tpu.assume_multiple %65, 8 : i32
    %67 = arith.index_cast %66 : i32 to index
    %c0_28 = arith.constant 0 : index
    %68 = vector.load %arg22[%67, %c0_28] : memref<64x512xf32, #tpu.memory_space<vmem>>, vector<16x512xf32>
    %69 = arith.truncf %63 : vector<16x128xf32> to vector<16x128xbf16>
    %cst_29 = arith.constant dense<0.000000e+00> : vector<16x512xf32>
    %70 = tpu.matmul %69, %11, %cst_29 {dimension_numbers = #tpu.dot_dimension_numbers<[1], [0], [0], [1], [0, 0, 1, 1], [], []>} : vector<16x128xbf16>, vector<128x512xbf16>, vector<16x512xf32> -> vector<16x512xf32>
    %71 = arith.addf %68, %70 : vector<16x512xf32>
    %72 = vector.extract_strided_slice %71 {offsets = [0, 0], sizes = [16, 384], strides = [1, 1]} : vector<16x512xf32> to vector<16x384xf32>
    %73 = arith.negf %72 : vector<16x384xf32>
    %74 = math.exp %73 : vector<16x384xf32>
    %cst_30 = arith.constant 1.000000e+00 : f32
    %75 = vector.broadcast %cst_30 : f32 to vector<16x384xf32>
    %76 = arith.addf %75, %74 : vector<16x384xf32>
    %77 = arith.divf %75, %76 : vector<16x384xf32>
    %78 = vector.extract_strided_slice %77 {offsets = [0, 0], sizes = [16, 128], strides = [1, 1]} : vector<16x384xf32> to vector<16x128xf32>
    %79 = vector.extract_strided_slice %77 {offsets = [0, 128], sizes = [16, 128], strides = [1, 1]} : vector<16x384xf32> to vector<16x128xf32>
    %80 = vector.extract_strided_slice %77 {offsets = [0, 256], sizes = [16, 128], strides = [1, 1]} : vector<16x384xf32> to vector<16x128xf32>
    %81 = vector.extract_strided_slice %71 {offsets = [0, 384], sizes = [16, 128], strides = [1, 1]} : vector<16x512xf32> to vector<16x128xf32>
    %82 = math.tanh %81 : vector<16x128xf32>
    %83 = arith.mulf %79, %61 : vector<16x128xf32>
    %84 = arith.mulf %78, %82 : vector<16x128xf32>
    %85 = arith.addf %83, %84 : vector<16x128xf32>
    %86 = math.tanh %85 : vector<16x128xf32>
    %87 = arith.mulf %80, %86 : vector<16x128xf32>
    %88 = arith.addf %64, %87 : vector<16x128xf32>
    %c3_i32 = arith.constant 3 : i32
    %c16_i32_31 = arith.constant 16 : i32
    %89 = arith.muli %c3_i32, %c16_i32_31 : i32
    %90 = tpu.assume_multiple %89, 8 : i32
    %91 = arith.index_cast %90 : i32 to index
    %c0_32 = arith.constant 0 : index
    %92 = vector.load %arg22[%91, %c0_32] : memref<64x512xf32, #tpu.memory_space<vmem>>, vector<16x512xf32>
    %93 = arith.truncf %87 : vector<16x128xf32> to vector<16x128xbf16>
    %cst_33 = arith.constant dense<0.000000e+00> : vector<16x512xf32>
    %94 = tpu.matmul %93, %11, %cst_33 {dimension_numbers = #tpu.dot_dimension_numbers<[1], [0], [0], [1], [0, 0, 1, 1], [], []>} : vector<16x128xbf16>, vector<128x512xbf16>, vector<16x512xf32> -> vector<16x512xf32>
    %95 = arith.addf %92, %94 : vector<16x512xf32>
    %96 = vector.extract_strided_slice %95 {offsets = [0, 0], sizes = [16, 384], strides = [1, 1]} : vector<16x512xf32> to vector<16x384xf32>
    %97 = arith.negf %96 : vector<16x384xf32>
    %98 = math.exp %97 : vector<16x384xf32>
    %cst_34 = arith.constant 1.000000e+00 : f32
    %99 = vector.broadcast %cst_34 : f32 to vector<16x384xf32>
    %100 = arith.addf %99, %98 : vector<16x384xf32>
    %101 = arith.divf %99, %100 : vector<16x384xf32>
    %102 = vector.extract_strided_slice %101 {offsets = [0, 0], sizes = [16, 128], strides = [1, 1]} : vector<16x384xf32> to vector<16x128xf32>
    %103 = vector.extract_strided_slice %101 {offsets = [0, 128], sizes = [16, 128], strides = [1, 1]} : vector<16x384xf32> to vector<16x128xf32>
    %104 = vector.extract_strided_slice %101 {offsets = [0, 256], sizes = [16, 128], strides = [1, 1]} : vector<16x384xf32> to vector<16x128xf32>
    %105 = vector.extract_strided_slice %95 {offsets = [0, 384], sizes = [16, 128], strides = [1, 1]} : vector<16x512xf32> to vector<16x128xf32>
    %106 = math.tanh %105 : vector<16x128xf32>
    %107 = arith.mulf %103, %85 : vector<16x128xf32>
    %108 = arith.mulf %102, %106 : vector<16x128xf32>
    %109 = arith.addf %107, %108 : vector<16x128xf32>
    %110 = math.tanh %109 : vector<16x128xf32>
    %111 = arith.mulf %104, %110 : vector<16x128xf32>
    %112 = arith.addf %88, %111 : vector<16x128xf32>
    %c4_i32 = arith.constant 4 : i32
    %c0_35 = arith.constant 0 : index
    %c0_36 = arith.constant 0 : index
    %c0_37 = arith.constant 0 : index
    %113 = vector.load %arg23[%c0_35, %c0_36, %c0_37] : memref<1x16x128xf32, #tpu.memory_space<vmem>>, vector<1x16x128xf32>
    %114 = vector.shape_cast %113 : vector<1x16x128xf32> to vector<16x128xf32>
    %115 = vector.shape_cast %111 : vector<16x128xf32> to vector<1x16x128xf32>
    tpu.vector_store %arg23[%c0_35, %c0_36, %c0_37], %115 {strides = array<i32>} : memref<1x16x128xf32, #tpu.memory_space<vmem>>, vector<1x16x128xf32>,
    %c0_38 = arith.constant 0 : index
    %c0_39 = arith.constant 0 : index
    %c0_40 = arith.constant 0 : index
    %116 = vector.load %arg24[%c0_38, %c0_39, %c0_40] : memref<1x16x128xf32, #tpu.memory_space<vmem>>, vector<1x16x128xf32>
    %117 = vector.shape_cast %116 : vector<1x16x128xf32> to vector<16x128xf32>
    %118 = vector.shape_cast %109 : vector<16x128xf32> to vector<1x16x128xf32>
    tpu.vector_store %arg24[%c0_38, %c0_39, %c0_40], %118 {strides = array<i32>} : memref<1x16x128xf32, #tpu.memory_space<vmem>>, vector<1x16x128xf32>,
    %c0_41 = arith.constant 0 : index
    %c0_42 = arith.constant 0 : index
    %119 = vector.load %arg25[%c0_41, %c0_42] : memref<16x128xf32, #tpu.memory_space<vmem>>, vector<16x128xf32>
    tpu.vector_store %arg25[%c0_41, %c0_42], %112 {strides = array<i32>} : memref<16x128xf32, #tpu.memory_space<vmem>>, vector<16x128xf32>,
    %c1_i32_43 = arith.constant 1 : i32
    %120 = arith.cmpi eq, %arg1, %c1_i32_43 : i32
    %121 = arith.extui %120 : i1 to i32
    %c0_i32_44 = arith.constant 0 : i32
    %122 = arith.cmpi ne, %121, %c0_i32_44 : i32
    scf.if %122 {
      %c0_45 = arith.constant 0 : index
      %c0_46 = arith.constant 0 : index
      %123 = vector.load %arg25[%c0_45, %c0_46] : memref<16x128xf32, #tpu.memory_space<vmem>>, vector<16x128xf32>
      %cst_47 = arith.constant 1.250000e-01 : f32
      %124 = vector.broadcast %cst_47 : f32 to vector<16x128xf32>
      %125 = arith.mulf %123, %124 : vector<16x128xf32>
      %126 = arith.truncf %125 : vector<16x128xf32> to vector<16x128xbf16>
      %c0_48 = arith.constant 0 : index
      %c0_49 = arith.constant 0 : index
      %127 = vector.load %arg6[%c0_48, %c0_49] : memref<128x128xbf16, #tpu.memory_space<vmem>>, vector<128x128xbf16>
      %cst_50 = arith.constant dense<0.000000e+00> : vector<16x128xf32>
      %128 = tpu.matmul %126, %127, %cst_50 {dimension_numbers = #tpu.dot_dimension_numbers<[1], [0], [0], [1], [0, 0, 1, 1], [], []>} : vector<16x128xbf16>, vector<128x128xbf16>, vector<16x128xf32> -> vector<16x128xf32>
      %c0_51 = arith.constant 0 : index
      %c0_52 = arith.constant 0 : index
      %129 = vector.load %arg7[%c0_51, %c0_52] : memref<1x128xf32, #tpu.memory_space<vmem>>, vector<1x128xf32>
      %130 = vector.broadcast %129 : vector<1x128xf32> to vector<16x128xf32>
      %131 = arith.addf %128, %130 : vector<16x128xf32>
      %cst_53 = arith.constant 0.000000e+00 : f32
      %132 = vector.broadcast %cst_53 : f32 to vector<16x128xf32>
      %133 = arith.maximumf %131, %132 : vector<16x128xf32>
      %134 = arith.truncf %133 : vector<16x128xf32> to vector<16x128xbf16>
      %c0_54 = arith.constant 0 : index
      %c0_55 = arith.constant 0 : index
      %135 = vector.load %arg8[%c0_54, %c0_55] : memref<128x128xbf16, #tpu.memory_space<vmem>>, vector<128x128xbf16>
      %cst_56 = arith.constant dense<0.000000e+00> : vector<16x128xf32>
      %136 = tpu.matmul %134, %135, %cst_56 {dimension_numbers = #tpu.dot_dimension_numbers<[1], [0], [0], [1], [0, 0, 1, 1], [], []>} : vector<16x128xbf16>, vector<128x128xbf16>, vector<16x128xf32> -> vector<16x128xf32>
      %c0_57 = arith.constant 0 : index
      %c0_58 = arith.constant 0 : index
      %137 = vector.load %arg9[%c0_57, %c0_58] : memref<1x128xf32, #tpu.memory_space<vmem>>, vector<1x128xf32>
      %138 = vector.broadcast %137 : vector<1x128xf32> to vector<16x128xf32>
      %139 = arith.addf %136, %138 : vector<16x128xf32>
      %cst_59 = arith.constant 0.000000e+00 : f32
      %140 = vector.broadcast %cst_59 : f32 to vector<16x128xf32>
      %141 = arith.maximumf %139, %140 : vector<16x128xf32>
      %c0_60 = arith.constant 0 : index
      %c0_61 = arith.constant 0 : index
      %142 = vector.load %arg20[%c0_60, %c0_61] : memref<16x128xf32, #tpu.memory_space<vmem>>, vector<16x128xf32>
      tpu.vector_store %arg20[%c0_60, %c0_61], %141 {strides = array<i32>} : memref<16x128xf32, #tpu.memory_space<vmem>>, vector<16x128xf32>,
      %c0_62 = arith.constant 0 : index
      %c0_63 = arith.constant 0 : index
      %143 = vector.load %arg10[%c0_62, %c0_63] : memref<128x512xbf16, #tpu.memory_space<vmem>>, vector<128x512xbf16>
      %cst_64 = arith.constant dense<0.000000e+00> : vector<16x512xf32>
      %144 = tpu.matmul %126, %143, %cst_64 {dimension_numbers = #tpu.dot_dimension_numbers<[1], [0], [0], [1], [0, 0, 1, 1], [], []>} : vector<16x128xbf16>, vector<128x512xbf16>, vector<16x512xf32> -> vector<16x512xf32>
      %c0_65 = arith.constant 0 : index
      %c0_66 = arith.constant 0 : index
      %145 = vector.load %arg11[%c0_65, %c0_66] : memref<1x512xf32, #tpu.memory_space<vmem>>, vector<1x512xf32>
      %146 = vector.broadcast %145 : vector<1x512xf32> to vector<16x512xf32>
      %147 = arith.addf %144, %146 : vector<16x512xf32>
      %c0_67 = arith.constant 0 : index
      %c0_68 = arith.constant 0 : index
      %148 = vector.load %arg12[%c0_67, %c0_68] : memref<1x512xf32, #tpu.memory_space<vmem>>, vector<1x512xf32>
      %c0_69 = arith.constant 0 : index
      %c0_70 = arith.constant 0 : index
      %149 = vector.load %arg13[%c0_69, %c0_70] : memref<1x512xf32, #tpu.memory_space<vmem>>, vector<1x512xf32>
      %cst_71 = arith.constant dense<0.000000e+00> : vector<16xf32>
      %150 = vector.multi_reduction <add>, %147, %cst_71 [1] : vector<16x512xf32> to vector<16xf32>
      %151 = vector.shape_cast %150 : vector<16xf32> to vector<16x1xf32>
      %cst_72 = arith.constant 5.120000e+02 : f32
      %152 = vector.broadcast %cst_72 : f32 to vector<16x1xf32>
      %153 = arith.divf %151, %152 : vector<16x1xf32>
      %154 = vector.broadcast %153 : vector<16x1xf32> to vector<16x512xf32>
      %155 = arith.subf %147, %154 : vector<16x512xf32>
      %156 = arith.mulf %155, %155 : vector<16x512xf32>
      %cst_73 = arith.constant dense<0.000000e+00> : vector<16xf32>
      %157 = vector.multi_reduction <add>, %156, %cst_73 [1] : vector<16x512xf32> to vector<16xf32>
      %158 = vector.shape_cast %157 : vector<16xf32> to vector<16x1xf32>
      %cst_74 = arith.constant 5.120000e+02 : f32
      %159 = vector.broadcast %cst_74 : f32 to vector<16x1xf32>
      %160 = arith.divf %158, %159 : vector<16x1xf32>
      %161 = vector.broadcast %153 : vector<16x1xf32> to vector<16x512xf32>
      %162 = arith.subf %147, %161 : vector<16x512xf32>
      %cst_75 = arith.constant 9.99999974E-6 : f32
      %163 = vector.broadcast %cst_75 : f32 to vector<16x1xf32>
      %164 = arith.addf %160, %163 : vector<16x1xf32>
      %165 = math.rsqrt %164 : vector<16x1xf32>
      %166 = vector.broadcast %165 : vector<16x1xf32> to vector<16x512xf32>
      %167 = arith.mulf %162, %166 : vector<16x512xf32>
      %168 = vector.broadcast %148 : vector<1x512xf32> to vector<16x512xf32>
      %169 = arith.mulf %167, %168 : vector<16x512xf32>
      %170 = vector.broadcast %149 : vector<1x512xf32> to vector<16x512xf32>
      %171 = arith.addf %169, %170 : vector<16x512xf32>
      %cst_76 = arith.constant 0.000000e+00 : f32
      %172 = vector.broadcast %cst_76 : f32 to vector<16x512xf32>
      %173 = arith.maximumf %171, %172 : vector<16x512xf32>
      %174 = arith.truncf %173 : vector<16x512xf32> to vector<16x512xbf16>
      %c0_77 = arith.constant 0 : index
      %c0_78 = arith.constant 0 : index
      %175 = vector.load %arg14[%c0_77, %c0_78] : memref<512x256xbf16, #tpu.memory_space<vmem>>, vector<512x256xbf16>
      %cst_79 = arith.constant dense<0.000000e+00> : vector<16x256xf32>
      %176 = tpu.matmul %174, %175, %cst_79 {dimension_numbers = #tpu.dot_dimension_numbers<[1], [0], [0], [1], [0, 0, 1, 1], [], []>} : vector<16x512xbf16>, vector<512x256xbf16>, vector<16x256xf32> -> vector<16x256xf32>
      %c0_80 = arith.constant 0 : index
      %c0_81 = arith.constant 0 : index
      %177 = vector.load %arg15[%c0_80, %c0_81] : memref<1x256xf32, #tpu.memory_space<vmem>>, vector<1x256xf32>
      %178 = vector.broadcast %177 : vector<1x256xf32> to vector<16x256xf32>
      %179 = arith.addf %176, %178 : vector<16x256xf32>
      %c0_82 = arith.constant 0 : index
      %c0_83 = arith.constant 0 : index
      %180 = vector.load %arg16[%c0_82, %c0_83] : memref<1x256xf32, #tpu.memory_space<vmem>>, vector<1x256xf32>
      %c0_84 = arith.constant 0 : index
      %c0_85 = arith.constant 0 : index
      %181 = vector.load %arg17[%c0_84, %c0_85] : memref<1x256xf32, #tpu.memory_space<vmem>>, vector<1x256xf32>
      %cst_86 = arith.constant dense<0.000000e+00> : vector<16xf32>
      %182 = vector.multi_reduction <add>, %179, %cst_86 [1] : vector<16x256xf32> to vector<16xf32>
      %183 = vector.shape_cast %182 : vector<16xf32> to vector<16x1xf32>
      %cst_87 = arith.constant 2.560000e+02 : f32
      %184 = vector.broadcast %cst_87 : f32 to vector<16x1xf32>
      %185 = arith.divf %183, %184 : vector<16x1xf32>
      %186 = vector.broadcast %185 : vector<16x1xf32> to vector<16x256xf32>
      %187 = arith.subf %179, %186 : vector<16x256xf32>
      %188 = arith.mulf %187, %187 : vector<16x256xf32>
      %cst_88 = arith.constant dense<0.000000e+00> : vector<16xf32>
      %189 = vector.multi_reduction <add>, %188, %cst_88 [1] : vector<16x256xf32> to vector<16xf32>
      %190 = vector.shape_cast %189 : vector<16xf32> to vector<16x1xf32>
      %cst_89 = arith.constant 2.560000e+02 : f32
      %191 = vector.broadcast %cst_89 : f32 to vector<16x1xf32>
      %192 = arith.divf %190, %191 : vector<16x1xf32>
      %193 = vector.broadcast %185 : vector<16x1xf32> to vector<16x256xf32>
      %194 = arith.subf %179, %193 : vector<16x256xf32>
      %cst_90 = arith.constant 9.99999974E-6 : f32
      %195 = vector.broadcast %cst_90 : f32 to vector<16x1xf32>
      %196 = arith.addf %192, %195 : vector<16x1xf32>
      %197 = math.rsqrt %196 : vector<16x1xf32>
      %198 = vector.broadcast %197 : vector<16x1xf32> to vector<16x256xf32>
      %199 = arith.mulf %194, %198 : vector<16x256xf32>
      %200 = vector.broadcast %180 : vector<1x256xf32> to vector<16x256xf32>
      %201 = arith.mulf %199, %200 : vector<16x256xf32>
      %202 = vector.broadcast %181 : vector<1x256xf32> to vector<16x256xf32>
      %203 = arith.addf %201, %202 : vector<16x256xf32>
      %cst_91 = arith.constant 0.000000e+00 : f32
      %204 = vector.broadcast %cst_91 : f32 to vector<16x256xf32>
      %205 = arith.maximumf %203, %204 : vector<16x256xf32>
      %206 = arith.truncf %205 : vector<16x256xf32> to vector<16x256xbf16>
      %c0_92 = arith.constant 0 : index
      %c0_93 = arith.constant 0 : index
      %207 = vector.load %arg18[%c0_92, %c0_93] : memref<256x128xbf16, #tpu.memory_space<vmem>>, vector<256x128xbf16>
      %cst_94 = arith.constant dense<0.000000e+00> : vector<16x128xf32>
      %208 = tpu.matmul %206, %207, %cst_94 {dimension_numbers = #tpu.dot_dimension_numbers<[1], [0], [0], [1], [0, 0, 1, 1], [], []>} : vector<16x256xbf16>, vector<256x128xbf16>, vector<16x128xf32> -> vector<16x128xf32>
      %c0_95 = arith.constant 0 : index
      %c0_96 = arith.constant 0 : index
      %209 = vector.load %arg19[%c0_95, %c0_96] : memref<1x128xf32, #tpu.memory_space<vmem>>, vector<1x128xf32>
      %210 = vector.broadcast %209 : vector<1x128xf32> to vector<16x128xf32>
      %211 = arith.addf %208, %210 : vector<16x128xf32>
      %c0_97 = arith.constant 0 : index
      %c0_98 = arith.constant 0 : index
      %212 = vector.load %arg21[%c0_97, %c0_98] : memref<16x128xf32, #tpu.memory_space<vmem>>, vector<16x128xf32>
      tpu.vector_store %arg21[%c0_97, %c0_98], %211 {strides = array<i32>} : memref<16x128xf32, #tpu.memory_space<vmem>>, vector<16x128xf32>,
    } else {
    }
    return
  }
  func.func @transform_0(%arg0: i32, %arg1: i32) -> (i32, i32, i32) {
    %c0_i32 = arith.constant 0 : i32
    %c0_i32_0 = arith.constant 0 : i32
    return %arg1, %arg0, %c0_i32 : i32, i32, i32
  }
  func.func @transform_1(%arg0: i32, %arg1: i32) -> (i32, i32) {
    %c0_i32 = arith.constant 0 : i32
    %c0_i32_0 = arith.constant 0 : i32
    %c0_i32_1 = arith.constant 0 : i32
    return %c0_i32, %c0_i32_0 : i32, i32
  }
  func.func @transform_2(%arg0: i32, %arg1: i32) -> (i32, i32) {
    %c0_i32 = arith.constant 0 : i32
    %c0_i32_0 = arith.constant 0 : i32
    %c0_i32_1 = arith.constant 0 : i32
    return %c0_i32, %c0_i32_0 : i32, i32
  }
  func.func @transform_3(%arg0: i32, %arg1: i32) -> (i32, i32) {
    %c0_i32 = arith.constant 0 : i32
    %c0_i32_0 = arith.constant 0 : i32
    %c0_i32_1 = arith.constant 0 : i32
    return %c0_i32, %c0_i32_0 : i32, i32
  }
  func.func @transform_4(%arg0: i32, %arg1: i32) -> (i32, i32) {
    %c0_i32 = arith.constant 0 : i32
    %c0_i32_0 = arith.constant 0 : i32
    %c0_i32_1 = arith.constant 0 : i32
    return %c0_i32, %c0_i32_0 : i32, i32
  }
  func.func @transform_5(%arg0: i32, %arg1: i32) -> (i32, i32) {
    %c0_i32 = arith.constant 0 : i32
    %c0_i32_0 = arith.constant 0 : i32
    %c0_i32_1 = arith.constant 0 : i32
    return %c0_i32, %c0_i32_0 : i32, i32
  }
  func.func @transform_6(%arg0: i32, %arg1: i32) -> (i32, i32) {
    %c0_i32 = arith.constant 0 : i32
    %c0_i32_0 = arith.constant 0 : i32
    %c0_i32_1 = arith.constant 0 : i32
    return %c0_i32, %c0_i32_0 : i32, i32
  }
  func.func @transform_7(%arg0: i32, %arg1: i32) -> (i32, i32) {
    %c0_i32 = arith.constant 0 : i32
    %c0_i32_0 = arith.constant 0 : i32
    %c0_i32_1 = arith.constant 0 : i32
    return %c0_i32, %c0_i32_0 : i32, i32
  }
  func.func @transform_8(%arg0: i32, %arg1: i32) -> (i32, i32) {
    %c0_i32 = arith.constant 0 : i32
    %c0_i32_0 = arith.constant 0 : i32
    %c0_i32_1 = arith.constant 0 : i32
    return %c0_i32, %c0_i32_0 : i32, i32
  }
  func.func @transform_9(%arg0: i32, %arg1: i32) -> (i32, i32) {
    %c0_i32 = arith.constant 0 : i32
    %c0_i32_0 = arith.constant 0 : i32
    %c0_i32_1 = arith.constant 0 : i32
    return %c0_i32, %c0_i32_0 : i32, i32
  }
  func.func @transform_10(%arg0: i32, %arg1: i32) -> (i32, i32) {
    %c0_i32 = arith.constant 0 : i32
    %c0_i32_0 = arith.constant 0 : i32
    %c0_i32_1 = arith.constant 0 : i32
    return %c0_i32, %c0_i32_0 : i32, i32
  }
  func.func @transform_11(%arg0: i32, %arg1: i32) -> (i32, i32) {
    %c0_i32 = arith.constant 0 : i32
    %c0_i32_0 = arith.constant 0 : i32
    %c0_i32_1 = arith.constant 0 : i32
    return %c0_i32, %c0_i32_0 : i32, i32
  }
  func.func @transform_12(%arg0: i32, %arg1: i32) -> (i32, i32) {
    %c0_i32 = arith.constant 0 : i32
    %c0_i32_0 = arith.constant 0 : i32
    %c0_i32_1 = arith.constant 0 : i32
    return %c0_i32, %c0_i32_0 : i32, i32
  }
  func.func @transform_13(%arg0: i32, %arg1: i32) -> (i32, i32) {
    %c0_i32 = arith.constant 0 : i32
    %c0_i32_0 = arith.constant 0 : i32
    %c0_i32_1 = arith.constant 0 : i32
    return %c0_i32, %c0_i32_0 : i32, i32
  }
  func.func @transform_14(%arg0: i32, %arg1: i32) -> (i32, i32) {
    %c0_i32 = arith.constant 0 : i32
    %c0_i32_0 = arith.constant 0 : i32
    %c0_i32_1 = arith.constant 0 : i32
    return %c0_i32, %c0_i32_0 : i32, i32
  }
  func.func @transform_15(%arg0: i32, %arg1: i32) -> (i32, i32) {
    %c0_i32 = arith.constant 0 : i32
    %c0_i32_0 = arith.constant 0 : i32
    %c0_i32_1 = arith.constant 0 : i32
    return %c0_i32, %c0_i32_0 : i32, i32
  }
  func.func @transform_16(%arg0: i32, %arg1: i32) -> (i32, i32) {
    %c0_i32 = arith.constant 0 : i32
    %c0_i32_0 = arith.constant 0 : i32
    %c0_i32_1 = arith.constant 0 : i32
    return %c0_i32, %c0_i32_0 : i32, i32
  }
  func.func @transform_17(%arg0: i32, %arg1: i32) -> (i32, i32) {
    %c0_i32 = arith.constant 0 : i32
    %c0_i32_0 = arith.constant 0 : i32
    %c0_i32_1 = arith.constant 0 : i32
    return %c0_i32, %c0_i32_0 : i32, i32
  }
  func.func @transform_18(%arg0: i32, %arg1: i32) -> (i32, i32) {
    %c0_i32 = arith.constant 0 : i32
    %c0_i32_0 = arith.constant 0 : i32
    return %arg0, %c0_i32 : i32, i32
  }
  func.func @transform_19(%arg0: i32, %arg1: i32) -> (i32, i32) {
    %c0_i32 = arith.constant 0 : i32
    %c0_i32_0 = arith.constant 0 : i32
    return %arg0, %c0_i32 : i32, i32
  }
}

</mosaic_0001>

<llo_original>
// kernel: forward.1
$region0: #{forward.1}
  #allocation0 [shape = 'u32[]', space=smem, size = 0x4, offset = 0x4, fixed_abs, tag = 'smem constant byte address 0x4 - core index']
  #allocation1 [shape = 'u32[144,128]{1,0:T(1,128)}', space=vmem, size = 0x12000, scoped, tag = 'internal scratch']
  #allocation2 [shape = 'f32[64,512]{1,0:T(8,128)}', space=vmem, size = 0x20000, scoped, tag = 'scratch operand']
  #allocation3 [shape = 'f32[1,16,128]{2,1,0:T(8,128)}', space=vmem, size = 0x2000, scoped, tag = 'scratch operand']
  #allocation4 [shape = 'f32[1,16,128]{2,1,0:T(8,128)}', space=vmem, size = 0x2000, scoped, tag = 'scratch operand']
  #allocation5 [shape = 'f32[16,128]{1,0:T(8,128)}', space=vmem, size = 0x2000, scoped, tag = 'scratch operand']
  %s0 = inlined_call_operand.vmem [shape: bf16[8,16,128], index: 0, kind: input, shape index: {}]
  %s1 = inlined_call_operand.vmem [shape: bf16[128,512], index: 1, kind: input, shape index: {}]
  %s2 = inlined_call_operand.vmem [shape: bf16[128,512], index: 2, kind: input, shape index: {}]
  %s3 = inlined_call_operand.vmem [shape: f32[1,512], index: 3, kind: input, shape index: {}]
  %s4 = inlined_call_operand.vmem [shape: bf16[128,128], index: 4, kind: input, shape index: {}]
  %s5 = inlined_call_operand.vmem [shape: f32[1,128], index: 5, kind: input, shape index: {}]
  %s6 = inlined_call_operand.vmem [shape: bf16[128,128], index: 6, kind: input, shape index: {}]
  %s7 = inlined_call_operand.vmem [shape: f32[1,128], index: 7, kind: input, shape index: {}]
  %s8 = inlined_call_operand.vmem [shape: bf16[128,512], index: 8, kind: input, shape index: {}]
  %s9 = inlined_call_operand.vmem [shape: f32[1,512], index: 9, kind: input, shape index: {}]
  %s10 = inlined_call_operand.vmem [shape: f32[1,512], index: 10, kind: input, shape index: {}]
  %s11 = inlined_call_operand.vmem [shape: f32[1,512], index: 11, kind: input, shape index: {}]
  %s12 = inlined_call_operand.vmem [shape: bf16[512,256], index: 12, kind: input, shape index: {}]
  %s13 = inlined_call_operand.vmem [shape: f32[1,256], index: 13, kind: input, shape index: {}]
  %s14 = inlined_call_operand.vmem [shape: f32[1,256], index: 14, kind: input, shape index: {}]
  %s15 = inlined_call_operand.vmem [shape: f32[1,256], index: 15, kind: input, shape index: {}]
  %s16 = inlined_call_operand.vmem [shape: bf16[256,128], index: 16, kind: input, shape index: {}]
  %s17 = inlined_call_operand.vmem [shape: f32[1,128], index: 17, kind: input, shape index: {}]
  %s18 = inlined_call_operand.vmem [shape: f32[16,128], index: 18, kind: output, shape index: {0}]
  %s19 = inlined_call_operand.vmem [shape: f32[16,128], index: 19, kind: output, shape index: {1}]
  %20 = xla_tuple %s18, %s19
  %s21 = sld [smem:[#allocation0]]
  $region121: #{forward.1} parent=0
    _
  %s23 = ssub.s32 1, %s21
  %s24 = scalar_select 0, %s23, %s21
  loop: start=0, step=1, limit=4
  $region2: #{forward.1} parent=0 // loop_pre_header
    _
  $region3: #{forward.1} parent=0 // loop_header
    %s26 = sphi 0, %s30
    %p27 = scmp.ge.s32.totalorder %s26, 4
    %s33 = sphi 0, %s45
    %s34 = sphi 0, %s41
    %s35 = sphi 0, %s33
    %s36 = sphi 0, %s34
    %s37 = sphi 0, %s35
    %s38 = sphi 0, %s36
    %s50 = sphi 0, %s52
    %s53 = sphi 0, %s50
    %s54 = sphi 0, %s53
    %s70 = sphi 0, %s54
    %s74 = sphi 0, %s74
    %s76 = sphi 0, %s74
    %s77 = sphi 0, %s76
    %s91 = sphi 0, %s77
    %s95 = sphi 0, %s95
    %s97 = sphi 0, %s95
    %s98 = sphi 0, %s97
    %s112 = sphi 0, %s98
    %s116 = sphi 0, %s116
    %s118 = sphi 0, %s116
    %s119 = sphi 0, %s118
    %s133 = sphi 0, %s119
    %s137 = sphi 0, %s137
    %s139 = sphi 0, %s137
    %s140 = sphi 0, %s139
    %s154 = sphi 0, %s140
    %s158 = sphi 0, %s158
    %s160 = sphi 0, %s158
    %s161 = sphi 0, %s160
    %s175 = sphi 0, %s161
    %s179 = sphi 0, %s179
    %s181 = sphi 0, %s179
    %s182 = sphi 0, %s181
    %s196 = sphi 0, %s182
    %s200 = sphi 0, %s200
    %s202 = sphi 0, %s200
    %s203 = sphi 0, %s202
    %s217 = sphi 0, %s203
    %s221 = sphi 0, %s221
    %s223 = sphi 0, %s221
    %s224 = sphi 0, %s223
    %s238 = sphi 0, %s224
    %s242 = sphi 0, %s242
    %s244 = sphi 0, %s242
    %s245 = sphi 0, %s244
    %s259 = sphi 0, %s245
    %s263 = sphi 0, %s263
    %s265 = sphi 0, %s263
    %s266 = sphi 0, %s265
    %s280 = sphi 0, %s266
    %s284 = sphi 0, %s284
    %s286 = sphi 0, %s284
    %s287 = sphi 0, %s286
    %s301 = sphi 0, %s287
    %s305 = sphi 0, %s305
    %s307 = sphi 0, %s305
    %s308 = sphi 0, %s307
    %s322 = sphi 0, %s308
    %s326 = sphi 0, %s326
    %s328 = sphi 0, %s326
    %s329 = sphi 0, %s328
    %s343 = sphi 0, %s329
    %s347 = sphi 0, %s347
    %s349 = sphi 0, %s347
    %s350 = sphi 0, %s349
    %s364 = sphi 0, %s350
    %s368 = sphi 0, %s368
    %s370 = sphi 0, %s368
    %s371 = sphi 0, %s370
    %s385 = sphi 0, %s371
    %s389 = sphi 0, %s389
    %s391 = sphi 0, %s389
    %s392 = sphi 0, %s391
    %s406 = sphi 0, %s392
    %s410 = sphi 0, %s410
    %s412 = sphi 0, %s410
    %s413 = sphi 0, %s412
    %s427 = sphi 0, %s413
    %s433 = sphi 0, %s435
    %s436 = sphi 0, %s433
    %s437 = sphi 0, %s436
    %s453 = sphi 0, %s437
    %s459 = sphi 0, %s461
    %s462 = sphi 0, %s459
    %s463 = sphi 0, %s462
    %s479 = sphi 0, %s463
  $region4: #{forward.1} parent=0 // loop_header_branch
    %29 = sbr.rel (%p27) target = $region8
  $region5: #{forward.1} parent=0 // loop_body
    %s31 = ssub.s32 %s26, 1
    %s32 = ssub.s32 %s26, 2
    %s39 = sadd.s32 1, %s34
    %p40 = scmp.ge.s32.totalorder %s39, 2
    %s41 = scalar_select %p40, 0, %s39
    %s42 = sadd.s32 1, %s33
    %s43 = scalar_select %p40, %s42, %s33
    %p44 = scmp.ge.s32.totalorder %s43, 1
    %s45 = scalar_select %p44, 0, %s43
    %s46 = ssub.s32 %s34, %s41
    %s47 = ssub.s32 %s33, %s45
    %s48 = sor.u32 %s46, %s47
    %p49 = scmp.eq.s32.totalorder %s48, 0
    %s51 = sadd.s32 %s50, 1
    %s52 = scalar_select %p49, %s50, %s51
    %p55 = pneg %p49
    %p56 = scmp.eq.s32.totalorder %s26, 1
    %p57 = por %p55, %p56
    %p58 = scmp.ne.s32.totalorder %s50, %s53
    %p59 = scmp.eq.s32.totalorder %s26, 0
    %p60 = por %p58, %p59
    %p61 = scmp.ne.s32.totalorder %s50, %s53
    %p62 = scmp.eq.s32.totalorder %s31, 1
    %p63 = por %p61, %p62
    %p64 = scmp.ne.s32.totalorder %s53, %s54
    %p65 = scmp.eq.s32.totalorder %s31, 0
    %p66 = por %p64, %p65
    %p67 = scmp.ne.s32.totalorder %s53, %s54
    %p68 = scmp.eq.s32.totalorder %s32, 1
    %p69 = por %p67, %p68
    %p71 = scmp.ne.s32.totalorder %s54, %s70
    %p72 = scmp.eq.s32.totalorder %s32, 0
    %p73 = por %p71, %p72
    %s75 = sadd.s32 %s74, 1
    %p78 = scmp.eq.s32.totalorder %s26, 1
    %p79 = scmp.ne.s32.totalorder %s74, %s76
    %p80 = scmp.eq.s32.totalorder %s26, 0
    %p81 = por %p79, %p80
    %p82 = scmp.ne.s32.totalorder %s74, %s76
    %p83 = scmp.eq.s32.totalorder %s31, 1
    %p84 = por %p82, %p83
    %p85 = scmp.ne.s32.totalorder %s76, %s77
    %p86 = scmp.eq.s32.totalorder %s31, 0
    %p87 = por %p85, %p86
    %p88 = scmp.ne.s32.totalorder %s76, %s77
    %p89 = scmp.eq.s32.totalorder %s32, 1
    %p90 = por %p88, %p89
    %p92 = scmp.ne.s32.totalorder %s77, %s91
    %p93 = scmp.eq.s32.totalorder %s32, 0
    %p94 = por %p92, %p93
    %s96 = sadd.s32 %s95, 1
    %p99 = scmp.eq.s32.totalorder %s26, 1
    %p100 = scmp.ne.s32.totalorder %s95, %s97
    %p101 = scmp.eq.s32.totalorder %s26, 0
    %p102 = por %p100, %p101
    %p103 = scmp.ne.s32.totalorder %s95, %s97
    %p104 = scmp.eq.s32.totalorder %s31, 1
    %p105 = por %p103, %p104
    %p106 = scmp.ne.s32.totalorder %s97, %s98
    %p107 = scmp.eq.s32.totalorder %s31, 0
    %p108 = por %p106, %p107
    %p109 = scmp.ne.s32.totalorder %s97, %s98
    %p110 = scmp.eq.s32.totalorder %s32, 1
    %p111 = por %p109, %p110
    %p113 = scmp.ne.s32.totalorder %s98, %s112
    %p114 = scmp.eq.s32.totalorder %s32, 0
    %p115 = por %p113, %p114
    %s117 = sadd.s32 %s116, 1
    %p120 = scmp.eq.s32.totalorder %s26, 1
    %p121 = scmp.ne.s32.totalorder %s116, %s118
    %p122 = scmp.eq.s32.totalorder %s26, 0
    %p123 = por %p121, %p122
    %p124 = scmp.ne.s32.totalorder %s116, %s118
    %p125 = scmp.eq.s32.totalorder %s31, 1
    %p126 = por %p124, %p125
    %p127 = scmp.ne.s32.totalorder %s118, %s119
    %p128 = scmp.eq.s32.totalorder %s31, 0
    %p129 = por %p127, %p128
    %p130 = scmp.ne.s32.totalorder %s118, %s119
    %p131 = scmp.eq.s32.totalorder %s32, 1
    %p132 = por %p130, %p131
    %p134 = scmp.ne.s32.totalorder %s119, %s133
    %p135 = scmp.eq.s32.totalorder %s32, 0
    %p136 = por %p134, %p135
    %s138 = sadd.s32 %s137, 1
    %p141 = scmp.eq.s32.totalorder %s26, 1
    %p142 = scmp.ne.s32.totalorder %s137, %s139
    %p143 = scmp.eq.s32.totalorder %s26, 0
    %p144 = por %p142, %p143
    %p145 = scmp.ne.s32.totalorder %s137, %s139
    %p146 = scmp.eq.s32.totalorder %s31, 1
    %p147 = por %p145, %p146
    %p148 = scmp.ne.s32.totalorder %s139, %s140
    %p149 = scmp.eq.s32.totalorder %s31, 0
    %p150 = por %p148, %p149
    %p151 = scmp.ne.s32.totalorder %s139, %s140
    %p152 = scmp.eq.s32.totalorder %s32, 1
    %p153 = por %p151, %p152
    %p155 = scmp.ne.s32.totalorder %s140, %s154
    %p156 = scmp.eq.s32.totalorder %s32, 0
    %p157 = por %p155, %p156
    %s159 = sadd.s32 %s158, 1
    %p162 = scmp.eq.s32.totalorder %s26, 1
    %p163 = scmp.ne.s32.totalorder %s158, %s160
    %p164 = scmp.eq.s32.totalorder %s26, 0
    %p165 = por %p163, %p164
    %p166 = scmp.ne.s32.totalorder %s158, %s160
    %p167 = scmp.eq.s32.totalorder %s31, 1
    %p168 = por %p166, %p167
    %p169 = scmp.ne.s32.totalorder %s160, %s161
    %p170 = scmp.eq.s32.totalorder %s31, 0
    %p171 = por %p169, %p170
    %p172 = scmp.ne.s32.totalorder %s160, %s161
    %p173 = scmp.eq.s32.totalorder %s32, 1
    %p174 = por %p172, %p173
    %p176 = scmp.ne.s32.totalorder %s161, %s175
    %p177 = scmp.eq.s32.totalorder %s32, 0
    %p178 = por %p176, %p177
    %s180 = sadd.s32 %s179, 1
    %p183 = scmp.eq.s32.totalorder %s26, 1
    %p184 = scmp.ne.s32.totalorder %s179, %s181
    %p185 = scmp.eq.s32.totalorder %s26, 0
    %p186 = por %p184, %p185
    %p187 = scmp.ne.s32.totalorder %s179, %s181
    %p188 = scmp.eq.s32.totalorder %s31, 1
    %p189 = por %p187, %p188
    %p190 = scmp.ne.s32.totalorder %s181, %s182
    %p191 = scmp.eq.s32.totalorder %s31, 0
    %p192 = por %p190, %p191
    %p193 = scmp.ne.s32.totalorder %s181, %s182
    %p194 = scmp.eq.s32.totalorder %s32, 1
    %p195 = por %p193, %p194
    %p197 = scmp.ne.s32.totalorder %s182, %s196
    %p198 = scmp.eq.s32.totalorder %s32, 0
    %p199 = por %p197, %p198
    %s201 = sadd.s32 %s200, 1
    %p204 = scmp.eq.s32.totalorder %s26, 1
    %p205 = scmp.ne.s32.totalorder %s200, %s202
    %p206 = scmp.eq.s32.totalorder %s26, 0
    %p207 = por %p205, %p206
    %p208 = scmp.ne.s32.totalorder %s200, %s202
    %p209 = scmp.eq.s32.totalorder %s31, 1
    %p210 = por %p208, %p209
    %p211 = scmp.ne.s32.totalorder %s202, %s203
    %p212 = scmp.eq.s32.totalorder %s31, 0
    %p213 = por %p211, %p212
    %p214 = scmp.ne.s32.totalorder %s202, %s203
    %p215 = scmp.eq.s32.totalorder %s32, 1
    %p216 = por %p214, %p215
    %p218 = scmp.ne.s32.totalorder %s203, %s217
    %p219 = scmp.eq.s32.totalorder %s32, 0
    %p220 = por %p218, %p219
    %s222 = sadd.s32 %s221, 1
    %p225 = scmp.eq.s32.totalorder %s26, 1
    %p226 = scmp.ne.s32.totalorder %s221, %s223
    %p227 = scmp.eq.s32.totalorder %s26, 0
    %p228 = por %p226, %p227
    %p229 = scmp.ne.s32.totalorder %s221, %s223
    %p230 = scmp.eq.s32.totalorder %s31, 1
    %p231 = por %p229, %p230
    %p232 = scmp.ne.s32.totalorder %s223, %s224
    %p233 = scmp.eq.s32.totalorder %s31, 0
    %p234 = por %p232, %p233
    %p235 = scmp.ne.s32.totalorder %s223, %s224
    %p236 = scmp.eq.s32.totalorder %s32, 1
    %p237 = por %p235, %p236
    %p239 = scmp.ne.s32.totalorder %s224, %s238
    %p240 = scmp.eq.s32.totalorder %s32, 0
    %p241 = por %p239, %p240
    %s243 = sadd.s32 %s242, 1
    %p246 = scmp.eq.s32.totalorder %s26, 1
    %p247 = scmp.ne.s32.totalorder %s242, %s244
    %p248 = scmp.eq.s32.totalorder %s26, 0
    %p249 = por %p247, %p248
    %p250 = scmp.ne.s32.totalorder %s242, %s244
    %p251 = scmp.eq.s32.totalorder %s31, 1
    %p252 = por %p250, %p251
    %p253 = scmp.ne.s32.totalorder %s244, %s245
    %p254 = scmp.eq.s32.totalorder %s31, 0
    %p255 = por %p253, %p254
    %p256 = scmp.ne.s32.totalorder %s244, %s245
    %p257 = scmp.eq.s32.totalorder %s32, 1
    %p258 = por %p256, %p257
    %p260 = scmp.ne.s32.totalorder %s245, %s259
    %p261 = scmp.eq.s32.totalorder %s32, 0
    %p262 = por %p260, %p261
    %s264 = sadd.s32 %s263, 1
    %p267 = scmp.eq.s32.totalorder %s26, 1
    %p268 = scmp.ne.s32.totalorder %s263, %s265
    %p269 = scmp.eq.s32.totalorder %s26, 0
    %p270 = por %p268, %p269
    %p271 = scmp.ne.s32.totalorder %s263, %s265
    %p272 = scmp.eq.s32.totalorder %s31, 1
    %p273 = por %p271, %p272
    %p274 = scmp.ne.s32.totalorder %s265, %s266
    %p275 = scmp.eq.s32.totalorder %s31, 0
    %p276 = por %p274, %p275
    %p277 = scmp.ne.s32.totalorder %s265, %s266
    %p278 = scmp.eq.s32.totalorder %s32, 1
    %p279 = por %p277, %p278
    %p281 = scmp.ne.s32.totalorder %s266, %s280
    %p282 = scmp.eq.s32.totalorder %s32, 0
    %p283 = por %p281, %p282
    %s285 = sadd.s32 %s284, 1
    %p288 = scmp.eq.s32.totalorder %s26, 1
    %p289 = scmp.ne.s32.totalorder %s284, %s286
    %p290 = scmp.eq.s32.totalorder %s26, 0
    %p291 = por %p289, %p290
    %p292 = scmp.ne.s32.totalorder %s284, %s286
    %p293 = scmp.eq.s32.totalorder %s31, 1
    %p294 = por %p292, %p293
    %p295 = scmp.ne.s32.totalorder %s286, %s287
    %p296 = scmp.eq.s32.totalorder %s31, 0
    %p297 = por %p295, %p296
    %p298 = scmp.ne.s32.totalorder %s286, %s287
    %p299 = scmp.eq.s32.totalorder %s32, 1
    %p300 = por %p298, %p299
    %p302 = scmp.ne.s32.totalorder %s287, %s301
    %p303 = scmp.eq.s32.totalorder %s32, 0
    %p304 = por %p302, %p303
    %s306 = sadd.s32 %s305, 1
    %p309 = scmp.eq.s32.totalorder %s26, 1
    %p310 = scmp.ne.s32.totalorder %s305, %s307
    %p311 = scmp.eq.s32.totalorder %s26, 0
    %p312 = por %p310, %p311
    %p313 = scmp.ne.s32.totalorder %s305, %s307
    %p314 = scmp.eq.s32.totalorder %s31, 1
    %p315 = por %p313, %p314
    %p316 = scmp.ne.s32.totalorder %s307, %s308
    %p317 = scmp.eq.s32.totalorder %s31, 0
    %p318 = por %p316, %p317
    %p319 = scmp.ne.s32.totalorder %s307, %s308
    %p320 = scmp.eq.s32.totalorder %s32, 1
    %p321 = por %p319, %p320
    %p323 = scmp.ne.s32.totalorder %s308, %s322
    %p324 = scmp.eq.s32.totalorder %s32, 0
    %p325 = por %p323, %p324
    %s327 = sadd.s32 %s326, 1
    %p330 = scmp.eq.s32.totalorder %s26, 1
    %p331 = scmp.ne.s32.totalorder %s326, %s328
    %p332 = scmp.eq.s32.totalorder %s26, 0
    %p333 = por %p331, %p332
    %p334 = scmp.ne.s32.totalorder %s326, %s328
    %p335 = scmp.eq.s32.totalorder %s31, 1
    %p336 = por %p334, %p335
    %p337 = scmp.ne.s32.totalorder %s328, %s329
    %p338 = scmp.eq.s32.totalorder %s31, 0
    %p339 = por %p337, %p338
    %p340 = scmp.ne.s32.totalorder %s328, %s329
    %p341 = scmp.eq.s32.totalorder %s32, 1
    %p342 = por %p340, %p341
    %p344 = scmp.ne.s32.totalorder %s329, %s343
    %p345 = scmp.eq.s32.totalorder %s32, 0
    %p346 = por %p344, %p345
    %s348 = sadd.s32 %s347, 1
    %p351 = scmp.eq.s32.totalorder %s26, 1
    %p352 = scmp.ne.s32.totalorder %s347, %s349
    %p353 = scmp.eq.s32.totalorder %s26, 0
    %p354 = por %p352, %p353
    %p355 = scmp.ne.s32.totalorder %s347, %s349
    %p356 = scmp.eq.s32.totalorder %s31, 1
    %p357 = por %p355, %p356
    %p358 = scmp.ne.s32.totalorder %s349, %s350
    %p359 = scmp.eq.s32.totalorder %s31, 0
    %p360 = por %p358, %p359
    %p361 = scmp.ne.s32.totalorder %s349, %s350
    %p362 = scmp.eq.s32.totalorder %s32, 1
    %p363 = por %p361, %p362
    %p365 = scmp.ne.s32.totalorder %s350, %s364
    %p366 = scmp.eq.s32.totalorder %s32, 0
    %p367 = por %p365, %p366
    %s369 = sadd.s32 %s368, 1
    %p372 = scmp.eq.s32.totalorder %s26, 1
    %p373 = scmp.ne.s32.totalorder %s368, %s370
    %p374 = scmp.eq.s32.totalorder %s26, 0
    %p375 = por %p373, %p374
    %p376 = scmp.ne.s32.totalorder %s368, %s370
    %p377 = scmp.eq.s32.totalorder %s31, 1
    %p378 = por %p376, %p377
    %p379 = scmp.ne.s32.totalorder %s370, %s371
    %p380 = scmp.eq.s32.totalorder %s31, 0
    %p381 = por %p379, %p380
    %p382 = scmp.ne.s32.totalorder %s370, %s371
    %p383 = scmp.eq.s32.totalorder %s32, 1
    %p384 = por %p382, %p383
    %p386 = scmp.ne.s32.totalorder %s371, %s385
    %p387 = scmp.eq.s32.totalorder %s32, 0
    %p388 = por %p386, %p387
    %s390 = sadd.s32 %s389, 1
    %p393 = scmp.eq.s32.totalorder %s26, 1
    %p394 = scmp.ne.s32.totalorder %s389, %s391
    %p395 = scmp.eq.s32.totalorder %s26, 0
    %p396 = por %p394, %p395
    %p397 = scmp.ne.s32.totalorder %s389, %s391
    %p398 = scmp.eq.s32.totalorder %s31, 1
    %p399 = por %p397, %p398
    %p400 = scmp.ne.s32.totalorder %s391, %s392
    %p401 = scmp.eq.s32.totalorder %s31, 0
    %p402 = por %p400, %p401
    %p403 = scmp.ne.s32.totalorder %s391, %s392
    %p404 = scmp.eq.s32.totalorder %s32, 1
    %p405 = por %p403, %p404
    %p407 = scmp.ne.s32.totalorder %s392, %s406
    %p408 = scmp.eq.s32.totalorder %s32, 0
    %p409 = por %p407, %p408
    %s411 = sadd.s32 %s410, 1
    %p414 = scmp.eq.s32.totalorder %s26, 1
    %p415 = scmp.ne.s32.totalorder %s410, %s412
    %p416 = scmp.eq.s32.totalorder %s26, 0
    %p417 = por %p415, %p416
    %p418 = scmp.ne.s32.totalorder %s410, %s412
    %p419 = scmp.eq.s32.totalorder %s31, 1
    %p420 = por %p418, %p419
    %p421 = scmp.ne.s32.totalorder %s412, %s413
    %p422 = scmp.eq.s32.totalorder %s31, 0
    %p423 = por %p421, %p422
    %p424 = scmp.ne.s32.totalorder %s412, %s413
    %p425 = scmp.eq.s32.totalorder %s32, 1
    %p426 = por %p424, %p425
    %p428 = scmp.ne.s32.totalorder %s413, %s427
    %p429 = scmp.eq.s32.totalorder %s32, 0
    %p430 = por %p428, %p429
    %s431 = ssub.s32 %s33, %s45
    %p432 = scmp.eq.s32.totalorder %s431, 0
    %s434 = sadd.s32 %s433, 1
    %s435 = scalar_select %p432, %s433, %s434
    %p438 = pneg %p432
    %p439 = scmp.eq.s32.totalorder %s26, 1
    %p440 = por %p438, %p439
    %p441 = scmp.ne.s32.totalorder %s433, %s436
    %p442 = scmp.eq.s32.totalorder %s26, 0
    %p443 = por %p441, %p442
    %p444 = scmp.ne.s32.totalorder %s433, %s436
    %p445 = scmp.eq.s32.totalorder %s31, 1
    %p446 = por %p444, %p445
    %p447 = scmp.ne.s32.totalorder %s436, %s437
    %p448 = scmp.eq.s32.totalorder %s31, 0
    %p449 = por %p447, %p448
    %p450 = scmp.ne.s32.totalorder %s436, %s437
    %p451 = scmp.eq.s32.totalorder %s32, 1
    %p452 = por %p450, %p451
    %p454 = scmp.ne.s32.totalorder %s437, %s453
    %p455 = scmp.eq.s32.totalorder %s32, 0
    %p456 = por %p454, %p455
    %s457 = ssub.s32 %s33, %s45
    %p458 = scmp.eq.s32.totalorder %s457, 0
    %s460 = sadd.s32 %s459, 1
    %s461 = scalar_select %p458, %s459, %s460
    %p464 = pneg %p458
    %p465 = scmp.eq.s32.totalorder %s26, 1
    %p466 = por %p464, %p465
    %p467 = scmp.ne.s32.totalorder %s459, %s462
    %p468 = scmp.eq.s32.totalorder %s26, 0
    %p469 = por %p467, %p468
    %p470 = scmp.ne.s32.totalorder %s459, %s462
    %p471 = scmp.eq.s32.totalorder %s31, 1
    %p472 = por %p470, %p471
    %p473 = scmp.ne.s32.totalorder %s462, %s463
    %p474 = scmp.eq.s32.totalorder %s31, 0
    %p475 = por %p473, %p474
    %p476 = scmp.ne.s32.totalorder %s462, %s463
    %p477 = scmp.eq.s32.totalorder %s32, 1
    %p478 = por %p476, %p477
    %p480 = scmp.ne.s32.totalorder %s463, %s479
    %p481 = scmp.eq.s32.totalorder %s32, 0
    %p482 = por %p480, %p481
    %p483 = scmp.le.s32.totalorder 1, %s26
    %p484 = scmp.lt.s32.totalorder %s26, 3
    %p485 = pnand %p483, %p484
    %p486 = pneg %p485
    // Predicated region
    $region9: #{forward.1} parent=5 // pred_check
      _
    $region10: #{forward.1} parent=5 // pred_check_branch
      %488 = sbr.rel (%p485) target = $region12
    $region11: #{forward.1} parent=5 // pred_region
      %s489 = ssub.s32 %s26, 1
      // Predicated region
      $region13: #{forward.1} parent=11 // pred_check
        %p490 = pneg %p87
      $region14: #{forward.1} parent=11 // pred_check_branch
        %492 = sbr.rel (%p490) target = $region16
      $region15: #{forward.1} parent=11 // pred_region
        _
      $region16: #{forward.1} parent=11 // pred_fallthru
        _
      // Predicated region
      $region17: #{forward.1} parent=11 // pred_check
        %p493 = pneg %p108
      $region18: #{forward.1} parent=11 // pred_check_branch
        %495 = sbr.rel (%p493) target = $region20
      $region19: #{forward.1} parent=11 // pred_region
        _
      $region20: #{forward.1} parent=11 // pred_fallthru
        _
      // Predicated region
      $region21: #{forward.1} parent=11 // pred_check
        %p496 = pneg %p129
      $region22: #{forward.1} parent=11 // pred_check_branch
        %498 = sbr.rel (%p496) target = $region24
      $region23: #{forward.1} parent=11 // pred_region
        _
      $region24: #{forward.1} parent=11 // pred_fallthru
        _
      // Predicated region
      $region25: #{forward.1} parent=11 // pred_check
        %p499 = pneg %p150
      $region26: #{forward.1} parent=11 // pred_check_branch
        %501 = sbr.rel (%p499) target = $region28
      $region27: #{forward.1} parent=11 // pred_region
        _
      $region28: #{forward.1} parent=11 // pred_fallthru
        _
      // Predicated region
      $region29: #{forward.1} parent=11 // pred_check
        %p502 = pneg %p171
      $region30: #{forward.1} parent=11 // pred_check_branch
        %504 = sbr.rel (%p502) target = $region32
      $region31: #{forward.1} parent=11 // pred_region
        _
      $region32: #{forward.1} parent=11 // pred_fallthru
        _
      // Predicated region
      $region33: #{forward.1} parent=11 // pred_check
        %p505 = pneg %p192
      $region34: #{forward.1} parent=11 // pred_check_branch
        %507 = sbr.rel (%p505) target = $region36
      $region35: #{forward.1} parent=11 // pred_region
        _
      $region36: #{forward.1} parent=11 // pred_fallthru
        _
      // Predicated region
      $region37: #{forward.1} parent=11 // pred_check
        %p508 = pneg %p213
      $region38: #{forward.1} parent=11 // pred_check_branch
        %510 = sbr.rel (%p508) target = $region40
      $region39: #{forward.1} parent=11 // pred_region
        _
      $region40: #{forward.1} parent=11 // pred_fallthru
        _
      // Predicated region
      $region41: #{forward.1} parent=11 // pred_check
        %p511 = pneg %p234
      $region42: #{forward.1} parent=11 // pred_check_branch
        %513 = sbr.rel (%p511) target = $region44
      $region43: #{forward.1} parent=11 // pred_region
        _
      $region44: #{forward.1} parent=11 // pred_fallthru
        _
      // Predicated region
      $region45: #{forward.1} parent=11 // pred_check
        %p514 = pneg %p255
      $region46: #{forward.1} parent=11 // pred_check_branch
        %516 = sbr.rel (%p514) target = $region48
      $region47: #{forward.1} parent=11 // pred_region
        _
      $region48: #{forward.1} parent=11 // pred_fallthru
        _
      // Predicated region
      $region49: #{forward.1} parent=11 // pred_check
        %p517 = pneg %p276
      $region50: #{forward.1} parent=11 // pred_check_branch
        %519 = sbr.rel (%p517) target = $region52
      $region51: #{forward.1} parent=11 // pred_region
        _
      $region52: #{forward.1} parent=11 // pred_fallthru
        _
      // Predicated region
      $region53: #{forward.1} parent=11 // pred_check
        %p520 = pneg %p297
      $region54: #{forward.1} parent=11 // pred_check_branch
        %522 = sbr.rel (%p520) target = $region56
      $region55: #{forward.1} parent=11 // pred_region
        _
      $region56: #{forward.1} parent=11 // pred_fallthru
        _
      // Predicated region
      $region57: #{forward.1} parent=11 // pred_check
        %p523 = pneg %p318
      $region58: #{forward.1} parent=11 // pred_check_branch
        %525 = sbr.rel (%p523) target = $region60
      $region59: #{forward.1} parent=11 // pred_region
        _
      $region60: #{forward.1} parent=11 // pred_fallthru
        _
      // Predicated region
      $region61: #{forward.1} parent=11 // pred_check
        %p526 = pneg %p339
      $region62: #{forward.1} parent=11 // pred_check_branch
        %528 = sbr.rel (%p526) target = $region64
      $region63: #{forward.1} parent=11 // pred_region
        _
      $region64: #{forward.1} parent=11 // pred_fallthru
        _
      // Predicated region
      $region65: #{forward.1} parent=11 // pred_check
        %p529 = pneg %p360
      $region66: #{forward.1} parent=11 // pred_check_branch
        %531 = sbr.rel (%p529) target = $region68
      $region67: #{forward.1} parent=11 // pred_region
        _
      $region68: #{forward.1} parent=11 // pred_fallthru
        _
      // Predicated region
      $region69: #{forward.1} parent=11 // pred_check
        %p532 = pneg %p381
      $region70: #{forward.1} parent=11 // pred_check_branch
        %534 = sbr.rel (%p532) target = $region72
      $region71: #{forward.1} parent=11 // pred_region
        _
      $region72: #{forward.1} parent=11 // pred_fallthru
        _
      // Predicated region
      $region73: #{forward.1} parent=11 // pred_check
        %p535 = pneg %p402
      $region74: #{forward.1} parent=11 // pred_check_branch
        %537 = sbr.rel (%p535) target = $region76
      $region75: #{forward.1} parent=11 // pred_region
        _
      $region76: #{forward.1} parent=11 // pred_fallthru
        _
      // Predicated region
      $region77: #{forward.1} parent=11 // pred_check
        %p538 = pneg %p423
      $region78: #{forward.1} parent=11 // pred_check_branch
        %540 = sbr.rel (%p538) target = $region80
      $region79: #{forward.1} parent=11 // pred_region
        _
      $region80: #{forward.1} parent=11 // pred_fallthru
        _
    $region12: #{forward.1} parent=5 // pred_fallthru
      _
    %p541 = scmp.lt.s32.totalorder %s26, 2
    // Predicated region
    $region81: #{forward.1} parent=5 // pred_check
      %p542 = pneg %p541
    $region82: #{forward.1} parent=5 // pred_check_branch
      %544 = sbr.rel (%p542) target = $region84
    $region83: #{forward.1} parent=5 // pred_region
      // Predicated region
      $region85: #{forward.1} parent=83 // pred_check
        %p545 = pneg %p60
      $region86: #{forward.1} parent=83 // pred_check_branch
        %547 = sbr.rel (%p545) target = $region88
      $region87: #{forward.1} parent=83 // pred_region
        %s548 = smul.u32 4, %s34
        %s549 = smul.u32 2, %s33
        %p550 = scmp.lt.s32.totalorder %s548, 7
        %s551 = scalar_select %p550, %s548, 7
        %p552 = scmp.lt.s32.totalorder %s549, 1
        %s553 = scalar_select %p552, %s549, 1
        %s554 = smul.addr %s551, 2
        %s555 = sadd.s32 %s553, %s554
        %s556 = smul.addr %s555, 4
        %s557 = scalar_lea.vmem %s0, %s556
        %s558 = smul.u32 4, %s34
        %s559 = smul.u32 2, %s33
      $region88: #{forward.1} parent=83 // pred_fallthru
        _
    $region84: #{forward.1} parent=5 // pred_fallthru
      _
    %p560 = scmp.le.s32.totalorder 1, %s26
    %p561 = scmp.lt.s32.totalorder %s26, 3
    %p562 = pnand %p560, %p561
    %p563 = pneg %p562
    // Predicated region
    $region89: #{forward.1} parent=5 // pred_check
      _
    $region90: #{forward.1} parent=5 // pred_check_branch
      %565 = sbr.rel (%p562) target = $region92
    $region91: #{forward.1} parent=5 // pred_region
      %s566 = ssub.s32 %s26, 1
      %s567 = smul.u32 4, %s36
      %s568 = smul.u32 2, %s35
      %p569 = scmp.lt.s32.totalorder %s567, 7
      %s570 = scalar_select %p569, %s567, 7
      %p571 = scmp.lt.s32.totalorder %s568, 1
      %s572 = scalar_select %p571, %s568, 1
      %s573 = smul.addr %s570, 2
      %s574 = sadd.s32 %s572, %s573
      %s575 = smul.addr %s574, 4
      %s576 = scalar_lea.vmem %s0, %s575
      %p577 = pneg %p66
      %p578 = pneg %p63
      %p579 = pneg %p87
      %p580 = pneg %p84
      %p581 = pneg %p108
      %p582 = pneg %p105
      %p583 = pneg %p129
      %p584 = pneg %p126
      %p585 = pneg %p150
      %p586 = pneg %p147
      %p587 = pneg %p171
      %p588 = pneg %p168
      %p589 = pneg %p192
      %p590 = pneg %p189
      %p591 = pneg %p213
      %p592 = pneg %p210
      %p593 = pneg %p234
      %p594 = pneg %p231
      %p595 = pneg %p255
      %p596 = pneg %p252
      %p597 = pneg %p276
      %p598 = pneg %p273
      %p599 = pneg %p297
      %p600 = pneg %p294
      %p601 = pneg %p318
      %p602 = pneg %p315
      %p603 = pneg %p339
      %p604 = pneg %p336
      %p605 = pneg %p360
      %p606 = pneg %p357
      %p607 = pneg %p381
      %p608 = pneg %p378
      %p609 = pneg %p402
      %p610 = pneg %p399
      %p611 = pneg %p423
      %p612 = pneg %p420
      %p613 = pneg %p449
      %p614 = pneg %p446
      %s615 = smul.u32 2, %s35
      %p616 = scmp.lt.s32.totalorder %s615, 1
      %s617 = scalar_select %p616, %s615, 1
      %s618 = smul.addr %s617, 8
      %s619 = scalar_lea.vmem %s18, %s618
      %p620 = pneg %p475
      %p621 = pneg %p472
      %s622 = smul.u32 2, %s35
      %p623 = scmp.lt.s32.totalorder %s622, 1
      %s624 = scalar_select %p623, %s622, 1
      %s625 = smul.addr %s624, 8
      %s626 = scalar_lea.vmem %s19, %s625
      %s627 = smul.u32 4, %s36
      %s628 = smul.u32 2, %s35
      %p629 = scmp.lt.s32.totalorder %s627, 7
      %s630 = scalar_select %p629, %s627, 7
      %p631 = scmp.lt.s32.totalorder %s628, 1
      %s632 = scalar_select %p631, %s628, 1
      %s633 = smul.addr %s630, 2
      %s634 = sadd.s32 %s632, %s633
      %s635 = smul.addr %s634, 4
      %s636 = scalar_lea.vmem %s0, %s635
      %s637 = smul.u32 4, %s36
      %s638 = smul.u32 2, %s35
      %s639 = smul.u32 2, %s35
      %p640 = scmp.lt.s32.totalorder %s639, 1
      %s641 = scalar_select %p640, %s639, 1
      %s642 = smul.addr %s641, 8
      %s643 = scalar_lea.vmem %s18, %s642
      %s644 = smul.u32 2, %s35
      %s645 = smul.u32 2, %s35
      %p646 = scmp.lt.s32.totalorder %s645, 1
      %s647 = scalar_select %p646, %s645, 1
      %s648 = smul.addr %s647, 8
      %s649 = scalar_lea.vmem %s19, %s648
      %s650 = smul.u32 2, %s35
      %p652 = scmp.eq.s32.totalorder %s36, 0
      // Predicated region
      $region93: #{forward.1} parent=91 // pred_check
        %p653 = pneg %p652
      $region94: #{forward.1} parent=91 // pred_check_branch
        %655 = sbr.rel (%p653) target = $region96
      $region95: #{forward.1} parent=91 // pred_region
        %656 = vst [vmem:[#allocation3] sm:$0xff] 0.0
        %657 = vst [vmem:[#allocation3 + $0x8] sm:$0xff] 0.0
        %658 = vst [vmem:[#allocation4] sm:$0xff] 0.0
        %659 = vst [vmem:[#allocation4 + $0x8] sm:$0xff] 0.0
        %660 = vst [vmem:[#allocation5] sm:$0xff] 0.0
        %661 = vst [vmem:[#allocation5 + $0x8] sm:$0xff] 0.0
      $region96: #{forward.1} parent=91 // pred_fallthru
        _
      %v662 = vld [vmem:[%s636] sm:$0xf]
      %v663 = vld [vmem:[%s636 + $0x4] sm:$0xf]
      %v664 = vld [vmem:[%s636 + $0x8] sm:$0xf]
      %v665 = vld [vmem:[%s636 + $0xc] sm:$0xf]
      %v666 = vld [vmem:[%s636 + $0x10] sm:$0xf]
      %v667 = vld [vmem:[%s636 + $0x14] sm:$0xf]
      %v668 = vld [vmem:[%s636 + $0x18] sm:$0xf]
      %v669 = vld [vmem:[%s636 + $0x1c] sm:$0xf]
      %v670 = vld [vmem:[%s1] sm:$0xff]
      %v671 = vld [vmem:[%s1 + $0x8] sm:$0xff]
      %v672 = vld [vmem:[%s1 + $0x10] sm:$0xff]
      %v673 = vld [vmem:[%s1 + $0x18] sm:$0xff]
      %v674 = vld [vmem:[%s1 + $0x20] sm:$0xff]
      %v675 = vld [vmem:[%s1 + $0x28] sm:$0xff]
      %v676 = vld [vmem:[%s1 + $0x30] sm:$0xff]
      %v677 = vld [vmem:[%s1 + $0x38] sm:$0xff]
      %v678 = vld [vmem:[%s1 + $0x40] sm:$0xff]
      %v679 = vld [vmem:[%s1 + $0x48] sm:$0xff]
      %v680 = vld [vmem:[%s1 + $0x50] sm:$0xff]
      %v681 = vld [vmem:[%s1 + $0x58] sm:$0xff]
      %v682 = vld [vmem:[%s1 + $0x60] sm:$0xff]
      %v683 = vld [vmem:[%s1 + $0x68] sm:$0xff]
      %v684 = vld [vmem:[%s1 + $0x70] sm:$0xff]
      %v685 = vld [vmem:[%s1 + $0x78] sm:$0xff]
      %v686 = vld [vmem:[%s1 + $0x80] sm:$0xff]
      %v687 = vld [vmem:[%s1 + $0x88] sm:$0xff]
      %v688 = vld [vmem:[%s1 + $0x90] sm:$0xff]
      %v689 = vld [vmem:[%s1 + $0x98] sm:$0xff]
      %v690 = vld [vmem:[%s1 + $0xa0] sm:$0xff]
      %v691 = vld [vmem:[%s1 + $0xa8] sm:$0xff]
      %v692 = vld [vmem:[%s1 + $0xb0] sm:$0xff]
      %v693 = vld [vmem:[%s1 + $0xb8] sm:$0xff]
      %v694 = vld [vmem:[%s1 + $0xc0] sm:$0xff]
      %v695 = vld [vmem:[%s1 + $0xc8] sm:$0xff]
      %v696 = vld [vmem:[%s1 + $0xd0] sm:$0xff]
      %v697 = vld [vmem:[%s1 + $0xd8] sm:$0xff]
      %v698 = vld [vmem:[%s1 + $0xe0] sm:$0xff]
      %v699 = vld [vmem:[%s1 + $0xe8] sm:$0xff]
      %v700 = vld [vmem:[%s1 + $0xf0] sm:$0xff]
      %v701 = vld [vmem:[%s1 + $0xf8] sm:$0xff]
      %v702 = vld [vmem:[%s3] sm:$0xf]
      %v704 = vlaneseq
      %v705 = vshrl.u32 %v704, 7
      %v706 = vsub.s32 0, %v705
      %v707 = vrot.slane %v702, %v706
      %v708 = vlaneseq
      %v709 = vshrl.u32 %v708, 7
      %v710 = vsub.s32 1, %v709
      %v711 = vrot.slane %v702, %v710
      %v712 = vlaneseq
      %v713 = vshrl.u32 %v712, 7
      %v714 = vsub.s32 2, %v713
      %v715 = vrot.slane %v702, %v714
      %v716 = vlaneseq
      %v717 = vshrl.u32 %v716, 7
      %v718 = vsub.s32 3, %v717
      %v719 = vrot.slane %v702, %v718
      %v732 = vunpack.c.l.b16 %v662
      %v733 = vunpack.c.l.b16 %v663
      %v734 = vunpack.c.l.b16 %v664
      %v735 = vunpack.c.l.b16 %v665
      %v736 = vunpack.c.l.b16 %v666
      %v737 = vunpack.c.l.b16 %v667
      %v738 = vunpack.c.l.b16 %v668
      %v739 = vunpack.c.l.b16 %v669
      %v740 = vpack.c.b16 %v733, %v732
      %v741 = vpack.c.b16 %v735, %v734
      %v742 = vpack.c.b16 %v737, %v736
      %v743 = vpack.c.b16 %v739, %v738
      %v780 = vunpack.c.l.b16 %v670
      %v781 = vunpack.c.h.b16 %v670
      %v782 = vunpack.c.l.b16 %v671
      %v783 = vunpack.c.h.b16 %v671
      %v784 = vunpack.c.l.b16 %v672
      %v785 = vunpack.c.h.b16 %v672
      %v786 = vunpack.c.l.b16 %v673
      %v787 = vunpack.c.h.b16 %v673
      %v788 = vunpack.c.l.b16 %v674
      %v789 = vunpack.c.h.b16 %v674
      %v790 = vunpack.c.l.b16 %v675
      %v791 = vunpack.c.h.b16 %v675
      %v792 = vunpack.c.l.b16 %v676
      %v793 = vunpack.c.h.b16 %v676
      %v794 = vunpack.c.l.b16 %v677
      %v795 = vunpack.c.h.b16 %v677
      %v796 = vunpack.c.l.b16 %v678
      %v797 = vunpack.c.h.b16 %v678
      %v798 = vunpack.c.l.b16 %v679
      %v799 = vunpack.c.h.b16 %v679
      %v800 = vunpack.c.l.b16 %v680
      %v801 = vunpack.c.h.b16 %v680
      %v802 = vunpack.c.l.b16 %v681
      %v803 = vunpack.c.h.b16 %v681
      %v804 = vunpack.c.l.b16 %v682
      %v805 = vunpack.c.h.b16 %v682
      %v806 = vunpack.c.l.b16 %v683
      %v807 = vunpack.c.h.b16 %v683
      %v808 = vunpack.c.l.b16 %v684
      %v809 = vunpack.c.h.b16 %v684
      %v810 = vunpack.c.l.b16 %v685
      %v811 = vunpack.c.h.b16 %v685
      %v812 = vunpack.c.l.b16 %v686
      %v813 = vunpack.c.h.b16 %v686
      %v814 = vunpack.c.l.b16 %v687
      %v815 = vunpack.c.h.b16 %v687
      %v816 = vunpack.c.l.b16 %v688
      %v817 = vunpack.c.h.b16 %v688
      %v818 = vunpack.c.l.b16 %v689
      %v819 = vunpack.c.h.b16 %v689
      %v820 = vunpack.c.l.b16 %v690
      %v821 = vunpack.c.h.b16 %v690
      %v822 = vunpack.c.l.b16 %v691
      %v823 = vunpack.c.h.b16 %v691
      %v824 = vunpack.c.l.b16 %v692
      %v825 = vunpack.c.h.b16 %v692
      %v826 = vunpack.c.l.b16 %v693
      %v827 = vunpack.c.h.b16 %v693
      %v828 = vunpack.c.l.b16 %v694
      %v829 = vunpack.c.h.b16 %v694
      %v830 = vunpack.c.l.b16 %v695
      %v831 = vunpack.c.h.b16 %v695
      %v832 = vunpack.c.l.b16 %v696
      %v833 = vunpack.c.h.b16 %v696
      %v834 = vunpack.c.l.b16 %v697
      %v835 = vunpack.c.h.b16 %v697
      %v836 = vunpack.c.l.b16 %v698
      %v837 = vunpack.c.h.b16 %v698
      %v838 = vunpack.c.l.b16 %v699
      %v839 = vunpack.c.h.b16 %v699
      %v840 = vunpack.c.l.b16 %v700
      %v841 = vunpack.c.h.b16 %v700
      %v842 = vunpack.c.l.b16 %v701
      %v843 = vunpack.c.h.b16 %v701
      %v844 = vpack.c.b16 %v784, %v780
      %v845 = vpack.c.b16 %v785, %v781
      %v846 = vpack.c.b16 %v786, %v782
      %v847 = vpack.c.b16 %v787, %v783
      %v848 = vpack.c.b16 %v792, %v788
      %v849 = vpack.c.b16 %v793, %v789
      %v850 = vpack.c.b16 %v794, %v790
      %v851 = vpack.c.b16 %v795, %v791
      %v852 = vpack.c.b16 %v800, %v796
      %v853 = vpack.c.b16 %v801, %v797
      %v854 = vpack.c.b16 %v802, %v798
      %v855 = vpack.c.b16 %v803, %v799
      %v856 = vpack.c.b16 %v808, %v804
      %v857 = vpack.c.b16 %v809, %v805
      %v858 = vpack.c.b16 %v810, %v806
      %v859 = vpack.c.b16 %v811, %v807
      %v860 = vpack.c.b16 %v816, %v812
      %v861 = vpack.c.b16 %v817, %v813
      %v862 = vpack.c.b16 %v818, %v814
      %v863 = vpack.c.b16 %v819, %v815
      %v864 = vpack.c.b16 %v824, %v820
      %v865 = vpack.c.b16 %v825, %v821
      %v866 = vpack.c.b16 %v826, %v822
      %v867 = vpack.c.b16 %v827, %v823
      %v868 = vpack.c.b16 %v832, %v828
      %v869 = vpack.c.b16 %v833, %v829
      %v870 = vpack.c.b16 %v834, %v830
      %v871 = vpack.c.b16 %v835, %v831
      %v872 = vpack.c.b16 %v840, %v836
      %v873 = vpack.c.b16 %v841, %v837
      %v874 = vpack.c.b16 %v842, %v838
      %v875 = vpack.c.b16 %v843, %v839
      %908 = vmatprep.subr.bf16.mxu0 %v845
      %909 = vmatpush1.bf16.msra.mxu0 %v844
      %910 = vmatprep.subr.bf16.mxu0 %v849
      %911 = vmatpush1.bf16.msra.mxu0 %v848
      %912 = vmatprep.subr.bf16.mxu0 %v853
      %913 = vmatpush1.bf16.msra.mxu0 %v852
      %914 = vmatprep.subr.bf16.mxu0 %v857
      %915 = vmatpush1.bf16.msra.mxu0 %v856
      %916 = vmatprep.subr.bf16.mxu0 %v861
      %917 = vmatpush1.bf16.msra.mxu0 %v860
      %918 = vmatprep.subr.bf16.mxu0 %v865
      %919 = vmatpush1.bf16.msra.mxu0 %v864
      %920 = vmatprep.subr.bf16.mxu0 %v869
      %921 = vmatpush1.bf16.msra.mxu0 %v868
      %922 = vmatprep.subr.bf16.mxu0 %v873
      %923 = vmatpush1.bf16.msra.mxu0 %v872
      %924 = vmatprep.subr.bf16.mxu0 0
      %925 = vmatpush1.bf16.msra.mxu0 0
      %926 = vmatprep.subr.bf16.mxu0 0
      %927 = vmatpush1.bf16.msra.mxu0 0
      %928 = vmatprep.subr.bf16.mxu0 0
      %929 = vmatpush1.bf16.msra.mxu0 0
      %930 = vmatprep.subr.bf16.mxu0 0
      %931 = vmatpush1.bf16.msra.mxu0 0
      %932 = vmatprep.subr.bf16.mxu0 0
      %933 = vmatpush1.bf16.msra.mxu0 0
      %934 = vmatprep.subr.bf16.mxu0 0
      %935 = vmatpush1.bf16.msra.mxu0 0
      %936 = vmatprep.subr.bf16.mxu0 0
      %937 = vmatpush1.bf16.msra.mxu0 0
      %938 = vmatprep.subr.bf16.mxu0 0
      %939 = vmatpush1.bf16.msra.mxu0 0
      %940 = vmatprep.mubr.bf16.mxu0 0
      %941 = vmatmul.mubr.bf16.gmra.mrb[0].mxu0 %v740
      %v942 = vpop.f32.mrb[0].mxu0
      %v943 = vadd.f32 %v707, %v942
      %v944 = vpop.f32.mrb[0].mxu0
      %v945 = vadd.f32 %v711, %v944
      %v946 = vpop.f32.mrb[0].mxu0
      %v947 = vadd.f32 %v707, %v946
      %v948 = vpop.f32.mrb[0].mxu0
      %v949 = vadd.f32 %v711, %v948
      %950 = vmatprep.mubr.bf16.mxu0 0
      %951 = vmatmul.mubr.bf16.gmra.mrb[0].mxu0 %v741
      %v952 = vpop.f32.mrb[0].mxu0
      %v953 = vadd.f32 %v707, %v952
      %v954 = vpop.f32.mrb[0].mxu0
      %v955 = vadd.f32 %v711, %v954
      %v956 = vpop.f32.mrb[0].mxu0
      %v957 = vadd.f32 %v707, %v956
      %v958 = vpop.f32.mrb[0].mxu0
      %v959 = vadd.f32 %v711, %v958
      %960 = vmatprep.mubr.bf16.mxu0 0
      %961 = vmatmul.mubr.bf16.gmra.mrb[0].mxu0 %v742
      %v962 = vpop.f32.mrb[0].mxu0
      %v963 = vadd.f32 %v707, %v962
      %v964 = vpop.f32.mrb[0].mxu0
      %v965 = vadd.f32 %v711, %v964
      %v966 = vpop.f32.mrb[0].mxu0
      %v967 = vadd.f32 %v707, %v966
      %v968 = vpop.f32.mrb[0].mxu0
      %v969 = vadd.f32 %v711, %v968
      %970 = vmatprep.mubr.bf16.mxu0 0
      %971 = vmatmul.mubr.bf16.gmra.mrb[0].mxu0 %v743
      %v972 = vpop.f32.mrb[0].mxu0
      %v973 = vadd.f32 %v707, %v972
      %v974 = vpop.f32.mrb[0].mxu0
      %v975 = vadd.f32 %v711, %v974
      %v976 = vpop.f32.mrb[0].mxu0
      %v977 = vadd.f32 %v707, %v976
      %v978 = vpop.f32.mrb[0].mxu0
      %v979 = vadd.f32 %v711, %v978
      %980 = vdwg.mxu0
      %981 = vmatprep.subr.bf16.mxu0 %v847
      %982 = vmatpush1.bf16.msra.mxu0 %v846
      %983 = vmatprep.subr.bf16.mxu0 %v851
      %984 = vmatpush1.bf16.msra.mxu0 %v850
      %985 = vmatprep.subr.bf16.mxu0 %v855
      %986 = vmatpush1.bf16.msra.mxu0 %v854
      %987 = vmatprep.subr.bf16.mxu0 %v859
      %988 = vmatpush1.bf16.msra.mxu0 %v858
      %989 = vmatprep.subr.bf16.mxu0 %v863
      %990 = vmatpush1.bf16.msra.mxu0 %v862
      %991 = vmatprep.subr.bf16.mxu0 %v867
      %992 = vmatpush1.bf16.msra.mxu0 %v866
      %993 = vmatprep.subr.bf16.mxu0 %v871
      %994 = vmatpush1.bf16.msra.mxu0 %v870
      %995 = vmatprep.subr.bf16.mxu0 %v875
      %996 = vmatpush1.bf16.msra.mxu0 %v874
      %997 = vmatprep.subr.bf16.mxu0 0
      %998 = vmatpush1.bf16.msra.mxu0 0
      %999 = vmatprep.subr.bf16.mxu0 0
      %1000 = vmatpush1.bf16.msra.mxu0 0
      %1001 = vmatprep.subr.bf16.mxu0 0
      %1002 = vmatpush1.bf16.msra.mxu0 0
      %1003 = vmatprep.subr.bf16.mxu0 0
      %1004 = vmatpush1.bf16.msra.mxu0 0
      %1005 = vmatprep.subr.bf16.mxu0 0
      %1006 = vmatpush1.bf16.msra.mxu0 0
      %1007 = vmatprep.subr.bf16.mxu0 0
      %1008 = vmatpush1.bf16.msra.mxu0 0
      %1009 = vmatprep.subr.bf16.mxu0 0
      %1010 = vmatpush1.bf16.msra.mxu0 0
      %1011 = vmatprep.subr.bf16.mxu0 0
      %1012 = vmatpush1.bf16.msra.mxu0 0
      %1013 = vmatprep.mubr.bf16.mxu0 0
      %1014 = vmatmul.mubr.bf16.gmra.mrb[0].mxu0 %v740
      %v1015 = vpop.f32.mrb[0].mxu0
      %v1016 = vadd.f32 %v715, %v1015
      %v1017 = vpop.f32.mrb[0].mxu0
      %v1018 = vadd.f32 %v719, %v1017
      %v1019 = vpop.f32.mrb[0].mxu0
      %v1020 = vadd.f32 %v715, %v1019
      %v1021 = vpop.f32.mrb[0].mxu0
      %v1022 = vadd.f32 %v719, %v1021
      %1023 = vmatprep.mubr.bf16.mxu0 0
      %1024 = vmatmul.mubr.bf16.gmra.mrb[0].mxu0 %v741
      %v1025 = vpop.f32.mrb[0].mxu0
      %v1026 = vadd.f32 %v715, %v1025
      %v1027 = vpop.f32.mrb[0].mxu0
      %v1028 = vadd.f32 %v719, %v1027
      %v1029 = vpop.f32.mrb[0].mxu0
      %v1030 = vadd.f32 %v715, %v1029
      %v1031 = vpop.f32.mrb[0].mxu0
      %v1032 = vadd.f32 %v719, %v1031
      %1033 = vmatprep.mubr.bf16.mxu0 0
      %1034 = vmatmul.mubr.bf16.gmra.mrb[0].mxu0 %v742
      %v1035 = vpop.f32.mrb[0].mxu0
      %v1036 = vadd.f32 %v715, %v1035
      %v1037 = vpop.f32.mrb[0].mxu0
      %v1038 = vadd.f32 %v719, %v1037
      %v1039 = vpop.f32.mrb[0].mxu0
      %v1040 = vadd.f32 %v715, %v1039
      %v1041 = vpop.f32.mrb[0].mxu0
      %v1042 = vadd.f32 %v719, %v1041
      %1043 = vmatprep.mubr.bf16.mxu0 0
      %1044 = vmatmul.mubr.bf16.gmra.mrb[0].mxu0 %v743
      %v1045 = vpop.f32.mrb[0].mxu0
      %v1046 = vadd.f32 %v715, %v1045
      %v1047 = vpop.f32.mrb[0].mxu0
      %v1048 = vadd.f32 %v719, %v1047
      %v1049 = vpop.f32.mrb[0].mxu0
      %v1050 = vadd.f32 %v715, %v1049
      %v1051 = vpop.f32.mrb[0].mxu0
      %v1052 = vadd.f32 %v719, %v1051
      %1053 = vdwg.mxu0
      %1054 = vst [vmem:[#allocation2] sm:$0xff] %v943
      %1055 = vst [vmem:[#allocation2 + $0x8] sm:$0xff] %v945
      %1056 = vst [vmem:[#allocation2 + $0x10] sm:$0xff] %v1016
      %1057 = vst [vmem:[#allocation2 + $0x18] sm:$0xff] %v1018
      %1058 = vst [vmem:[#allocation2 + $0x20] sm:$0xff] %v947
      %1059 = vst [vmem:[#allocation2 + $0x28] sm:$0xff] %v949
      %1060 = vst [vmem:[#allocation2 + $0x30] sm:$0xff] %v1020
      %1061 = vst [vmem:[#allocation2 + $0x38] sm:$0xff] %v1022
      %1062 = vst [vmem:[#allocation2 + $0x40] sm:$0xff] %v953
      %1063 = vst [vmem:[#allocation2 + $0x48] sm:$0xff] %v955
      %1064 = vst [vmem:[#allocation2 + $0x50] sm:$0xff] %v1026
      %1065 = vst [vmem:[#allocation2 + $0x58] sm:$0xff] %v1028
      %1066 = vst [vmem:[#allocation2 + $0x60] sm:$0xff] %v957
      %1067 = vst [vmem:[#allocation2 + $0x68] sm:$0xff] %v959
      %1068 = vst [vmem:[#allocation2 + $0x70] sm:$0xff] %v1030
      %1069 = vst [vmem:[#allocation2 + $0x78] sm:$0xff] %v1032
      %1070 = vst [vmem:[#allocation2 + $0x80] sm:$0xff] %v963
      %1071 = vst [vmem:[#allocation2 + $0x88] sm:$0xff] %v965
      %1072 = vst [vmem:[#allocation2 + $0x90] sm:$0xff] %v1036
      %1073 = vst [vmem:[#allocation2 + $0x98] sm:$0xff] %v1038
      %1074 = vst [vmem:[#allocation2 + $0xa0] sm:$0xff] %v967
      %1075 = vst [vmem:[#allocation2 + $0xa8] sm:$0xff] %v969
      %1076 = vst [vmem:[#allocation2 + $0xb0] sm:$0xff] %v1040
      %1077 = vst [vmem:[#allocation2 + $0xb8] sm:$0xff] %v1042
      %1078 = vst [vmem:[#allocation2 + $0xc0] sm:$0xff] %v973
      %1079 = vst [vmem:[#allocation2 + $0xc8] sm:$0xff] %v975
      %1080 = vst [vmem:[#allocation2 + $0xd0] sm:$0xff] %v1046
      %1081 = vst [vmem:[#allocation2 + $0xd8] sm:$0xff] %v1048
      %1082 = vst [vmem:[#allocation2 + $0xe0] sm:$0xff] %v977
      %1083 = vst [vmem:[#allocation2 + $0xe8] sm:$0xff] %v979
      %1084 = vst [vmem:[#allocation2 + $0xf0] sm:$0xff] %v1050
      %1085 = vst [vmem:[#allocation2 + $0xf8] sm:$0xff] %v1052
      %v1086 = vld [vmem:[%s2] sm:$0xff]
      %v1087 = vld [vmem:[%s2 + $0x8] sm:$0xff]
      %v1088 = vld [vmem:[%s2 + $0x10] sm:$0xff]
      %v1089 = vld [vmem:[%s2 + $0x18] sm:$0xff]
      %v1090 = vld [vmem:[%s2 + $0x20] sm:$0xff]
      %v1091 = vld [vmem:[%s2 + $0x28] sm:$0xff]
      %v1092 = vld [vmem:[%s2 + $0x30] sm:$0xff]
      %v1093 = vld [vmem:[%s2 + $0x38] sm:$0xff]
      %v1094 = vld [vmem:[%s2 + $0x40] sm:$0xff]
      %v1095 = vld [vmem:[%s2 + $0x48] sm:$0xff]
      %v1096 = vld [vmem:[%s2 + $0x50] sm:$0xff]
      %v1097 = vld [vmem:[%s2 + $0x58] sm:$0xff]
      %v1098 = vld [vmem:[%s2 + $0x60] sm:$0xff]
      %v1099 = vld [vmem:[%s2 + $0x68] sm:$0xff]
      %v1100 = vld [vmem:[%s2 + $0x70] sm:$0xff]
      %v1101 = vld [vmem:[%s2 + $0x78] sm:$0xff]
      %v1102 = vld [vmem:[%s2 + $0x80] sm:$0xff]
      %v1103 = vld [vmem:[%s2 + $0x88] sm:$0xff]
      %v1104 = vld [vmem:[%s2 + $0x90] sm:$0xff]
      %v1105 = vld [vmem:[%s2 + $0x98] sm:$0xff]
      %v1106 = vld [vmem:[%s2 + $0xa0] sm:$0xff]
      %v1107 = vld [vmem:[%s2 + $0xa8] sm:$0xff]
      %v1108 = vld [vmem:[%s2 + $0xb0] sm:$0xff]
      %v1109 = vld [vmem:[%s2 + $0xb8] sm:$0xff]
      %v1110 = vld [vmem:[%s2 + $0xc0] sm:$0xff]
      %v1111 = vld [vmem:[%s2 + $0xc8] sm:$0xff]
      %v1112 = vld [vmem:[%s2 + $0xd0] sm:$0xff]
      %v1113 = vld [vmem:[%s2 + $0xd8] sm:$0xff]
      %v1114 = vld [vmem:[%s2 + $0xe0] sm:$0xff]
      %v1115 = vld [vmem:[%s2 + $0xe8] sm:$0xff]
      %v1116 = vld [vmem:[%s2 + $0xf0] sm:$0xff]
      %v1117 = vld [vmem:[%s2 + $0xf8] sm:$0xff]
      %v1118 = vld [vmem:[#allocation3] sm:$0xff]
      %v1119 = vld [vmem:[#allocation3 + $0x8] sm:$0xff]
      %v1120 = vld [vmem:[#allocation4] sm:$0xff]
      %v1121 = vld [vmem:[#allocation4 + $0x8] sm:$0xff]
      %v1122 = vld [vmem:[#allocation5] sm:$0xff]
      %v1123 = vld [vmem:[#allocation5 + $0x8] sm:$0xff]
      %s1124 = smul.u32 0, 4
      %s1125 = smul.addr %s1124, 8
      %s1126 = scalar_lea.vmem [#allocation2], %s1125
      %v1127 = vld [vmem:[%s1126] sm:$0xff]
      %v1128 = vld [vmem:[%s1126 + $0x8] sm:$0xff]
      %v1129 = vld [vmem:[%s1126 + $0x10] sm:$0xff]
      %v1130 = vld [vmem:[%s1126 + $0x18] sm:$0xff]
      %v1131 = vld [vmem:[%s1126 + $0x20] sm:$0xff]
      %v1132 = vld [vmem:[%s1126 + $0x28] sm:$0xff]
      %v1133 = vld [vmem:[%s1126 + $0x30] sm:$0xff]
      %v1134 = vld [vmem:[%s1126 + $0x38] sm:$0xff]
      %v1135 = vpack.c.bf16 %v1119, %v1118
      %v1168 = vunpack.c.l.b16 %v1086
      %v1169 = vunpack.c.h.b16 %v1086
      %v1170 = vunpack.c.l.b16 %v1087
      %v1171 = vunpack.c.h.b16 %v1087
      %v1172 = vunpack.c.l.b16 %v1088
      %v1173 = vunpack.c.h.b16 %v1088
      %v1174 = vunpack.c.l.b16 %v1089
      %v1175 = vunpack.c.h.b16 %v1089
      %v1176 = vunpack.c.l.b16 %v1090
      %v1177 = vunpack.c.h.b16 %v1090
      %v1178 = vunpack.c.l.b16 %v1091
      %v1179 = vunpack.c.h.b16 %v1091
      %v1180 = vunpack.c.l.b16 %v1092
      %v1181 = vunpack.c.h.b16 %v1092
      %v1182 = vunpack.c.l.b16 %v1093
      %v1183 = vunpack.c.h.b16 %v1093
      %v1184 = vunpack.c.l.b16 %v1094
      %v1185 = vunpack.c.h.b16 %v1094
      %v1186 = vunpack.c.l.b16 %v1095
      %v1187 = vunpack.c.h.b16 %v1095
      %v1188 = vunpack.c.l.b16 %v1096
      %v1189 = vunpack.c.h.b16 %v1096
      %v1190 = vunpack.c.l.b16 %v1097
      %v1191 = vunpack.c.h.b16 %v1097
      %v1192 = vunpack.c.l.b16 %v1098
      %v1193 = vunpack.c.h.b16 %v1098
      %v1194 = vunpack.c.l.b16 %v1099
      %v1195 = vunpack.c.h.b16 %v1099
      %v1196 = vunpack.c.l.b16 %v1100
      %v1197 = vunpack.c.h.b16 %v1100
      %v1198 = vunpack.c.l.b16 %v1101
      %v1199 = vunpack.c.h.b16 %v1101
      %v1200 = vunpack.c.l.b16 %v1102
      %v1201 = vunpack.c.h.b16 %v1102
      %v1202 = vunpack.c.l.b16 %v1103
      %v1203 = vunpack.c.h.b16 %v1103
      %v1204 = vunpack.c.l.b16 %v1104
      %v1205 = vunpack.c.h.b16 %v1104
      %v1206 = vunpack.c.l.b16 %v1105
      %v1207 = vunpack.c.h.b16 %v1105
      %v1208 = vunpack.c.l.b16 %v1106
      %v1209 = vunpack.c.h.b16 %v1106
      %v1210 = vunpack.c.l.b16 %v1107
      %v1211 = vunpack.c.h.b16 %v1107
      %v1212 = vunpack.c.l.b16 %v1108
      %v1213 = vunpack.c.h.b16 %v1108
      %v1214 = vunpack.c.l.b16 %v1109
      %v1215 = vunpack.c.h.b16 %v1109
      %v1216 = vunpack.c.l.b16 %v1110
      %v1217 = vunpack.c.h.b16 %v1110
      %v1218 = vunpack.c.l.b16 %v1111
      %v1219 = vunpack.c.h.b16 %v1111
      %v1220 = vunpack.c.l.b16 %v1112
      %v1221 = vunpack.c.h.b16 %v1112
      %v1222 = vunpack.c.l.b16 %v1113
      %v1223 = vunpack.c.h.b16 %v1113
      %v1224 = vunpack.c.l.b16 %v1114
      %v1225 = vunpack.c.h.b16 %v1114
      %v1226 = vunpack.c.l.b16 %v1115
      %v1227 = vunpack.c.h.b16 %v1115
      %v1228 = vunpack.c.l.b16 %v1116
      %v1229 = vunpack.c.h.b16 %v1116
      %v1230 = vunpack.c.l.b16 %v1117
      %v1231 = vunpack.c.h.b16 %v1117
      %v1232 = vpack.c.b16 %v1172, %v1168
      %v1233 = vpack.c.b16 %v1173, %v1169
      %v1234 = vpack.c.b16 %v1174, %v1170
      %v1235 = vpack.c.b16 %v1175, %v1171
      %v1236 = vpack.c.b16 %v1180, %v1176
      %v1237 = vpack.c.b16 %v1181, %v1177
      %v1238 = vpack.c.b16 %v1182, %v1178
      %v1239 = vpack.c.b16 %v1183, %v1179
      %v1240 = vpack.c.b16 %v1188, %v1184
      %v1241 = vpack.c.b16 %v1189, %v1185
      %v1242 = vpack.c.b16 %v1190, %v1186
      %v1243 = vpack.c.b16 %v1191, %v1187
      %v1244 = vpack.c.b16 %v1196, %v1192
      %v1245 = vpack.c.b16 %v1197, %v1193
      %v1246 = vpack.c.b16 %v1198, %v1194
      %v1247 = vpack.c.b16 %v1199, %v1195
      %v1248 = vpack.c.b16 %v1204, %v1200
      %v1249 = vpack.c.b16 %v1205, %v1201
      %v1250 = vpack.c.b16 %v1206, %v1202
      %v1251 = vpack.c.b16 %v1207, %v1203
      %v1252 = vpack.c.b16 %v1212, %v1208
      %v1253 = vpack.c.b16 %v1213, %v1209
      %v1254 = vpack.c.b16 %v1214, %v1210
      %v1255 = vpack.c.b16 %v1215, %v1211
      %v1256 = vpack.c.b16 %v1220, %v1216
      %v1257 = vpack.c.b16 %v1221, %v1217
      %v1258 = vpack.c.b16 %v1222, %v1218
      %v1259 = vpack.c.b16 %v1223, %v1219
      %v1260 = vpack.c.b16 %v1228, %v1224
      %v1261 = vpack.c.b16 %v1229, %v1225
      %v1262 = vpack.c.b16 %v1230, %v1226
      %v1263 = vpack.c.b16 %v1231, %v1227
      %1296 = vmatprep.subr.bf16.mxu0 %v1233
      %1297 = vmatpush1.bf16.msra.mxu0 %v1232
      %1298 = vmatprep.subr.bf16.mxu0 %v1237
      %1299 = vmatpush1.bf16.msra.mxu0 %v1236
      %1300 = vmatprep.subr.bf16.mxu0 %v1241
      %1301 = vmatpush1.bf16.msra.mxu0 %v1240
      %1302 = vmatprep.subr.bf16.mxu0 %v1245
      %1303 = vmatpush1.bf16.msra.mxu0 %v1244
      %1304 = vmatprep.subr.bf16.mxu0 %v1249
      %1305 = vmatpush1.bf16.msra.mxu0 %v1248
      %1306 = vmatprep.subr.bf16.mxu0 %v1253
      %1307 = vmatpush1.bf16.msra.mxu0 %v1252
      %1308 = vmatprep.subr.bf16.mxu0 %v1257
      %1309 = vmatpush1.bf16.msra.mxu0 %v1256
      %1310 = vmatprep.subr.bf16.mxu0 %v1261
      %1311 = vmatpush1.bf16.msra.mxu0 %v1260
      %1312 = vmatprep.subr.bf16.mxu0 0
      %1313 = vmatpush1.bf16.msra.mxu0 0
      %1314 = vmatprep.subr.bf16.mxu0 0
      %1315 = vmatpush1.bf16.msra.mxu0 0
      %1316 = vmatprep.subr.bf16.mxu0 0
      %1317 = vmatpush1.bf16.msra.mxu0 0
      %1318 = vmatprep.subr.bf16.mxu0 0
      %1319 = vmatpush1.bf16.msra.mxu0 0
      %1320 = vmatprep.subr.bf16.mxu0 0
      %1321 = vmatpush1.bf16.msra.mxu0 0
      %1322 = vmatprep.subr.bf16.mxu0 0
      %1323 = vmatpush1.bf16.msra.mxu0 0
      %1324 = vmatprep.subr.bf16.mxu0 0
      %1325 = vmatpush1.bf16.msra.mxu0 0
      %1326 = vmatprep.subr.bf16.mxu0 0
      %1327 = vmatpush1.bf16.msra.mxu0 0
      %1328 = vmatprep.mubr.bf16.mxu0 0
      %1329 = vmatmul.mubr.bf16.gmra.mrb[0].mxu0 %v1135
      %v1330 = vpop.f32.mrb[0].mxu0
      %v1331 = vadd.f32 0.0, %v1330
      %v1332 = vpop.f32.mrb[0].mxu0
      %v1333 = vadd.f32 0.0, %v1332
      %v1334 = vpop.f32.mrb[0].mxu0
      %v1335 = vadd.f32 0.0, %v1334
      %v1336 = vpop.f32.mrb[0].mxu0
      %v1337 = vadd.f32 0.0, %v1336
      %1338 = vdwg.mxu0
      %1339 = vmatprep.subr.bf16.mxu0 %v1235
      %1340 = vmatpush1.bf16.msra.mxu0 %v1234
      %1341 = vmatprep.subr.bf16.mxu0 %v1239
      %1342 = vmatpush1.bf16.msra.mxu0 %v1238
      %1343 = vmatprep.subr.bf16.mxu0 %v1243
      %1344 = vmatpush1.bf16.msra.mxu0 %v1242
      %1345 = vmatprep.subr.bf16.mxu0 %v1247
      %1346 = vmatpush1.bf16.msra.mxu0 %v1246
      %1347 = vmatprep.subr.bf16.mxu0 %v1251
      %1348 = vmatpush1.bf16.msra.mxu0 %v1250
      %1349 = vmatprep.subr.bf16.mxu0 %v1255
      %1350 = vmatpush1.bf16.msra.mxu0 %v1254
      %1351 = vmatprep.subr.bf16.mxu0 %v1259
      %1352 = vmatpush1.bf16.msra.mxu0 %v1258
      %1353 = vmatprep.subr.bf16.mxu0 %v1263
      %1354 = vmatpush1.bf16.msra.mxu0 %v1262
      %1355 = vmatprep.subr.bf16.mxu0 0
      %1356 = vmatpush1.bf16.msra.mxu0 0
      %1357 = vmatprep.subr.bf16.mxu0 0
      %1358 = vmatpush1.bf16.msra.mxu0 0
      %1359 = vmatprep.subr.bf16.mxu0 0
      %1360 = vmatpush1.bf16.msra.mxu0 0
      %1361 = vmatprep.subr.bf16.mxu0 0
      %1362 = vmatpush1.bf16.msra.mxu0 0
      %1363 = vmatprep.subr.bf16.mxu0 0
      %1364 = vmatpush1.bf16.msra.mxu0 0
      %1365 = vmatprep.subr.bf16.mxu0 0
      %1366 = vmatpush1.bf16.msra.mxu0 0
      %1367 = vmatprep.subr.bf16.mxu0 0
      %1368 = vmatpush1.bf16.msra.mxu0 0
      %1369 = vmatprep.subr.bf16.mxu0 0
      %1370 = vmatpush1.bf16.msra.mxu0 0
      %1371 = vmatprep.mubr.bf16.mxu0 0
      %1372 = vmatmul.mubr.bf16.gmra.mrb[0].mxu0 %v1135
      %v1373 = vpop.f32.mrb[0].mxu0
      %v1374 = vadd.f32 0.0, %v1373
      %v1375 = vpop.f32.mrb[0].mxu0
      %v1376 = vadd.f32 0.0, %v1375
      %v1377 = vpop.f32.mrb[0].mxu0
      %v1378 = vadd.f32 0.0, %v1377
      %v1379 = vpop.f32.mrb[0].mxu0
      %v1380 = vadd.f32 0.0, %v1379
      %1381 = vdwg.mxu0
      %v1382 = vadd.f32 %v1127, %v1331
      %v1383 = vadd.f32 %v1128, %v1333
      %v1384 = vadd.f32 %v1129, %v1374
      %v1385 = vadd.f32 %v1130, %v1376
      %v1386 = vadd.f32 %v1131, %v1335
      %v1387 = vadd.f32 %v1132, %v1337
      %v1388 = vadd.f32 %v1133, %v1378
      %v1389 = vadd.f32 %v1134, %v1380
      %v1390 = vxor.u32 %v1382, 2147483648
      %v1391 = vxor.u32 %v1383, 2147483648
      %v1392 = vxor.u32 %v1384, 2147483648
      %v1393 = vxor.u32 %v1386, 2147483648
      %v1394 = vxor.u32 %v1387, 2147483648
      %v1395 = vxor.u32 %v1388, 2147483648
      %v1396 = vmul.f32 %v1390, 1.442695
      %v1397 = vpow.pop %v1396
      %v1398 = vmul.f32 %v1391, 1.442695
      %v1399 = vpow.pop %v1398
      %v1400 = vmul.f32 %v1392, 1.442695
      %v1401 = vpow.pop %v1400
      %v1402 = vmul.f32 %v1393, 1.442695
      %v1403 = vpow.pop %v1402
      %v1404 = vmul.f32 %v1394, 1.442695
      %v1405 = vpow.pop %v1404
      %v1406 = vmul.f32 %v1395, 1.442695
      %v1407 = vpow.pop %v1406
      %v1408 = vadd.f32 %v1397, 1.0
      %v1409 = vadd.f32 %v1399, 1.0
      %v1410 = vadd.f32 %v1401, 1.0
      %v1411 = vadd.f32 %v1403, 1.0
      %v1412 = vadd.f32 %v1405, 1.0
      %v1413 = vadd.f32 %v1407, 1.0
      %v1414 = vrcp.pop %v1408
      %v1415 = vmul.f32 1.0, %v1414
      %v1416 = vrcp.pop %v1409
      %v1417 = vmul.f32 1.0, %v1416
      %v1418 = vrcp.pop %v1410
      %v1419 = vmul.f32 1.0, %v1418
      %v1420 = vrcp.pop %v1411
      %v1421 = vmul.f32 1.0, %v1420
      %v1422 = vrcp.pop %v1412
      %v1423 = vmul.f32 1.0, %v1422
      %v1424 = vrcp.pop %v1413
      %v1425 = vmul.f32 1.0, %v1424
      %v1426 = vtanh.pop %v1385
      %v1427 = vtanh.pop %v1389
      %v1428 = vmul.f32 %v1417, %v1120
      %v1429 = vmul.f32 %v1423, %v1121
      %v1430 = vmul.f32 %v1415, %v1426
      %v1431 = vmul.f32 %v1421, %v1427
      %v1432 = vadd.f32 %v1428, %v1430
      %v1433 = vadd.f32 %v1429, %v1431
      %v1434 = vtanh.pop %v1432
      %v1435 = vtanh.pop %v1433
      %v1436 = vmul.f32 %v1419, %v1434
      %v1437 = vmul.f32 %v1425, %v1435
      %v1438 = vadd.f32 %v1122, %v1436
      %v1439 = vadd.f32 %v1123, %v1437
      %s1440 = smul.u32 2, 4
      %s1441 = smul.addr %s1440, 8
      %s1442 = scalar_lea.vmem [#allocation2], %s1441
      %v1443 = vld [vmem:[%s1442] sm:$0xff]
      %v1444 = vld [vmem:[%s1442 + $0x8] sm:$0xff]
      %v1445 = vld [vmem:[%s1442 + $0x10] sm:$0xff]
      %v1446 = vld [vmem:[%s1442 + $0x18] sm:$0xff]
      %v1447 = vld [vmem:[%s1442 + $0x20] sm:$0xff]
      %v1448 = vld [vmem:[%s1442 + $0x28] sm:$0xff]
      %v1449 = vld [vmem:[%s1442 + $0x30] sm:$0xff]
      %v1450 = vld [vmem:[%s1442 + $0x38] sm:$0xff]
      %v1451 = vpack.c.bf16 %v1437, %v1436
      %1452 = vmatprep.subr.bf16.mxu0 %v1233
      %1453 = vmatpush1.bf16.msra.mxu0 %v1232
      %1454 = vmatprep.subr.bf16.mxu0 %v1237
      %1455 = vmatpush1.bf16.msra.mxu0 %v1236
      %1456 = vmatprep.subr.bf16.mxu0 %v1241
      %1457 = vmatpush1.bf16.msra.mxu0 %v1240
      %1458 = vmatprep.subr.bf16.mxu0 %v1245
      %1459 = vmatpush1.bf16.msra.mxu0 %v1244
      %1460 = vmatprep.subr.bf16.mxu0 %v1249
      %1461 = vmatpush1.bf16.msra.mxu0 %v1248
      %1462 = vmatprep.subr.bf16.mxu0 %v1253
      %1463 = vmatpush1.bf16.msra.mxu0 %v1252
      %1464 = vmatprep.subr.bf16.mxu0 %v1257
      %1465 = vmatpush1.bf16.msra.mxu0 %v1256
      %1466 = vmatprep.subr.bf16.mxu0 %v1261
      %1467 = vmatpush1.bf16.msra.mxu0 %v1260
      %1468 = vmatprep.subr.bf16.mxu0 0
      %1469 = vmatpush1.bf16.msra.mxu0 0
      %1470 = vmatprep.subr.bf16.mxu0 0
      %1471 = vmatpush1.bf16.msra.mxu0 0
      %1472 = vmatprep.subr.bf16.mxu0 0
      %1473 = vmatpush1.bf16.msra.mxu0 0
      %1474 = vmatprep.subr.bf16.mxu0 0
      %1475 = vmatpush1.bf16.msra.mxu0 0
      %1476 = vmatprep.subr.bf16.mxu0 0
      %1477 = vmatpush1.bf16.msra.mxu0 0
      %1478 = vmatprep.subr.bf16.mxu0 0
      %1479 = vmatpush1.bf16.msra.mxu0 0
      %1480 = vmatprep.subr.bf16.mxu0 0
      %1481 = vmatpush1.bf16.msra.mxu0 0
      %1482 = vmatprep.subr.bf16.mxu0 0
      %1483 = vmatpush1.bf16.msra.mxu0 0
      %1484 = vmatprep.mubr.bf16.mxu0 0
      %1485 = vmatmul.mubr.bf16.gmra.mrb[0].mxu0 %v1451
      %v1486 = vpop.f32.mrb[0].mxu0
      %v1487 = vadd.f32 0.0, %v1486
      %v1488 = vpop.f32.mrb[0].mxu0
      %v1489 = vadd.f32 0.0, %v1488
      %v1490 = vpop.f32.mrb[0].mxu0
      %v1491 = vadd.f32 0.0, %v1490
      %v1492 = vpop.f32.mrb[0].mxu0
      %v1493 = vadd.f32 0.0, %v1492
      %1494 = vdwg.mxu0
      %1495 = vmatprep.subr.bf16.mxu0 %v1235
      %1496 = vmatpush1.bf16.msra.mxu0 %v1234
      %1497 = vmatprep.subr.bf16.mxu0 %v1239
      %1498 = vmatpush1.bf16.msra.mxu0 %v1238
      %1499 = vmatprep.subr.bf16.mxu0 %v1243
      %1500 = vmatpush1.bf16.msra.mxu0 %v1242
      %1501 = vmatprep.subr.bf16.mxu0 %v1247
      %1502 = vmatpush1.bf16.msra.mxu0 %v1246
      %1503 = vmatprep.subr.bf16.mxu0 %v1251
      %1504 = vmatpush1.bf16.msra.mxu0 %v1250
      %1505 = vmatprep.subr.bf16.mxu0 %v1255
      %1506 = vmatpush1.bf16.msra.mxu0 %v1254
      %1507 = vmatprep.subr.bf16.mxu0 %v1259
      %1508 = vmatpush1.bf16.msra.mxu0 %v1258
      %1509 = vmatprep.subr.bf16.mxu0 %v1263
      %1510 = vmatpush1.bf16.msra.mxu0 %v1262
      %1511 = vmatprep.subr.bf16.mxu0 0
      %1512 = vmatpush1.bf16.msra.mxu0 0
      %1513 = vmatprep.subr.bf16.mxu0 0
      %1514 = vmatpush1.bf16.msra.mxu0 0
      %1515 = vmatprep.subr.bf16.mxu0 0
      %1516 = vmatpush1.bf16.msra.mxu0 0
      %1517 = vmatprep.subr.bf16.mxu0 0
      %1518 = vmatpush1.bf16.msra.mxu0 0
      %1519 = vmatprep.subr.bf16.mxu0 0
      %1520 = vmatpush1.bf16.msra.mxu0 0
      %1521 = vmatprep.subr.bf16.mxu0 0
      %1522 = vmatpush1.bf16.msra.mxu0 0
      %1523 = vmatprep.subr.bf16.mxu0 0
      %1524 = vmatpush1.bf16.msra.mxu0 0
      %1525 = vmatprep.subr.bf16.mxu0 0
      %1526 = vmatpush1.bf16.msra.mxu0 0
      %1527 = vmatprep.mubr.bf16.mxu0 0
      %1528 = vmatmul.mubr.bf16.gmra.mrb[0].mxu0 %v1451
      %v1529 = vpop.f32.mrb[0].mxu0
      %v1530 = vadd.f32 0.0, %v1529
      %v1531 = vpop.f32.mrb[0].mxu0
      %v1532 = vadd.f32 0.0, %v1531
      %v1533 = vpop.f32.mrb[0].mxu0
      %v1534 = vadd.f32 0.0, %v1533
      %v1535 = vpop.f32.mrb[0].mxu0
      %v1536 = vadd.f32 0.0, %v1535
      %1537 = vdwg.mxu0
      %v1538 = vadd.f32 %v1443, %v1487
      %v1539 = vadd.f32 %v1444, %v1489
      %v1540 = vadd.f32 %v1445, %v1530
      %v1541 = vadd.f32 %v1446, %v1532
      %v1542 = vadd.f32 %v1447, %v1491
      %v1543 = vadd.f32 %v1448, %v1493
      %v1544 = vadd.f32 %v1449, %v1534
      %v1545 = vadd.f32 %v1450, %v1536
      %v1546 = vxor.u32 %v1538, 2147483648
      %v1547 = vxor.u32 %v1539, 2147483648
      %v1548 = vxor.u32 %v1540, 2147483648
      %v1549 = vxor.u32 %v1542, 2147483648
      %v1550 = vxor.u32 %v1543, 2147483648
      %v1551 = vxor.u32 %v1544, 2147483648
      %v1552 = vmul.f32 %v1546, 1.442695
      %v1553 = vpow.pop %v1552
      %v1554 = vmul.f32 %v1547, 1.442695
      %v1555 = vpow.pop %v1554
      %v1556 = vmul.f32 %v1548, 1.442695
      %v1557 = vpow.pop %v1556
      %v1558 = vmul.f32 %v1549, 1.442695
      %v1559 = vpow.pop %v1558
      %v1560 = vmul.f32 %v1550, 1.442695
      %v1561 = vpow.pop %v1560
      %v1562 = vmul.f32 %v1551, 1.442695
      %v1563 = vpow.pop %v1562
      %v1564 = vadd.f32 %v1553, 1.0
      %v1565 = vadd.f32 %v1555, 1.0
      %v1566 = vadd.f32 %v1557, 1.0
      %v1567 = vadd.f32 %v1559, 1.0
      %v1568 = vadd.f32 %v1561, 1.0
      %v1569 = vadd.f32 %v1563, 1.0
      %v1570 = vrcp.pop %v1564
      %v1571 = vmul.f32 1.0, %v1570
      %v1572 = vrcp.pop %v1565
      %v1573 = vmul.f32 1.0, %v1572
      %v1574 = vrcp.pop %v1566
      %v1575 = vmul.f32 1.0, %v1574
      %v1576 = vrcp.pop %v1567
      %v1577 = vmul.f32 1.0, %v1576
      %v1578 = vrcp.pop %v1568
      %v1579 = vmul.f32 1.0, %v1578
      %v1580 = vrcp.pop %v1569
      %v1581 = vmul.f32 1.0, %v1580
      %v1582 = vtanh.pop %v1541
      %v1583 = vtanh.pop %v1545
      %v1584 = vmul.f32 %v1573, %v1432
      %v1585 = vmul.f32 %v1579, %v1433
      %v1586 = vmul.f32 %v1571, %v1582
      %v1587 = vmul.f32 %v1577, %v1583
      %v1588 = vadd.f32 %v1584, %v1586
      %v1589 = vadd.f32 %v1585, %v1587
      %v1590 = vtanh.pop %v1588
      %v1591 = vtanh.pop %v1589
      %v1592 = vmul.f32 %v1575, %v1590
      %v1593 = vmul.f32 %v1581, %v1591
      %v1594 = vadd.f32 %v1438, %v1592
      %v1595 = vadd.f32 %v1439, %v1593
      %s1596 = smul.u32 4, 4
      %s1597 = smul.addr %s1596, 8
      %s1598 = scalar_lea.vmem [#allocation2], %s1597
      %v1599 = vld [vmem:[%s1598] sm:$0xff]
      %v1600 = vld [vmem:[%s1598 + $0x8] sm:$0xff]
      %v1601 = vld [vmem:[%s1598 + $0x10] sm:$0xff]
      %v1602 = vld [vmem:[%s1598 + $0x18] sm:$0xff]
      %v1603 = vld [vmem:[%s1598 + $0x20] sm:$0xff]
      %v1604 = vld [vmem:[%s1598 + $0x28] sm:$0xff]
      %v1605 = vld [vmem:[%s1598 + $0x30] sm:$0xff]
      %v1606 = vld [vmem:[%s1598 + $0x38] sm:$0xff]
      %v1607 = vpack.c.bf16 %v1593, %v1592
      %1608 = vmatprep.subr.bf16.mxu0 %v1233
      %1609 = vmatpush1.bf16.msra.mxu0 %v1232
      %1610 = vmatprep.subr.bf16.mxu0 %v1237
      %1611 = vmatpush1.bf16.msra.mxu0 %v1236
      %1612 = vmatprep.subr.bf16.mxu0 %v1241
      %1613 = vmatpush1.bf16.msra.mxu0 %v1240
      %1614 = vmatprep.subr.bf16.mxu0 %v1245
      %1615 = vmatpush1.bf16.msra.mxu0 %v1244
      %1616 = vmatprep.subr.bf16.mxu0 %v1249
      %1617 = vmatpush1.bf16.msra.mxu0 %v1248
      %1618 = vmatprep.subr.bf16.mxu0 %v1253
      %1619 = vmatpush1.bf16.msra.mxu0 %v1252
      %1620 = vmatprep.subr.bf16.mxu0 %v1257
      %1621 = vmatpush1.bf16.msra.mxu0 %v1256
      %1622 = vmatprep.subr.bf16.mxu0 %v1261
      %1623 = vmatpush1.bf16.msra.mxu0 %v1260
      %1624 = vmatprep.subr.bf16.mxu0 0
      %1625 = vmatpush1.bf16.msra.mxu0 0
      %1626 = vmatprep.subr.bf16.mxu0 0
      %1627 = vmatpush1.bf16.msra.mxu0 0
      %1628 = vmatprep.subr.bf16.mxu0 0
      %1629 = vmatpush1.bf16.msra.mxu0 0
      %1630 = vmatprep.subr.bf16.mxu0 0
      %1631 = vmatpush1.bf16.msra.mxu0 0
      %1632 = vmatprep.subr.bf16.mxu0 0
      %1633 = vmatpush1.bf16.msra.mxu0 0
      %1634 = vmatprep.subr.bf16.mxu0 0
      %1635 = vmatpush1.bf16.msra.mxu0 0
      %1636 = vmatprep.subr.bf16.mxu0 0
      %1637 = vmatpush1.bf16.msra.mxu0 0
      %1638 = vmatprep.subr.bf16.mxu0 0
      %1639 = vmatpush1.bf16.msra.mxu0 0
      %1640 = vmatprep.mubr.bf16.mxu0 0
      %1641 = vmatmul.mubr.bf16.gmra.mrb[0].mxu0 %v1607
      %v1642 = vpop.f32.mrb[0].mxu0
      %v1643 = vadd.f32 0.0, %v1642
      %v1644 = vpop.f32.mrb[0].mxu0
      %v1645 = vadd.f32 0.0, %v1644
      %v1646 = vpop.f32.mrb[0].mxu0
      %v1647 = vadd.f32 0.0, %v1646
      %v1648 = vpop.f32.mrb[0].mxu0
      %v1649 = vadd.f32 0.0, %v1648
      %1650 = vdwg.mxu0
      %1651 = vmatprep.subr.bf16.mxu0 %v1235
      %1652 = vmatpush1.bf16.msra.mxu0 %v1234
      %1653 = vmatprep.subr.bf16.mxu0 %v1239
      %1654 = vmatpush1.bf16.msra.mxu0 %v1238
      %1655 = vmatprep.subr.bf16.mxu0 %v1243
      %1656 = vmatpush1.bf16.msra.mxu0 %v1242
      %1657 = vmatprep.subr.bf16.mxu0 %v1247
      %1658 = vmatpush1.bf16.msra.mxu0 %v1246
      %1659 = vmatprep.subr.bf16.mxu0 %v1251
      %1660 = vmatpush1.bf16.msra.mxu0 %v1250
      %1661 = vmatprep.subr.bf16.mxu0 %v1255
      %1662 = vmatpush1.bf16.msra.mxu0 %v1254
      %1663 = vmatprep.subr.bf16.mxu0 %v1259
      %1664 = vmatpush1.bf16.msra.mxu0 %v1258
      %1665 = vmatprep.subr.bf16.mxu0 %v1263
      %1666 = vmatpush1.bf16.msra.mxu0 %v1262
      %1667 = vmatprep.subr.bf16.mxu0 0
      %1668 = vmatpush1.bf16.msra.mxu0 0
      %1669 = vmatprep.subr.bf16.mxu0 0
      %1670 = vmatpush1.bf16.msra.mxu0 0
      %1671 = vmatprep.subr.bf16.mxu0 0
      %1672 = vmatpush1.bf16.msra.mxu0 0
      %1673 = vmatprep.subr.bf16.mxu0 0
      %1674 = vmatpush1.bf16.msra.mxu0 0
      %1675 = vmatprep.subr.bf16.mxu0 0
      %1676 = vmatpush1.bf16.msra.mxu0 0
      %1677 = vmatprep.subr.bf16.mxu0 0
      %1678 = vmatpush1.bf16.msra.mxu0 0
      %1679 = vmatprep.subr.bf16.mxu0 0
      %1680 = vmatpush1.bf16.msra.mxu0 0
      %1681 = vmatprep.subr.bf16.mxu0 0
      %1682 = vmatpush1.bf16.msra.mxu0 0
      %1683 = vmatprep.mubr.bf16.mxu0 0
      %1684 = vmatmul.mubr.bf16.gmra.mrb[0].mxu0 %v1607
      %v1685 = vpop.f32.mrb[0].mxu0
      %v1686 = vadd.f32 0.0, %v1685
      %v1687 = vpop.f32.mrb[0].mxu0
      %v1688 = vadd.f32 0.0, %v1687
      %v1689 = vpop.f32.mrb[0].mxu0
      %v1690 = vadd.f32 0.0, %v1689
      %v1691 = vpop.f32.mrb[0].mxu0
      %v1692 = vadd.f32 0.0, %v1691
      %1693 = vdwg.mxu0
      %v1694 = vadd.f32 %v1599, %v1643
      %v1695 = vadd.f32 %v1600, %v1645
      %v1696 = vadd.f32 %v1601, %v1686
      %v1697 = vadd.f32 %v1602, %v1688
      %v1698 = vadd.f32 %v1603, %v1647
      %v1699 = vadd.f32 %v1604, %v1649
      %v1700 = vadd.f32 %v1605, %v1690
      %v1701 = vadd.f32 %v1606, %v1692
      %v1702 = vxor.u32 %v1694, 2147483648
      %v1703 = vxor.u32 %v1695, 2147483648
      %v1704 = vxor.u32 %v1696, 2147483648
      %v1705 = vxor.u32 %v1698, 2147483648
      %v1706 = vxor.u32 %v1699, 2147483648
      %v1707 = vxor.u32 %v1700, 2147483648
      %v1708 = vmul.f32 %v1702, 1.442695
      %v1709 = vpow.pop %v1708
      %v1710 = vmul.f32 %v1703, 1.442695
      %v1711 = vpow.pop %v1710
      %v1712 = vmul.f32 %v1704, 1.442695
      %v1713 = vpow.pop %v1712
      %v1714 = vmul.f32 %v1705, 1.442695
      %v1715 = vpow.pop %v1714
      %v1716 = vmul.f32 %v1706, 1.442695
      %v1717 = vpow.pop %v1716
      %v1718 = vmul.f32 %v1707, 1.442695
      %v1719 = vpow.pop %v1718
      %v1720 = vadd.f32 %v1709, 1.0
      %v1721 = vadd.f32 %v1711, 1.0
      %v1722 = vadd.f32 %v1713, 1.0
      %v1723 = vadd.f32 %v1715, 1.0
      %v1724 = vadd.f32 %v1717, 1.0
      %v1725 = vadd.f32 %v1719, 1.0
      %v1726 = vrcp.pop %v1720
      %v1727 = vmul.f32 1.0, %v1726
      %v1728 = vrcp.pop %v1721
      %v1729 = vmul.f32 1.0, %v1728
      %v1730 = vrcp.pop %v1722
      %v1731 = vmul.f32 1.0, %v1730
      %v1732 = vrcp.pop %v1723
      %v1733 = vmul.f32 1.0, %v1732
      %v1734 = vrcp.pop %v1724
      %v1735 = vmul.f32 1.0, %v1734
      %v1736 = vrcp.pop %v1725
      %v1737 = vmul.f32 1.0, %v1736
      %v1738 = vtanh.pop %v1697
      %v1739 = vtanh.pop %v1701
      %v1740 = vmul.f32 %v1729, %v1588
      %v1741 = vmul.f32 %v1735, %v1589
      %v1742 = vmul.f32 %v1727, %v1738
      %v1743 = vmul.f32 %v1733, %v1739
      %v1744 = vadd.f32 %v1740, %v1742
      %v1745 = vadd.f32 %v1741, %v1743
      %v1746 = vtanh.pop %v1744
      %v1747 = vtanh.pop %v1745
      %v1748 = vmul.f32 %v1731, %v1746
      %v1749 = vmul.f32 %v1737, %v1747
      %v1750 = vadd.f32 %v1594, %v1748
      %v1751 = vadd.f32 %v1595, %v1749
      %s1752 = smul.u32 6, 4
      %s1753 = smul.addr %s1752, 8
      %s1754 = scalar_lea.vmem [#allocation2], %s1753
      %v1755 = vld [vmem:[%s1754] sm:$0xff]
      %v1756 = vld [vmem:[%s1754 + $0x8] sm:$0xff]
      %v1757 = vld [vmem:[%s1754 + $0x10] sm:$0xff]
      %v1758 = vld [vmem:[%s1754 + $0x18] sm:$0xff]
      %v1759 = vld [vmem:[%s1754 + $0x20] sm:$0xff]
      %v1760 = vld [vmem:[%s1754 + $0x28] sm:$0xff]
      %v1761 = vld [vmem:[%s1754 + $0x30] sm:$0xff]
      %v1762 = vld [vmem:[%s1754 + $0x38] sm:$0xff]
      %v1763 = vpack.c.bf16 %v1749, %v1748
      %1764 = vmatprep.subr.bf16.mxu0 %v1233
      %1765 = vmatpush1.bf16.msra.mxu0 %v1232
      %1766 = vmatprep.subr.bf16.mxu0 %v1237
      %1767 = vmatpush1.bf16.msra.mxu0 %v1236
      %1768 = vmatprep.subr.bf16.mxu0 %v1241
      %1769 = vmatpush1.bf16.msra.mxu0 %v1240
      %1770 = vmatprep.subr.bf16.mxu0 %v1245
      %1771 = vmatpush1.bf16.msra.mxu0 %v1244
      %1772 = vmatprep.subr.bf16.mxu0 %v1249
      %1773 = vmatpush1.bf16.msra.mxu0 %v1248
      %1774 = vmatprep.subr.bf16.mxu0 %v1253
      %1775 = vmatpush1.bf16.msra.mxu0 %v1252
      %1776 = vmatprep.subr.bf16.mxu0 %v1257
      %1777 = vmatpush1.bf16.msra.mxu0 %v1256
      %1778 = vmatprep.subr.bf16.mxu0 %v1261
      %1779 = vmatpush1.bf16.msra.mxu0 %v1260
      %1780 = vmatprep.subr.bf16.mxu0 0
      %1781 = vmatpush1.bf16.msra.mxu0 0
      %1782 = vmatprep.subr.bf16.mxu0 0
      %1783 = vmatpush1.bf16.msra.mxu0 0
      %1784 = vmatprep.subr.bf16.mxu0 0
      %1785 = vmatpush1.bf16.msra.mxu0 0
      %1786 = vmatprep.subr.bf16.mxu0 0
      %1787 = vmatpush1.bf16.msra.mxu0 0
      %1788 = vmatprep.subr.bf16.mxu0 0
      %1789 = vmatpush1.bf16.msra.mxu0 0
      %1790 = vmatprep.subr.bf16.mxu0 0
      %1791 = vmatpush1.bf16.msra.mxu0 0
      %1792 = vmatprep.subr.bf16.mxu0 0
      %1793 = vmatpush1.bf16.msra.mxu0 0
      %1794 = vmatprep.subr.bf16.mxu0 0
      %1795 = vmatpush1.bf16.msra.mxu0 0
      %1796 = vmatprep.mubr.bf16.mxu0 0
      %1797 = vmatmul.mubr.bf16.gmra.mrb[0].mxu0 %v1763
      %v1798 = vpop.f32.mrb[0].mxu0
      %v1799 = vadd.f32 0.0, %v1798
      %v1800 = vpop.f32.mrb[0].mxu0
      %v1801 = vadd.f32 0.0, %v1800
      %v1802 = vpop.f32.mrb[0].mxu0
      %v1803 = vadd.f32 0.0, %v1802
      %v1804 = vpop.f32.mrb[0].mxu0
      %v1805 = vadd.f32 0.0, %v1804
      %1806 = vdwg.mxu0
      %1807 = vmatprep.subr.bf16.mxu0 %v1235
      %1808 = vmatpush1.bf16.msra.mxu0 %v1234
      %1809 = vmatprep.subr.bf16.mxu0 %v1239
      %1810 = vmatpush1.bf16.msra.mxu0 %v1238
      %1811 = vmatprep.subr.bf16.mxu0 %v1243
      %1812 = vmatpush1.bf16.msra.mxu0 %v1242
      %1813 = vmatprep.subr.bf16.mxu0 %v1247
      %1814 = vmatpush1.bf16.msra.mxu0 %v1246
      %1815 = vmatprep.subr.bf16.mxu0 %v1251
      %1816 = vmatpush1.bf16.msra.mxu0 %v1250
      %1817 = vmatprep.subr.bf16.mxu0 %v1255
      %1818 = vmatpush1.bf16.msra.mxu0 %v1254
      %1819 = vmatprep.subr.bf16.mxu0 %v1259
      %1820 = vmatpush1.bf16.msra.mxu0 %v1258
      %1821 = vmatprep.subr.bf16.mxu0 %v1263
      %1822 = vmatpush1.bf16.msra.mxu0 %v1262
      %1823 = vmatprep.subr.bf16.mxu0 0
      %1824 = vmatpush1.bf16.msra.mxu0 0
      %1825 = vmatprep.subr.bf16.mxu0 0
      %1826 = vmatpush1.bf16.msra.mxu0 0
      %1827 = vmatprep.subr.bf16.mxu0 0
      %1828 = vmatpush1.bf16.msra.mxu0 0
      %1829 = vmatprep.subr.bf16.mxu0 0
      %1830 = vmatpush1.bf16.msra.mxu0 0
      %1831 = vmatprep.subr.bf16.mxu0 0
      %1832 = vmatpush1.bf16.msra.mxu0 0
      %1833 = vmatprep.subr.bf16.mxu0 0
      %1834 = vmatpush1.bf16.msra.mxu0 0
      %1835 = vmatprep.subr.bf16.mxu0 0
      %1836 = vmatpush1.bf16.msra.mxu0 0
      %1837 = vmatprep.subr.bf16.mxu0 0
      %1838 = vmatpush1.bf16.msra.mxu0 0
      %1839 = vmatprep.mubr.bf16.mxu0 0
      %1840 = vmatmul.mubr.bf16.gmra.mrb[0].mxu0 %v1763
      %v1841 = vpop.f32.mrb[0].mxu0
      %v1842 = vadd.f32 0.0, %v1841
      %v1843 = vpop.f32.mrb[0].mxu0
      %v1844 = vadd.f32 0.0, %v1843
      %v1845 = vpop.f32.mrb[0].mxu0
      %v1846 = vadd.f32 0.0, %v1845
      %v1847 = vpop.f32.mrb[0].mxu0
      %v1848 = vadd.f32 0.0, %v1847
      %1849 = vdwg.mxu0
      %v1850 = vadd.f32 %v1755, %v1799
      %v1851 = vadd.f32 %v1756, %v1801
      %v1852 = vadd.f32 %v1757, %v1842
      %v1853 = vadd.f32 %v1758, %v1844
      %v1854 = vadd.f32 %v1759, %v1803
      %v1855 = vadd.f32 %v1760, %v1805
      %v1856 = vadd.f32 %v1761, %v1846
      %v1857 = vadd.f32 %v1762, %v1848
      %v1858 = vxor.u32 %v1850, 2147483648
      %v1859 = vxor.u32 %v1851, 2147483648
      %v1860 = vxor.u32 %v1852, 2147483648
      %v1861 = vxor.u32 %v1854, 2147483648
      %v1862 = vxor.u32 %v1855, 2147483648
      %v1863 = vxor.u32 %v1856, 2147483648
      %v1864 = vmul.f32 %v1858, 1.442695
      %v1865 = vpow.pop %v1864
      %v1866 = vmul.f32 %v1859, 1.442695
      %v1867 = vpow.pop %v1866
      %v1868 = vmul.f32 %v1860, 1.442695
      %v1869 = vpow.pop %v1868
      %v1870 = vmul.f32 %v1861, 1.442695
      %v1871 = vpow.pop %v1870
      %v1872 = vmul.f32 %v1862, 1.442695
      %v1873 = vpow.pop %v1872
      %v1874 = vmul.f32 %v1863, 1.442695
      %v1875 = vpow.pop %v1874
      %v1876 = vadd.f32 %v1865, 1.0
      %v1877 = vadd.f32 %v1867, 1.0
      %v1878 = vadd.f32 %v1869, 1.0
      %v1879 = vadd.f32 %v1871, 1.0
      %v1880 = vadd.f32 %v1873, 1.0
      %v1881 = vadd.f32 %v1875, 1.0
      %v1882 = vrcp.pop %v1876
      %v1883 = vmul.f32 1.0, %v1882
      %v1884 = vrcp.pop %v1877
      %v1885 = vmul.f32 1.0, %v1884
      %v1886 = vrcp.pop %v1878
      %v1887 = vmul.f32 1.0, %v1886
      %v1888 = vrcp.pop %v1879
      %v1889 = vmul.f32 1.0, %v1888
      %v1890 = vrcp.pop %v1880
      %v1891 = vmul.f32 1.0, %v1890
      %v1892 = vrcp.pop %v1881
      %v1893 = vmul.f32 1.0, %v1892
      %v1894 = vtanh.pop %v1853
      %v1895 = vtanh.pop %v1857
      %v1896 = vmul.f32 %v1885, %v1744
      %v1897 = vmul.f32 %v1891, %v1745
      %v1898 = vmul.f32 %v1883, %v1894
      %v1899 = vmul.f32 %v1889, %v1895
      %v1900 = vadd.f32 %v1896, %v1898
      %v1901 = vadd.f32 %v1897, %v1899
      %v1902 = vtanh.pop %v1900
      %v1903 = vtanh.pop %v1901
      %v1904 = vmul.f32 %v1887, %v1902
      %v1905 = vmul.f32 %v1893, %v1903
      %v1906 = vadd.f32 %v1750, %v1904
      %v1907 = vadd.f32 %v1751, %v1905
      %1908 = vst [vmem:[#allocation3] sm:$0xff] %v1904
      %1909 = vst [vmem:[#allocation3 + $0x8] sm:$0xff] %v1905
      %1910 = vst [vmem:[#allocation4] sm:$0xff] %v1900
      %1911 = vst [vmem:[#allocation4 + $0x8] sm:$0xff] %v1901
      %1912 = vst [vmem:[#allocation5] sm:$0xff] %v1906
      %1913 = vst [vmem:[#allocation5 + $0x8] sm:$0xff] %v1907
      %p1914 = scmp.eq.s32.totalorder %s36, 1
      // Predicated region
      $region97: #{forward.1} parent=91 // pred_check
        %p1915 = pneg %p1914
      $region98: #{forward.1} parent=91 // pred_check_branch
        %1917 = sbr.rel (%p1915) target = $region100
      $region99: #{forward.1} parent=91 // pred_region
        %v1918 = vld [vmem:[#allocation5] sm:$0xff]
        %v1919 = vld [vmem:[#allocation5 + $0x8] sm:$0xff]
        %v1920 = vmul.f32 %v1918, 0.125
        %v1921 = vmul.f32 %v1919, 0.125
        %v1922 = vpack.c.bf16 %v1921, %v1920
        %v1923 = vld [vmem:[%s4] sm:$0xf]
        %v1924 = vld [vmem:[%s4 + $0x4] sm:$0xf]
        %v1925 = vld [vmem:[%s4 + $0x8] sm:$0xf]
        %v1926 = vld [vmem:[%s4 + $0xc] sm:$0xf]
        %v1927 = vld [vmem:[%s4 + $0x10] sm:$0xf]
        %v1928 = vld [vmem:[%s4 + $0x14] sm:$0xf]
        %v1929 = vld [vmem:[%s4 + $0x18] sm:$0xf]
        %v1930 = vld [vmem:[%s4 + $0x1c] sm:$0xf]
        %v1931 = vld [vmem:[%s4 + $0x20] sm:$0xf]
        %v1932 = vld [vmem:[%s4 + $0x24] sm:$0xf]
        %v1933 = vld [vmem:[%s4 + $0x28] sm:$0xf]
        %v1934 = vld [vmem:[%s4 + $0x2c] sm:$0xf]
        %v1935 = vld [vmem:[%s4 + $0x30] sm:$0xf]
        %v1936 = vld [vmem:[%s4 + $0x34] sm:$0xf]
        %v1937 = vld [vmem:[%s4 + $0x38] sm:$0xf]
        %v1938 = vld [vmem:[%s4 + $0x3c] sm:$0xf]
        %v1939 = vld [vmem:[%s5] sm:$0x1]
        %v1941 = vlaneseq
        %v1942 = vshrl.u32 %v1941, 7
        %v1943 = vsub.s32 0, %v1942
        %v1944 = vrot.slane %v1939, %v1943
        %v1962 = vunpack.c.l.b16 %v1923
        %v1963 = vunpack.c.l.b16 %v1924
        %v1964 = vunpack.c.l.b16 %v1925
        %v1965 = vunpack.c.l.b16 %v1926
        %v1966 = vunpack.c.l.b16 %v1927
        %v1967 = vunpack.c.l.b16 %v1928
        %v1968 = vunpack.c.l.b16 %v1929
        %v1969 = vunpack.c.l.b16 %v1930
        %v1970 = vunpack.c.l.b16 %v1931
        %v1971 = vunpack.c.l.b16 %v1932
        %v1972 = vunpack.c.l.b16 %v1933
        %v1973 = vunpack.c.l.b16 %v1934
        %v1974 = vunpack.c.l.b16 %v1935
        %v1975 = vunpack.c.l.b16 %v1936
        %v1976 = vunpack.c.l.b16 %v1937
        %v1977 = vunpack.c.l.b16 %v1938
        %v1978 = vpack.c.b16 %v1963, %v1962
        %v1979 = vpack.c.b16 %v1965, %v1964
        %v1980 = vpack.c.b16 %v1967, %v1966
        %v1981 = vpack.c.b16 %v1969, %v1968
        %v1982 = vpack.c.b16 %v1971, %v1970
        %v1983 = vpack.c.b16 %v1973, %v1972
        %v1984 = vpack.c.b16 %v1975, %v1974
        %v1985 = vpack.c.b16 %v1977, %v1976
        %1994 = vmatprep.subr.bf16.mxu0 0
        %1995 = vmatpush1.bf16.msra.mxu0 %v1978
        %1996 = vmatprep.subr.bf16.mxu0 0
        %1997 = vmatpush1.bf16.msra.mxu0 %v1979
        %1998 = vmatprep.subr.bf16.mxu0 0
        %1999 = vmatpush1.bf16.msra.mxu0 %v1980
        %2000 = vmatprep.subr.bf16.mxu0 0
        %2001 = vmatpush1.bf16.msra.mxu0 %v1981
        %2002 = vmatprep.subr.bf16.mxu0 0
        %2003 = vmatpush1.bf16.msra.mxu0 %v1982
        %2004 = vmatprep.subr.bf16.mxu0 0
        %2005 = vmatpush1.bf16.msra.mxu0 %v1983
        %2006 = vmatprep.subr.bf16.mxu0 0
        %2007 = vmatpush1.bf16.msra.mxu0 %v1984
        %2008 = vmatprep.subr.bf16.mxu0 0
        %2009 = vmatpush1.bf16.msra.mxu0 %v1985
        %2010 = vmatprep.subr.bf16.mxu0 0
        %2011 = vmatpush1.bf16.msra.mxu0 0
        %2012 = vmatprep.subr.bf16.mxu0 0
        %2013 = vmatpush1.bf16.msra.mxu0 0
        %2014 = vmatprep.subr.bf16.mxu0 0
        %2015 = vmatpush1.bf16.msra.mxu0 0
        %2016 = vmatprep.subr.bf16.mxu0 0
        %2017 = vmatpush1.bf16.msra.mxu0 0
        %2018 = vmatprep.subr.bf16.mxu0 0
        %2019 = vmatpush1.bf16.msra.mxu0 0
        %2020 = vmatprep.subr.bf16.mxu0 0
        %2021 = vmatpush1.bf16.msra.mxu0 0
        %2022 = vmatprep.subr.bf16.mxu0 0
        %2023 = vmatpush1.bf16.msra.mxu0 0
        %2024 = vmatprep.subr.bf16.mxu0 0
        %2025 = vmatpush1.bf16.msra.mxu0 0
        %2026 = vmatprep.mubr.bf16.mxu0 0
        %2027 = vmatmul.mubr.bf16.gmra.mrb[0].mxu0 %v1922
        %v2028 = vpop.f32.mrb[0].mxu0
        %v2029 = vadd.f32 %v1944, %v2028
        %v2030 = vpop.f32.mrb[0].mxu0
        %v2031 = vpop.f32.mrb[0].mxu0
        %v2032 = vadd.f32 %v1944, %v2031
        %v2033 = vpop.f32.mrb[0].mxu0
        %2034 = vdwg.mxu0
        %v2035 = vmax.f32 %v2029, 0.0
        %v2036 = vmax.f32 %v2032, 0.0
        %v2037 = vpack.c.bf16 %v2036, %v2035
        %v2038 = vld [vmem:[%s6] sm:$0xf]
        %v2039 = vld [vmem:[%s6 + $0x4] sm:$0xf]
        %v2040 = vld [vmem:[%s6 + $0x8] sm:$0xf]
        %v2041 = vld [vmem:[%s6 + $0xc] sm:$0xf]
        %v2042 = vld [vmem:[%s6 + $0x10] sm:$0xf]
        %v2043 = vld [vmem:[%s6 + $0x14] sm:$0xf]
        %v2044 = vld [vmem:[%s6 + $0x18] sm:$0xf]
        %v2045 = vld [vmem:[%s6 + $0x1c] sm:$0xf]
        %v2046 = vld [vmem:[%s6 + $0x20] sm:$0xf]
        %v2047 = vld [vmem:[%s6 + $0x24] sm:$0xf]
        %v2048 = vld [vmem:[%s6 + $0x28] sm:$0xf]
        %v2049 = vld [vmem:[%s6 + $0x2c] sm:$0xf]
        %v2050 = vld [vmem:[%s6 + $0x30] sm:$0xf]
        %v2051 = vld [vmem:[%s6 + $0x34] sm:$0xf]
        %v2052 = vld [vmem:[%s6 + $0x38] sm:$0xf]
        %v2053 = vld [vmem:[%s6 + $0x3c] sm:$0xf]
        %v2054 = vld [vmem:[%s7] sm:$0x1]
        %v2056 = vlaneseq
        %v2057 = vshrl.u32 %v2056, 7
        %v2058 = vsub.s32 0, %v2057
        %v2059 = vrot.slane %v2054, %v2058
        %v2077 = vunpack.c.l.b16 %v2038
        %v2078 = vunpack.c.l.b16 %v2039
        %v2079 = vunpack.c.l.b16 %v2040
        %v2080 = vunpack.c.l.b16 %v2041
        %v2081 = vunpack.c.l.b16 %v2042
        %v2082 = vunpack.c.l.b16 %v2043
        %v2083 = vunpack.c.l.b16 %v2044
        %v2084 = vunpack.c.l.b16 %v2045
        %v2085 = vunpack.c.l.b16 %v2046
        %v2086 = vunpack.c.l.b16 %v2047
        %v2087 = vunpack.c.l.b16 %v2048
        %v2088 = vunpack.c.l.b16 %v2049
        %v2089 = vunpack.c.l.b16 %v2050
        %v2090 = vunpack.c.l.b16 %v2051
        %v2091 = vunpack.c.l.b16 %v2052
        %v2092 = vunpack.c.l.b16 %v2053
        %v2093 = vpack.c.b16 %v2078, %v2077
        %v2094 = vpack.c.b16 %v2080, %v2079
        %v2095 = vpack.c.b16 %v2082, %v2081
        %v2096 = vpack.c.b16 %v2084, %v2083
        %v2097 = vpack.c.b16 %v2086, %v2085
        %v2098 = vpack.c.b16 %v2088, %v2087
        %v2099 = vpack.c.b16 %v2090, %v2089
        %v2100 = vpack.c.b16 %v2092, %v2091
        %2109 = vmatprep.subr.bf16.mxu0 0
        %2110 = vmatpush1.bf16.msra.mxu0 %v2093
        %2111 = vmatprep.subr.bf16.mxu0 0
        %2112 = vmatpush1.bf16.msra.mxu0 %v2094
        %2113 = vmatprep.subr.bf16.mxu0 0
        %2114 = vmatpush1.bf16.msra.mxu0 %v2095
        %2115 = vmatprep.subr.bf16.mxu0 0
        %2116 = vmatpush1.bf16.msra.mxu0 %v2096
        %2117 = vmatprep.subr.bf16.mxu0 0
        %2118 = vmatpush1.bf16.msra.mxu0 %v2097
        %2119 = vmatprep.subr.bf16.mxu0 0
        %2120 = vmatpush1.bf16.msra.mxu0 %v2098
        %2121 = vmatprep.subr.bf16.mxu0 0
        %2122 = vmatpush1.bf16.msra.mxu0 %v2099
        %2123 = vmatprep.subr.bf16.mxu0 0
        %2124 = vmatpush1.bf16.msra.mxu0 %v2100
        %2125 = vmatprep.subr.bf16.mxu0 0
        %2126 = vmatpush1.bf16.msra.mxu0 0
        %2127 = vmatprep.subr.bf16.mxu0 0
        %2128 = vmatpush1.bf16.msra.mxu0 0
        %2129 = vmatprep.subr.bf16.mxu0 0
        %2130 = vmatpush1.bf16.msra.mxu0 0
        %2131 = vmatprep.subr.bf16.mxu0 0
        %2132 = vmatpush1.bf16.msra.mxu0 0
        %2133 = vmatprep.subr.bf16.mxu0 0
        %2134 = vmatpush1.bf16.msra.mxu0 0
        %2135 = vmatprep.subr.bf16.mxu0 0
        %2136 = vmatpush1.bf16.msra.mxu0 0
        %2137 = vmatprep.subr.bf16.mxu0 0
        %2138 = vmatpush1.bf16.msra.mxu0 0
        %2139 = vmatprep.subr.bf16.mxu0 0
        %2140 = vmatpush1.bf16.msra.mxu0 0
        %2141 = vmatprep.mubr.bf16.mxu0 0
        %2142 = vmatmul.mubr.bf16.gmra.mrb[0].mxu0 %v2037
        %v2143 = vpop.f32.mrb[0].mxu0
        %v2144 = vadd.f32 %v2059, %v2143
        %v2145 = vpop.f32.mrb[0].mxu0
        %v2146 = vpop.f32.mrb[0].mxu0
        %v2147 = vadd.f32 %v2059, %v2146
        %v2148 = vpop.f32.mrb[0].mxu0
        %2149 = vdwg.mxu0
        %v2150 = vmax.f32 %v2144, 0.0
        %v2151 = vmax.f32 %v2147, 0.0
        %2152 = vst [vmem:[%s643] sm:$0xff] %v2150
        %2153 = vst [vmem:[%s643 + $0x8] sm:$0xff] %v2151
        %v2154 = vld [vmem:[%s8] sm:$0xff]
        %v2155 = vld [vmem:[%s8 + $0x8] sm:$0xff]
        %v2156 = vld [vmem:[%s8 + $0x10] sm:$0xff]
        %v2157 = vld [vmem:[%s8 + $0x18] sm:$0xff]
        %v2158 = vld [vmem:[%s8 + $0x20] sm:$0xff]
        %v2159 = vld [vmem:[%s8 + $0x28] sm:$0xff]
        %v2160 = vld [vmem:[%s8 + $0x30] sm:$0xff]
        %v2161 = vld [vmem:[%s8 + $0x38] sm:$0xff]
        %v2162 = vld [vmem:[%s8 + $0x40] sm:$0xff]
        %v2163 = vld [vmem:[%s8 + $0x48] sm:$0xff]
        %v2164 = vld [vmem:[%s8 + $0x50] sm:$0xff]
        %v2165 = vld [vmem:[%s8 + $0x58] sm:$0xff]
        %v2166 = vld [vmem:[%s8 + $0x60] sm:$0xff]
        %v2167 = vld [vmem:[%s8 + $0x68] sm:$0xff]
        %v2168 = vld [vmem:[%s8 + $0x70] sm:$0xff]
        %v2169 = vld [vmem:[%s8 + $0x78] sm:$0xff]
        %v2170 = vld [vmem:[%s8 + $0x80] sm:$0xff]
        %v2171 = vld [vmem:[%s8 + $0x88] sm:$0xff]
        %v2172 = vld [vmem:[%s8 + $0x90] sm:$0xff]
        %v2173 = vld [vmem:[%s8 + $0x98] sm:$0xff]
        %v2174 = vld [vmem:[%s8 + $0xa0] sm:$0xff]
        %v2175 = vld [vmem:[%s8 + $0xa8] sm:$0xff]
        %v2176 = vld [vmem:[%s8 + $0xb0] sm:$0xff]
        %v2177 = vld [vmem:[%s8 + $0xb8] sm:$0xff]
        %v2178 = vld [vmem:[%s8 + $0xc0] sm:$0xff]
        %v2179 = vld [vmem:[%s8 + $0xc8] sm:$0xff]
        %v2180 = vld [vmem:[%s8 + $0xd0] sm:$0xff]
        %v2181 = vld [vmem:[%s8 + $0xd8] sm:$0xff]
        %v2182 = vld [vmem:[%s8 + $0xe0] sm:$0xff]
        %v2183 = vld [vmem:[%s8 + $0xe8] sm:$0xff]
        %v2184 = vld [vmem:[%s8 + $0xf0] sm:$0xff]
        %v2185 = vld [vmem:[%s8 + $0xf8] sm:$0xff]
        %v2186 = vld [vmem:[%s9] sm:$0xf]
        %v2188 = vlaneseq
        %v2189 = vshrl.u32 %v2188, 7
        %v2190 = vsub.s32 0, %v2189
        %v2191 = vrot.slane %v2186, %v2190
        %v2192 = vlaneseq
        %v2193 = vshrl.u32 %v2192, 7
        %v2194 = vsub.s32 1, %v2193
        %v2195 = vrot.slane %v2186, %v2194
        %v2196 = vlaneseq
        %v2197 = vshrl.u32 %v2196, 7
        %v2198 = vsub.s32 2, %v2197
        %v2199 = vrot.slane %v2186, %v2198
        %v2200 = vlaneseq
        %v2201 = vshrl.u32 %v2200, 7
        %v2202 = vsub.s32 3, %v2201
        %v2203 = vrot.slane %v2186, %v2202
        %v2240 = vunpack.c.l.b16 %v2154
        %v2241 = vunpack.c.h.b16 %v2154
        %v2242 = vunpack.c.l.b16 %v2155
        %v2243 = vunpack.c.h.b16 %v2155
        %v2244 = vunpack.c.l.b16 %v2156
        %v2245 = vunpack.c.h.b16 %v2156
        %v2246 = vunpack.c.l.b16 %v2157
        %v2247 = vunpack.c.h.b16 %v2157
        %v2248 = vunpack.c.l.b16 %v2158
        %v2249 = vunpack.c.h.b16 %v2158
        %v2250 = vunpack.c.l.b16 %v2159
        %v2251 = vunpack.c.h.b16 %v2159
        %v2252 = vunpack.c.l.b16 %v2160
        %v2253 = vunpack.c.h.b16 %v2160
        %v2254 = vunpack.c.l.b16 %v2161
        %v2255 = vunpack.c.h.b16 %v2161
        %v2256 = vunpack.c.l.b16 %v2162
        %v2257 = vunpack.c.h.b16 %v2162
        %v2258 = vunpack.c.l.b16 %v2163
        %v2259 = vunpack.c.h.b16 %v2163
        %v2260 = vunpack.c.l.b16 %v2164
        %v2261 = vunpack.c.h.b16 %v2164
        %v2262 = vunpack.c.l.b16 %v2165
        %v2263 = vunpack.c.h.b16 %v2165
        %v2264 = vunpack.c.l.b16 %v2166
        %v2265 = vunpack.c.h.b16 %v2166
        %v2266 = vunpack.c.l.b16 %v2167
        %v2267 = vunpack.c.h.b16 %v2167
        %v2268 = vunpack.c.l.b16 %v2168
        %v2269 = vunpack.c.h.b16 %v2168
        %v2270 = vunpack.c.l.b16 %v2169
        %v2271 = vunpack.c.h.b16 %v2169
        %v2272 = vunpack.c.l.b16 %v2170
        %v2273 = vunpack.c.h.b16 %v2170
        %v2274 = vunpack.c.l.b16 %v2171
        %v2275 = vunpack.c.h.b16 %v2171
        %v2276 = vunpack.c.l.b16 %v2172
        %v2277 = vunpack.c.h.b16 %v2172
        %v2278 = vunpack.c.l.b16 %v2173
        %v2279 = vunpack.c.h.b16 %v2173
        %v2280 = vunpack.c.l.b16 %v2174
        %v2281 = vunpack.c.h.b16 %v2174
        %v2282 = vunpack.c.l.b16 %v2175
        %v2283 = vunpack.c.h.b16 %v2175
        %v2284 = vunpack.c.l.b16 %v2176
        %v2285 = vunpack.c.h.b16 %v2176
        %v2286 = vunpack.c.l.b16 %v2177
        %v2287 = vunpack.c.h.b16 %v2177
        %v2288 = vunpack.c.l.b16 %v2178
        %v2289 = vunpack.c.h.b16 %v2178
        %v2290 = vunpack.c.l.b16 %v2179
        %v2291 = vunpack.c.h.b16 %v2179
        %v2292 = vunpack.c.l.b16 %v2180
        %v2293 = vunpack.c.h.b16 %v2180
        %v2294 = vunpack.c.l.b16 %v2181
        %v2295 = vunpack.c.h.b16 %v2181
        %v2296 = vunpack.c.l.b16 %v2182
        %v2297 = vunpack.c.h.b16 %v2182
        %v2298 = vunpack.c.l.b16 %v2183
        %v2299 = vunpack.c.h.b16 %v2183
        %v2300 = vunpack.c.l.b16 %v2184
        %v2301 = vunpack.c.h.b16 %v2184
        %v2302 = vunpack.c.l.b16 %v2185
        %v2303 = vunpack.c.h.b16 %v2185
        %v2304 = vpack.c.b16 %v2244, %v2240
        %v2305 = vpack.c.b16 %v2245, %v2241
        %v2306 = vpack.c.b16 %v2246, %v2242
        %v2307 = vpack.c.b16 %v2247, %v2243
        %v2308 = vpack.c.b16 %v2252, %v2248
        %v2309 = vpack.c.b16 %v2253, %v2249
        %v2310 = vpack.c.b16 %v2254, %v2250
        %v2311 = vpack.c.b16 %v2255, %v2251
        %v2312 = vpack.c.b16 %v2260, %v2256
        %v2313 = vpack.c.b16 %v2261, %v2257
        %v2314 = vpack.c.b16 %v2262, %v2258
        %v2315 = vpack.c.b16 %v2263, %v2259
        %v2316 = vpack.c.b16 %v2268, %v2264
        %v2317 = vpack.c.b16 %v2269, %v2265
        %v2318 = vpack.c.b16 %v2270, %v2266
        %v2319 = vpack.c.b16 %v2271, %v2267
        %v2320 = vpack.c.b16 %v2276, %v2272
        %v2321 = vpack.c.b16 %v2277, %v2273
        %v2322 = vpack.c.b16 %v2278, %v2274
        %v2323 = vpack.c.b16 %v2279, %v2275
        %v2324 = vpack.c.b16 %v2284, %v2280
        %v2325 = vpack.c.b16 %v2285, %v2281
        %v2326 = vpack.c.b16 %v2286, %v2282
        %v2327 = vpack.c.b16 %v2287, %v2283
        %v2328 = vpack.c.b16 %v2292, %v2288
        %v2329 = vpack.c.b16 %v2293, %v2289
        %v2330 = vpack.c.b16 %v2294, %v2290
        %v2331 = vpack.c.b16 %v2295, %v2291
        %v2332 = vpack.c.b16 %v2300, %v2296
        %v2333 = vpack.c.b16 %v2301, %v2297
        %v2334 = vpack.c.b16 %v2302, %v2298
        %v2335 = vpack.c.b16 %v2303, %v2299
        %2368 = vmatprep.subr.bf16.mxu0 %v2305
        %2369 = vmatpush1.bf16.msra.mxu0 %v2304
        %2370 = vmatprep.subr.bf16.mxu0 %v2309
        %2371 = vmatpush1.bf16.msra.mxu0 %v2308
        %2372 = vmatprep.subr.bf16.mxu0 %v2313
        %2373 = vmatpush1.bf16.msra.mxu0 %v2312
        %2374 = vmatprep.subr.bf16.mxu0 %v2317
        %2375 = vmatpush1.bf16.msra.mxu0 %v2316
        %2376 = vmatprep.subr.bf16.mxu0 %v2321
        %2377 = vmatpush1.bf16.msra.mxu0 %v2320
        %2378 = vmatprep.subr.bf16.mxu0 %v2325
        %2379 = vmatpush1.bf16.msra.mxu0 %v2324
        %2380 = vmatprep.subr.bf16.mxu0 %v2329
        %2381 = vmatpush1.bf16.msra.mxu0 %v2328
        %2382 = vmatprep.subr.bf16.mxu0 %v2333
        %2383 = vmatpush1.bf16.msra.mxu0 %v2332
        %2384 = vmatprep.subr.bf16.mxu0 0
        %2385 = vmatpush1.bf16.msra.mxu0 0
        %2386 = vmatprep.subr.bf16.mxu0 0
        %2387 = vmatpush1.bf16.msra.mxu0 0
        %2388 = vmatprep.subr.bf16.mxu0 0
        %2389 = vmatpush1.bf16.msra.mxu0 0
        %2390 = vmatprep.subr.bf16.mxu0 0
        %2391 = vmatpush1.bf16.msra.mxu0 0
        %2392 = vmatprep.subr.bf16.mxu0 0
        %2393 = vmatpush1.bf16.msra.mxu0 0
        %2394 = vmatprep.subr.bf16.mxu0 0
        %2395 = vmatpush1.bf16.msra.mxu0 0
        %2396 = vmatprep.subr.bf16.mxu0 0
        %2397 = vmatpush1.bf16.msra.mxu0 0
        %2398 = vmatprep.subr.bf16.mxu0 0
        %2399 = vmatpush1.bf16.msra.mxu0 0
        %2400 = vmatprep.mubr.bf16.mxu0 0
        %2401 = vmatmul.mubr.bf16.gmra.mrb[0].mxu0 %v1922
        %v2402 = vpop.f32.mrb[0].mxu0
        %v2403 = vadd.f32 %v2191, %v2402
        %v2404 = vpop.f32.mrb[0].mxu0
        %v2405 = vadd.f32 %v2195, %v2404
        %v2406 = vpop.f32.mrb[0].mxu0
        %v2407 = vadd.f32 %v2191, %v2406
        %v2408 = vpop.f32.mrb[0].mxu0
        %v2409 = vadd.f32 %v2195, %v2408
        %2410 = vdwg.mxu0
        %2411 = vmatprep.subr.bf16.mxu0 %v2307
        %2412 = vmatpush1.bf16.msra.mxu0 %v2306
        %2413 = vmatprep.subr.bf16.mxu0 %v2311
        %2414 = vmatpush1.bf16.msra.mxu0 %v2310
        %2415 = vmatprep.subr.bf16.mxu0 %v2315
        %2416 = vmatpush1.bf16.msra.mxu0 %v2314
        %2417 = vmatprep.subr.bf16.mxu0 %v2319
        %2418 = vmatpush1.bf16.msra.mxu0 %v2318
        %2419 = vmatprep.subr.bf16.mxu0 %v2323
        %2420 = vmatpush1.bf16.msra.mxu0 %v2322
        %2421 = vmatprep.subr.bf16.mxu0 %v2327
        %2422 = vmatpush1.bf16.msra.mxu0 %v2326
        %2423 = vmatprep.subr.bf16.mxu0 %v2331
        %2424 = vmatpush1.bf16.msra.mxu0 %v2330
        %2425 = vmatprep.subr.bf16.mxu0 %v2335
        %2426 = vmatpush1.bf16.msra.mxu0 %v2334
        %2427 = vmatprep.subr.bf16.mxu0 0
        %2428 = vmatpush1.bf16.msra.mxu0 0
        %2429 = vmatprep.subr.bf16.mxu0 0
        %2430 = vmatpush1.bf16.msra.mxu0 0
        %2431 = vmatprep.subr.bf16.mxu0 0
        %2432 = vmatpush1.bf16.msra.mxu0 0
        %2433 = vmatprep.subr.bf16.mxu0 0
        %2434 = vmatpush1.bf16.msra.mxu0 0
        %2435 = vmatprep.subr.bf16.mxu0 0
        %2436 = vmatpush1.bf16.msra.mxu0 0
        %2437 = vmatprep.subr.bf16.mxu0 0
        %2438 = vmatpush1.bf16.msra.mxu0 0
        %2439 = vmatprep.subr.bf16.mxu0 0
        %2440 = vmatpush1.bf16.msra.mxu0 0
        %2441 = vmatprep.subr.bf16.mxu0 0
        %2442 = vmatpush1.bf16.msra.mxu0 0
        %2443 = vmatprep.mubr.bf16.mxu0 0
        %2444 = vmatmul.mubr.bf16.gmra.mrb[0].mxu0 %v1922
        %v2445 = vpop.f32.mrb[0].mxu0
        %v2446 = vadd.f32 %v2199, %v2445
        %v2447 = vpop.f32.mrb[0].mxu0
        %v2448 = vadd.f32 %v2203, %v2447
        %v2449 = vpop.f32.mrb[0].mxu0
        %v2450 = vadd.f32 %v2199, %v2449
        %v2451 = vpop.f32.mrb[0].mxu0
        %v2452 = vadd.f32 %v2203, %v2451
        %2453 = vdwg.mxu0
        %v2454 = vld [vmem:[%s10] sm:$0xf]
        %v2455 = vld [vmem:[%s11] sm:$0xf]
        %v2456 = vadd.f32 %v2403, %v2405
        %v2457 = vadd.f32 %v2456, %v2446
        %v2458 = vadd.f32 %v2457, %v2448
        %2459 = vadd.xlane.f32.xlu0 %v2458
        %v2460 = vpop.xlane.xlu0 %2459
        %v2461 = vadd.f32 %v2407, %v2409
        %v2462 = vadd.f32 %v2461, %v2450
        %v2463 = vadd.f32 %v2462, %v2452
        %2464 = vadd.xlane.f32.xlu0 %v2463
        %v2465 = vpop.xlane.xlu0 %2464
        %v2466 = vrcp.pop 512.0
        %v2467 = vmul.f32 %v2460, %v2466
        %v2468 = vmul.f32 %v2465, %v2466
        %v2469 = vsub.f32 %v2403, %v2467
        %v2470 = vsub.f32 %v2405, %v2467
        %v2471 = vsub.f32 %v2446, %v2467
        %v2472 = vsub.f32 %v2448, %v2467
        %v2473 = vsub.f32 %v2407, %v2468
        %v2474 = vsub.f32 %v2409, %v2468
        %v2475 = vsub.f32 %v2450, %v2468
        %v2476 = vsub.f32 %v2452, %v2468
        %v2477 = vmul.f32 %v2469, %v2469
        %v2478 = vmul.f32 %v2470, %v2470
        %v2479 = vmul.f32 %v2471, %v2471
        %v2480 = vmul.f32 %v2472, %v2472
        %v2481 = vmul.f32 %v2473, %v2473
        %v2482 = vmul.f32 %v2474, %v2474
        %v2483 = vmul.f32 %v2475, %v2475
        %v2484 = vmul.f32 %v2476, %v2476
        %v2485 = vadd.f32 %v2477, %v2478
        %v2486 = vadd.f32 %v2485, %v2479
        %v2487 = vadd.f32 %v2486, %v2480
        %2488 = vadd.xlane.f32.xlu0 %v2487
        %v2489 = vpop.xlane.xlu0 %2488
        %v2490 = vadd.f32 %v2481, %v2482
        %v2491 = vadd.f32 %v2490, %v2483
        %v2492 = vadd.f32 %v2491, %v2484
        %2493 = vadd.xlane.f32.xlu0 %v2492
        %v2494 = vpop.xlane.xlu0 %2493
        %v2495 = vmul.f32 %v2489, %v2466
        %v2496 = vmul.f32 %v2494, %v2466
        %v2497 = vadd.f32 %v2495, 1e-05
        %v2498 = vadd.f32 %v2496, 1e-05
        %v2499 = vrsqrt.pop %v2497
        %v2500 = vrsqrt.pop %v2498
        %v2501 = vmul.f32 %v2469, %v2499
        %v2502 = vmul.f32 %v2470, %v2499
        %v2503 = vmul.f32 %v2471, %v2499
        %v2504 = vmul.f32 %v2472, %v2499
        %v2505 = vmul.f32 %v2473, %v2500
        %v2506 = vmul.f32 %v2474, %v2500
        %v2507 = vmul.f32 %v2475, %v2500
        %v2508 = vmul.f32 %v2476, %v2500
        %v2510 = vlaneseq
        %v2511 = vshrl.u32 %v2510, 7
        %v2512 = vsub.s32 0, %v2511
        %v2513 = vrot.slane %v2454, %v2512
        %v2514 = vlaneseq
        %v2515 = vshrl.u32 %v2514, 7
        %v2516 = vsub.s32 1, %v2515
        %v2517 = vrot.slane %v2454, %v2516
        %v2518 = vlaneseq
        %v2519 = vshrl.u32 %v2518, 7
        %v2520 = vsub.s32 2, %v2519
        %v2521 = vrot.slane %v2454, %v2520
        %v2522 = vlaneseq
        %v2523 = vshrl.u32 %v2522, 7
        %v2524 = vsub.s32 3, %v2523
        %v2525 = vrot.slane %v2454, %v2524
        %v2530 = vmul.f32 %v2501, %v2513
        %v2531 = vmul.f32 %v2502, %v2517
        %v2532 = vmul.f32 %v2503, %v2521
        %v2533 = vmul.f32 %v2504, %v2525
        %v2534 = vmul.f32 %v2505, %v2513
        %v2535 = vmul.f32 %v2506, %v2517
        %v2536 = vmul.f32 %v2507, %v2521
        %v2537 = vmul.f32 %v2508, %v2525
        %v2539 = vlaneseq
        %v2540 = vshrl.u32 %v2539, 7
        %v2541 = vsub.s32 0, %v2540
        %v2542 = vrot.slane %v2455, %v2541
        %v2543 = vlaneseq
        %v2544 = vshrl.u32 %v2543, 7
        %v2545 = vsub.s32 1, %v2544
        %v2546 = vrot.slane %v2455, %v2545
        %v2547 = vlaneseq
        %v2548 = vshrl.u32 %v2547, 7
        %v2549 = vsub.s32 2, %v2548
        %v2550 = vrot.slane %v2455, %v2549
        %v2551 = vlaneseq
        %v2552 = vshrl.u32 %v2551, 7
        %v2553 = vsub.s32 3, %v2552
        %v2554 = vrot.slane %v2455, %v2553
        %v2559 = vadd.f32 %v2530, %v2542
        %v2560 = vadd.f32 %v2531, %v2546
        %v2561 = vadd.f32 %v2532, %v2550
        %v2562 = vadd.f32 %v2533, %v2554
        %v2563 = vadd.f32 %v2534, %v2542
        %v2564 = vadd.f32 %v2535, %v2546
        %v2565 = vadd.f32 %v2536, %v2550
        %v2566 = vadd.f32 %v2537, %v2554
        %v2567 = vmax.f32 %v2559, 0.0
        %v2568 = vmax.f32 %v2560, 0.0
        %v2569 = vmax.f32 %v2561, 0.0
        %v2570 = vmax.f32 %v2562, 0.0
        %v2571 = vmax.f32 %v2563, 0.0
        %v2572 = vmax.f32 %v2564, 0.0
        %v2573 = vmax.f32 %v2565, 0.0
        %v2574 = vmax.f32 %v2566, 0.0
        %v2575 = vpack.c.bf16 %v2571, %v2567
        %v2576 = vpack.c.bf16 %v2572, %v2568
        %v2577 = vpack.c.bf16 %v2573, %v2569
        %v2578 = vpack.c.bf16 %v2574, %v2570
        %v2579 = vld [vmem:[%s12] sm:$0xff]
        %v2580 = vld [vmem:[%s12 + $0x8] sm:$0xff]
        %v2581 = vld [vmem:[%s12 + $0x10] sm:$0xff]
        %v2582 = vld [vmem:[%s12 + $0x18] sm:$0xff]
        %v2583 = vld [vmem:[%s12 + $0x20] sm:$0xff]
        %v2584 = vld [vmem:[%s12 + $0x28] sm:$0xff]
        %v2585 = vld [vmem:[%s12 + $0x30] sm:$0xff]
        %v2586 = vld [vmem:[%s12 + $0x38] sm:$0xff]
        %v2587 = vld [vmem:[%s12 + $0x40] sm:$0xff]
        %v2588 = vld [vmem:[%s12 + $0x48] sm:$0xff]
        %v2589 = vld [vmem:[%s12 + $0x50] sm:$0xff]
        %v2590 = vld [vmem:[%s12 + $0x58] sm:$0xff]
        %v2591 = vld [vmem:[%s12 + $0x60] sm:$0xff]
        %v2592 = vld [vmem:[%s12 + $0x68] sm:$0xff]
        %v2593 = vld [vmem:[%s12 + $0x70] sm:$0xff]
        %v2594 = vld [vmem:[%s12 + $0x78] sm:$0xff]
        %v2595 = vld [vmem:[%s12 + $0x80] sm:$0xff]
        %v2596 = vld [vmem:[%s12 + $0x88] sm:$0xff]
        %v2597 = vld [vmem:[%s12 + $0x90] sm:$0xff]
        %v2598 = vld [vmem:[%s12 + $0x98] sm:$0xff]
        %v2599 = vld [vmem:[%s12 + $0xa0] sm:$0xff]
        %v2600 = vld [vmem:[%s12 + $0xa8] sm:$0xff]
        %v2601 = vld [vmem:[%s12 + $0xb0] sm:$0xff]
        %v2602 = vld [vmem:[%s12 + $0xb8] sm:$0xff]
        %v2603 = vld [vmem:[%s12 + $0xc0] sm:$0xff]
        %v2604 = vld [vmem:[%s12 + $0xc8] sm:$0xff]
        %v2605 = vld [vmem:[%s12 + $0xd0] sm:$0xff]
        %v2606 = vld [vmem:[%s12 + $0xd8] sm:$0xff]
        %v2607 = vld [vmem:[%s12 + $0xe0] sm:$0xff]
        %v2608 = vld [vmem:[%s12 + $0xe8] sm:$0xff]
        %v2609 = vld [vmem:[%s12 + $0xf0] sm:$0xff]
        %v2610 = vld [vmem:[%s12 + $0xf8] sm:$0xff]
        %v2611 = vld [vmem:[%s12 + $0x100] sm:$0xff]
        %v2612 = vld [vmem:[%s12 + $0x108] sm:$0xff]
        %v2613 = vld [vmem:[%s12 + $0x110] sm:$0xff]
        %v2614 = vld [vmem:[%s12 + $0x118] sm:$0xff]
        %v2615 = vld [vmem:[%s12 + $0x120] sm:$0xff]
        %v2616 = vld [vmem:[%s12 + $0x128] sm:$0xff]
        %v2617 = vld [vmem:[%s12 + $0x130] sm:$0xff]
        %v2618 = vld [vmem:[%s12 + $0x138] sm:$0xff]
        %v2619 = vld [vmem:[%s12 + $0x140] sm:$0xff]
        %v2620 = vld [vmem:[%s12 + $0x148] sm:$0xff]
        %v2621 = vld [vmem:[%s12 + $0x150] sm:$0xff]
        %v2622 = vld [vmem:[%s12 + $0x158] sm:$0xff]
        %v2623 = vld [vmem:[%s12 + $0x160] sm:$0xff]
        %v2624 = vld [vmem:[%s12 + $0x168] sm:$0xff]
        %v2625 = vld [vmem:[%s12 + $0x170] sm:$0xff]
        %v2626 = vld [vmem:[%s12 + $0x178] sm:$0xff]
        %v2627 = vld [vmem:[%s12 + $0x180] sm:$0xff]
        %v2628 = vld [vmem:[%s12 + $0x188] sm:$0xff]
        %v2629 = vld [vmem:[%s12 + $0x190] sm:$0xff]
        %v2630 = vld [vmem:[%s12 + $0x198] sm:$0xff]
        %v2631 = vld [vmem:[%s12 + $0x1a0] sm:$0xff]
        %v2632 = vld [vmem:[%s12 + $0x1a8] sm:$0xff]
        %v2633 = vld [vmem:[%s12 + $0x1b0] sm:$0xff]
        %v2634 = vld [vmem:[%s12 + $0x1b8] sm:$0xff]
        %v2635 = vld [vmem:[%s12 + $0x1c0] sm:$0xff]
        %v2636 = vld [vmem:[%s12 + $0x1c8] sm:$0xff]
        %v2637 = vld [vmem:[%s12 + $0x1d0] sm:$0xff]
        %v2638 = vld [vmem:[%s12 + $0x1d8] sm:$0xff]
        %v2639 = vld [vmem:[%s12 + $0x1e0] sm:$0xff]
        %v2640 = vld [vmem:[%s12 + $0x1e8] sm:$0xff]
        %v2641 = vld [vmem:[%s12 + $0x1f0] sm:$0xff]
        %v2642 = vld [vmem:[%s12 + $0x1f8] sm:$0xff]
        %v2643 = vld [vmem:[%s13] sm:$0x3]
        %v2645 = vlaneseq
        %v2646 = vshrl.u32 %v2645, 7
        %v2647 = vsub.s32 0, %v2646
        %v2648 = vrot.slane %v2643, %v2647
        %v2649 = vlaneseq
        %v2650 = vshrl.u32 %v2649, 7
        %v2651 = vsub.s32 1, %v2650
        %v2652 = vrot.slane %v2643, %v2651
        %v2719 = vunpack.c.l.b16 %v2579
        %v2720 = vunpack.c.h.b16 %v2579
        %v2721 = vunpack.c.l.b16 %v2580
        %v2722 = vunpack.c.h.b16 %v2580
        %v2723 = vunpack.c.l.b16 %v2581
        %v2724 = vunpack.c.h.b16 %v2581
        %v2725 = vunpack.c.l.b16 %v2582
        %v2726 = vunpack.c.h.b16 %v2582
        %v2727 = vunpack.c.l.b16 %v2583
        %v2728 = vunpack.c.h.b16 %v2583
        %v2729 = vunpack.c.l.b16 %v2584
        %v2730 = vunpack.c.h.b16 %v2584
        %v2731 = vunpack.c.l.b16 %v2585
        %v2732 = vunpack.c.h.b16 %v2585
        %v2733 = vunpack.c.l.b16 %v2586
        %v2734 = vunpack.c.h.b16 %v2586
        %v2735 = vunpack.c.l.b16 %v2587
        %v2736 = vunpack.c.h.b16 %v2587
        %v2737 = vunpack.c.l.b16 %v2588
        %v2738 = vunpack.c.h.b16 %v2588
        %v2739 = vunpack.c.l.b16 %v2589
        %v2740 = vunpack.c.h.b16 %v2589
        %v2741 = vunpack.c.l.b16 %v2590
        %v2742 = vunpack.c.h.b16 %v2590
        %v2743 = vunpack.c.l.b16 %v2591
        %v2744 = vunpack.c.h.b16 %v2591
        %v2745 = vunpack.c.l.b16 %v2592
        %v2746 = vunpack.c.h.b16 %v2592
        %v2747 = vunpack.c.l.b16 %v2593
        %v2748 = vunpack.c.h.b16 %v2593
        %v2749 = vunpack.c.l.b16 %v2594
        %v2750 = vunpack.c.h.b16 %v2594
        %v2751 = vunpack.c.l.b16 %v2595
        %v2752 = vunpack.c.h.b16 %v2595
        %v2753 = vunpack.c.l.b16 %v2596
        %v2754 = vunpack.c.h.b16 %v2596
        %v2755 = vunpack.c.l.b16 %v2597
        %v2756 = vunpack.c.h.b16 %v2597
        %v2757 = vunpack.c.l.b16 %v2598
        %v2758 = vunpack.c.h.b16 %v2598
        %v2759 = vunpack.c.l.b16 %v2599
        %v2760 = vunpack.c.h.b16 %v2599
        %v2761 = vunpack.c.l.b16 %v2600
        %v2762 = vunpack.c.h.b16 %v2600
        %v2763 = vunpack.c.l.b16 %v2601
        %v2764 = vunpack.c.h.b16 %v2601
        %v2765 = vunpack.c.l.b16 %v2602
        %v2766 = vunpack.c.h.b16 %v2602
        %v2767 = vunpack.c.l.b16 %v2603
        %v2768 = vunpack.c.h.b16 %v2603
        %v2769 = vunpack.c.l.b16 %v2604
        %v2770 = vunpack.c.h.b16 %v2604
        %v2771 = vunpack.c.l.b16 %v2605
        %v2772 = vunpack.c.h.b16 %v2605
        %v2773 = vunpack.c.l.b16 %v2606
        %v2774 = vunpack.c.h.b16 %v2606
        %v2775 = vunpack.c.l.b16 %v2607
        %v2776 = vunpack.c.h.b16 %v2607
        %v2777 = vunpack.c.l.b16 %v2608
        %v2778 = vunpack.c.h.b16 %v2608
        %v2779 = vunpack.c.l.b16 %v2609
        %v2780 = vunpack.c.h.b16 %v2609
        %v2781 = vunpack.c.l.b16 %v2610
        %v2782 = vunpack.c.h.b16 %v2610
        %v2783 = vunpack.c.l.b16 %v2611
        %v2784 = vunpack.c.h.b16 %v2611
        %v2785 = vunpack.c.l.b16 %v2612
        %v2786 = vunpack.c.h.b16 %v2612
        %v2787 = vunpack.c.l.b16 %v2613
        %v2788 = vunpack.c.h.b16 %v2613
        %v2789 = vunpack.c.l.b16 %v2614
        %v2790 = vunpack.c.h.b16 %v2614
        %v2791 = vunpack.c.l.b16 %v2615
        %v2792 = vunpack.c.h.b16 %v2615
        %v2793 = vunpack.c.l.b16 %v2616
        %v2794 = vunpack.c.h.b16 %v2616
        %v2795 = vunpack.c.l.b16 %v2617
        %v2796 = vunpack.c.h.b16 %v2617
        %v2797 = vunpack.c.l.b16 %v2618
        %v2798 = vunpack.c.h.b16 %v2618
        %v2799 = vunpack.c.l.b16 %v2619
        %v2800 = vunpack.c.h.b16 %v2619
        %v2801 = vunpack.c.l.b16 %v2620
        %v2802 = vunpack.c.h.b16 %v2620
        %v2803 = vunpack.c.l.b16 %v2621
        %v2804 = vunpack.c.h.b16 %v2621
        %v2805 = vunpack.c.l.b16 %v2622
        %v2806 = vunpack.c.h.b16 %v2622
        %v2807 = vunpack.c.l.b16 %v2623
        %v2808 = vunpack.c.h.b16 %v2623
        %v2809 = vunpack.c.l.b16 %v2624
        %v2810 = vunpack.c.h.b16 %v2624
        %v2811 = vunpack.c.l.b16 %v2625
        %v2812 = vunpack.c.h.b16 %v2625
        %v2813 = vunpack.c.l.b16 %v2626
        %v2814 = vunpack.c.h.b16 %v2626
        %v2815 = vunpack.c.l.b16 %v2627
        %v2816 = vunpack.c.h.b16 %v2627
        %v2817 = vunpack.c.l.b16 %v2628
        %v2818 = vunpack.c.h.b16 %v2628
        %v2819 = vunpack.c.l.b16 %v2629
        %v2820 = vunpack.c.h.b16 %v2629
        %v2821 = vunpack.c.l.b16 %v2630
        %v2822 = vunpack.c.h.b16 %v2630
        %v2823 = vunpack.c.l.b16 %v2631
        %v2824 = vunpack.c.h.b16 %v2631
        %v2825 = vunpack.c.l.b16 %v2632
        %v2826 = vunpack.c.h.b16 %v2632
        %v2827 = vunpack.c.l.b16 %v2633
        %v2828 = vunpack.c.h.b16 %v2633
        %v2829 = vunpack.c.l.b16 %v2634
        %v2830 = vunpack.c.h.b16 %v2634
        %v2831 = vunpack.c.l.b16 %v2635
        %v2832 = vunpack.c.h.b16 %v2635
        %v2833 = vunpack.c.l.b16 %v2636
        %v2834 = vunpack.c.h.b16 %v2636
        %v2835 = vunpack.c.l.b16 %v2637
        %v2836 = vunpack.c.h.b16 %v2637
        %v2837 = vunpack.c.l.b16 %v2638
        %v2838 = vunpack.c.h.b16 %v2638
        %v2839 = vunpack.c.l.b16 %v2639
        %v2840 = vunpack.c.h.b16 %v2639
        %v2841 = vunpack.c.l.b16 %v2640
        %v2842 = vunpack.c.h.b16 %v2640
        %v2843 = vunpack.c.l.b16 %v2641
        %v2844 = vunpack.c.h.b16 %v2641
        %v2845 = vunpack.c.l.b16 %v2642
        %v2846 = vunpack.c.h.b16 %v2642
        %v2847 = vpack.c.b16 %v2721, %v2719
        %v2848 = vpack.c.b16 %v2722, %v2720
        %v2849 = vpack.c.b16 %v2725, %v2723
        %v2850 = vpack.c.b16 %v2726, %v2724
        %v2851 = vpack.c.b16 %v2729, %v2727
        %v2852 = vpack.c.b16 %v2730, %v2728
        %v2853 = vpack.c.b16 %v2733, %v2731
        %v2854 = vpack.c.b16 %v2734, %v2732
        %v2855 = vpack.c.b16 %v2737, %v2735
        %v2856 = vpack.c.b16 %v2738, %v2736
        %v2857 = vpack.c.b16 %v2741, %v2739
        %v2858 = vpack.c.b16 %v2742, %v2740
        %v2859 = vpack.c.b16 %v2745, %v2743
        %v2860 = vpack.c.b16 %v2746, %v2744
        %v2861 = vpack.c.b16 %v2749, %v2747
        %v2862 = vpack.c.b16 %v2750, %v2748
        %v2863 = vpack.c.b16 %v2753, %v2751
        %v2864 = vpack.c.b16 %v2754, %v2752
        %v2865 = vpack.c.b16 %v2757, %v2755
        %v2866 = vpack.c.b16 %v2758, %v2756
        %v2867 = vpack.c.b16 %v2761, %v2759
        %v2868 = vpack.c.b16 %v2762, %v2760
        %v2869 = vpack.c.b16 %v2765, %v2763
        %v2870 = vpack.c.b16 %v2766, %v2764
        %v2871 = vpack.c.b16 %v2769, %v2767
        %v2872 = vpack.c.b16 %v2770, %v2768
        %v2873 = vpack.c.b16 %v2773, %v2771
        %v2874 = vpack.c.b16 %v2774, %v2772
        %v2875 = vpack.c.b16 %v2777, %v2775
        %v2876 = vpack.c.b16 %v2778, %v2776
        %v2877 = vpack.c.b16 %v2781, %v2779
        %v2878 = vpack.c.b16 %v2782, %v2780
        %v2879 = vpack.c.b16 %v2785, %v2783
        %v2880 = vpack.c.b16 %v2786, %v2784
        %v2881 = vpack.c.b16 %v2789, %v2787
        %v2882 = vpack.c.b16 %v2790, %v2788
        %v2883 = vpack.c.b16 %v2793, %v2791
        %v2884 = vpack.c.b16 %v2794, %v2792
        %v2885 = vpack.c.b16 %v2797, %v2795
        %v2886 = vpack.c.b16 %v2798, %v2796
        %v2887 = vpack.c.b16 %v2801, %v2799
        %v2888 = vpack.c.b16 %v2802, %v2800
        %v2889 = vpack.c.b16 %v2805, %v2803
        %v2890 = vpack.c.b16 %v2806, %v2804
        %v2891 = vpack.c.b16 %v2809, %v2807
        %v2892 = vpack.c.b16 %v2810, %v2808
        %v2893 = vpack.c.b16 %v2813, %v2811
        %v2894 = vpack.c.b16 %v2814, %v2812
        %v2895 = vpack.c.b16 %v2817, %v2815
        %v2896 = vpack.c.b16 %v2818, %v2816
        %v2897 = vpack.c.b16 %v2821, %v2819
        %v2898 = vpack.c.b16 %v2822, %v2820
        %v2899 = vpack.c.b16 %v2825, %v2823
        %v2900 = vpack.c.b16 %v2826, %v2824
        %v2901 = vpack.c.b16 %v2829, %v2827
        %v2902 = vpack.c.b16 %v2830, %v2828
        %v2903 = vpack.c.b16 %v2833, %v2831
        %v2904 = vpack.c.b16 %v2834, %v2832
        %v2905 = vpack.c.b16 %v2837, %v2835
        %v2906 = vpack.c.b16 %v2838, %v2836
        %v2907 = vpack.c.b16 %v2841, %v2839
        %v2908 = vpack.c.b16 %v2842, %v2840
        %v2909 = vpack.c.b16 %v2845, %v2843
        %v2910 = vpack.c.b16 %v2846, %v2844
        %2975 = vmatprep.subr.bf16.mxu0 %v2848
        %2976 = vmatpush1.bf16.msra.mxu0 %v2847
        %2977 = vmatprep.subr.bf16.mxu0 %v2850
        %2978 = vmatpush1.bf16.msra.mxu0 %v2849
        %2979 = vmatprep.subr.bf16.mxu0 %v2852
        %2980 = vmatpush1.bf16.msra.mxu0 %v2851
        %2981 = vmatprep.subr.bf16.mxu0 %v2854
        %2982 = vmatpush1.bf16.msra.mxu0 %v2853
        %2983 = vmatprep.subr.bf16.mxu0 %v2856
        %2984 = vmatpush1.bf16.msra.mxu0 %v2855
        %2985 = vmatprep.subr.bf16.mxu0 %v2858
        %2986 = vmatpush1.bf16.msra.mxu0 %v2857
        %2987 = vmatprep.subr.bf16.mxu0 %v2860
        %2988 = vmatpush1.bf16.msra.mxu0 %v2859
        %2989 = vmatprep.subr.bf16.mxu0 %v2862
        %2990 = vmatpush1.bf16.msra.mxu0 %v2861
        %2991 = vmatprep.subr.bf16.mxu0 %v2864
        %2992 = vmatpush1.bf16.msra.mxu0 %v2863
        %2993 = vmatprep.subr.bf16.mxu0 %v2866
        %2994 = vmatpush1.bf16.msra.mxu0 %v2865
        %2995 = vmatprep.subr.bf16.mxu0 %v2868
        %2996 = vmatpush1.bf16.msra.mxu0 %v2867
        %2997 = vmatprep.subr.bf16.mxu0 %v2870
        %2998 = vmatpush1.bf16.msra.mxu0 %v2869
        %2999 = vmatprep.subr.bf16.mxu0 %v2872
        %3000 = vmatpush1.bf16.msra.mxu0 %v2871
        %3001 = vmatprep.subr.bf16.mxu0 %v2874
        %3002 = vmatpush1.bf16.msra.mxu0 %v2873
        %3003 = vmatprep.subr.bf16.mxu0 %v2876
        %3004 = vmatpush1.bf16.msra.mxu0 %v2875
        %3005 = vmatprep.subr.bf16.mxu0 %v2878
        %3006 = vmatpush1.bf16.msra.mxu0 %v2877
        %3007 = vmatprep.mubr.bf16.mxu0 %v2576
        %3008 = vmatmul.mubr.bf16.gmra.mrb[0].mxu0 %v2575
        %v3009 = vpop.f32.mrb[0].mxu0
        %v3010 = vadd.f32 %v2648, %v3009
        %v3011 = vpop.f32.mrb[0].mxu0
        %v3012 = vadd.f32 %v2652, %v3011
        %v3013 = vpop.f32.mrb[0].mxu0
        %v3014 = vadd.f32 %v2648, %v3013
        %v3015 = vpop.f32.mrb[0].mxu0
        %v3016 = vadd.f32 %v2652, %v3015
        %3017 = vdwg.mxu0
        %3018 = vmatprep.subr.bf16.mxu0 %v2880
        %3019 = vmatpush1.bf16.msra.mxu0 %v2879
        %3020 = vmatprep.subr.bf16.mxu0 %v2882
        %3021 = vmatpush1.bf16.msra.mxu0 %v2881
        %3022 = vmatprep.subr.bf16.mxu0 %v2884
        %3023 = vmatpush1.bf16.msra.mxu0 %v2883
        %3024 = vmatprep.subr.bf16.mxu0 %v2886
        %3025 = vmatpush1.bf16.msra.mxu0 %v2885
        %3026 = vmatprep.subr.bf16.mxu0 %v2888
        %3027 = vmatpush1.bf16.msra.mxu0 %v2887
        %3028 = vmatprep.subr.bf16.mxu0 %v2890
        %3029 = vmatpush1.bf16.msra.mxu0 %v2889
        %3030 = vmatprep.subr.bf16.mxu0 %v2892
        %3031 = vmatpush1.bf16.msra.mxu0 %v2891
        %3032 = vmatprep.subr.bf16.mxu0 %v2894
        %3033 = vmatpush1.bf16.msra.mxu0 %v2893
        %3034 = vmatprep.subr.bf16.mxu0 %v2896
        %3035 = vmatpush1.bf16.msra.mxu0 %v2895
        %3036 = vmatprep.subr.bf16.mxu0 %v2898
        %3037 = vmatpush1.bf16.msra.mxu0 %v2897
        %3038 = vmatprep.subr.bf16.mxu0 %v2900
        %3039 = vmatpush1.bf16.msra.mxu0 %v2899
        %3040 = vmatprep.subr.bf16.mxu0 %v2902
        %3041 = vmatpush1.bf16.msra.mxu0 %v2901
        %3042 = vmatprep.subr.bf16.mxu0 %v2904
        %3043 = vmatpush1.bf16.msra.mxu0 %v2903
        %3044 = vmatprep.subr.bf16.mxu0 %v2906
        %3045 = vmatpush1.bf16.msra.mxu0 %v2905
        %3046 = vmatprep.subr.bf16.mxu0 %v2908
        %3047 = vmatpush1.bf16.msra.mxu0 %v2907
        %3048 = vmatprep.subr.bf16.mxu0 %v2910
        %3049 = vmatpush1.bf16.msra.mxu0 %v2909
        %3050 = vmatprep.mubr.bf16.mxu0 %v2578
        %3051 = vmatmul.mubr.bf16.gmra.mrb[0].mxu0 %v2577
        %v3052 = vpop.f32.mrb[0].mxu0
        %v3053 = vadd.f32 %v3010, %v3052
        %v3054 = vpop.f32.mrb[0].mxu0
        %v3055 = vadd.f32 %v3012, %v3054
        %v3056 = vpop.f32.mrb[0].mxu0
        %v3057 = vadd.f32 %v3014, %v3056
        %v3058 = vpop.f32.mrb[0].mxu0
        %v3059 = vadd.f32 %v3016, %v3058
        %3060 = vdwg.mxu0
        %v3061 = vld [vmem:[%s14] sm:$0x3]
        %v3062 = vld [vmem:[%s15] sm:$0x3]
        %v3063 = vadd.f32 %v3053, %v3055
        %3064 = vadd.xlane.f32.xlu0 %v3063
        %v3065 = vpop.xlane.xlu0 %3064
        %v3066 = vadd.f32 %v3057, %v3059
        %3067 = vadd.xlane.f32.xlu0 %v3066
        %v3068 = vpop.xlane.xlu0 %3067
        %v3069 = vrcp.pop 256.0
        %v3070 = vmul.f32 %v3065, %v3069
        %v3071 = vmul.f32 %v3068, %v3069
        %v3072 = vsub.f32 %v3053, %v3070
        %v3073 = vsub.f32 %v3055, %v3070
        %v3074 = vsub.f32 %v3057, %v3071
        %v3075 = vsub.f32 %v3059, %v3071
        %v3076 = vmul.f32 %v3072, %v3072
        %v3077 = vmul.f32 %v3073, %v3073
        %v3078 = vmul.f32 %v3074, %v3074
        %v3079 = vmul.f32 %v3075, %v3075
        %v3080 = vadd.f32 %v3076, %v3077
        %3081 = vadd.xlane.f32.xlu0 %v3080
        %v3082 = vpop.xlane.xlu0 %3081
        %v3083 = vadd.f32 %v3078, %v3079
        %3084 = vadd.xlane.f32.xlu0 %v3083
        %v3085 = vpop.xlane.xlu0 %3084
        %v3086 = vmul.f32 %v3082, %v3069
        %v3087 = vmul.f32 %v3085, %v3069
        %v3088 = vadd.f32 %v3086, 1e-05
        %v3089 = vadd.f32 %v3087, 1e-05
        %v3090 = vrsqrt.pop %v3088
        %v3091 = vrsqrt.pop %v3089
        %v3092 = vmul.f32 %v3072, %v3090
        %v3093 = vmul.f32 %v3073, %v3090
        %v3094 = vmul.f32 %v3074, %v3091
        %v3095 = vmul.f32 %v3075, %v3091
        %v3097 = vlaneseq
        %v3098 = vshrl.u32 %v3097, 7
        %v3099 = vsub.s32 0, %v3098
        %v3100 = vrot.slane %v3061, %v3099
        %v3101 = vlaneseq
        %v3102 = vshrl.u32 %v3101, 7
        %v3103 = vsub.s32 1, %v3102
        %v3104 = vrot.slane %v3061, %v3103
        %v3107 = vmul.f32 %v3092, %v3100
        %v3108 = vmul.f32 %v3093, %v3104
        %v3109 = vmul.f32 %v3094, %v3100
        %v3110 = vmul.f32 %v3095, %v3104
        %v3112 = vlaneseq
        %v3113 = vshrl.u32 %v3112, 7
        %v3114 = vsub.s32 0, %v3113
        %v3115 = vrot.slane %v3062, %v3114
        %v3116 = vlaneseq
        %v3117 = vshrl.u32 %v3116, 7
        %v3118 = vsub.s32 1, %v3117
        %v3119 = vrot.slane %v3062, %v3118
        %v3122 = vadd.f32 %v3107, %v3115
        %v3123 = vadd.f32 %v3108, %v3119
        %v3124 = vadd.f32 %v3109, %v3115
        %v3125 = vadd.f32 %v3110, %v3119
        %v3126 = vmax.f32 %v3122, 0.0
        %v3127 = vmax.f32 %v3123, 0.0
        %v3128 = vmax.f32 %v3124, 0.0
        %v3129 = vmax.f32 %v3125, 0.0
        %v3130 = vpack.c.bf16 %v3128, %v3126
        %v3131 = vpack.c.bf16 %v3129, %v3127
        %v3132 = vld [vmem:[%s16] sm:$0xf]
        %v3133 = vld [vmem:[%s16 + $0x4] sm:$0xf]
        %v3134 = vld [vmem:[%s16 + $0x8] sm:$0xf]
        %v3135 = vld [vmem:[%s16 + $0xc] sm:$0xf]
        %v3136 = vld [vmem:[%s16 + $0x10] sm:$0xf]
        %v3137 = vld [vmem:[%s16 + $0x14] sm:$0xf]
        %v3138 = vld [vmem:[%s16 + $0x18] sm:$0xf]
        %v3139 = vld [vmem:[%s16 + $0x1c] sm:$0xf]
        %v3140 = vld [vmem:[%s16 + $0x20] sm:$0xf]
        %v3141 = vld [vmem:[%s16 + $0x24] sm:$0xf]
        %v3142 = vld [vmem:[%s16 + $0x28] sm:$0xf]
        %v3143 = vld [vmem:[%s16 + $0x2c] sm:$0xf]
        %v3144 = vld [vmem:[%s16 + $0x30] sm:$0xf]
        %v3145 = vld [vmem:[%s16 + $0x34] sm:$0xf]
        %v3146 = vld [vmem:[%s16 + $0x38] sm:$0xf]
        %v3147 = vld [vmem:[%s16 + $0x3c] sm:$0xf]
        %v3148 = vld [vmem:[%s16 + $0x40] sm:$0xf]
        %v3149 = vld [vmem:[%s16 + $0x44] sm:$0xf]
        %v3150 = vld [vmem:[%s16 + $0x48] sm:$0xf]
        %v3151 = vld [vmem:[%s16 + $0x4c] sm:$0xf]
        %v3152 = vld [vmem:[%s16 + $0x50] sm:$0xf]
        %v3153 = vld [vmem:[%s16 + $0x54] sm:$0xf]
        %v3154 = vld [vmem:[%s16 + $0x58] sm:$0xf]
        %v3155 = vld [vmem:[%s16 + $0x5c] sm:$0xf]
        %v3156 = vld [vmem:[%s16 + $0x60] sm:$0xf]
        %v3157 = vld [vmem:[%s16 + $0x64] sm:$0xf]
        %v3158 = vld [vmem:[%s16 + $0x68] sm:$0xf]
        %v3159 = vld [vmem:[%s16 + $0x6c] sm:$0xf]
        %v3160 = vld [vmem:[%s16 + $0x70] sm:$0xf]
        %v3161 = vld [vmem:[%s16 + $0x74] sm:$0xf]
        %v3162 = vld [vmem:[%s16 + $0x78] sm:$0xf]
        %v3163 = vld [vmem:[%s16 + $0x7c] sm:$0xf]
        %v3164 = vld [vmem:[%s17] sm:$0x1]
        %v3166 = vlaneseq
        %v3167 = vshrl.u32 %v3166, 7
        %v3168 = vsub.s32 0, %v3167
        %v3169 = vrot.slane %v3164, %v3168
        %v3203 = vunpack.c.l.b16 %v3132
        %v3204 = vunpack.c.l.b16 %v3133
        %v3205 = vunpack.c.l.b16 %v3134
        %v3206 = vunpack.c.l.b16 %v3135
        %v3207 = vunpack.c.l.b16 %v3136
        %v3208 = vunpack.c.l.b16 %v3137
        %v3209 = vunpack.c.l.b16 %v3138
        %v3210 = vunpack.c.l.b16 %v3139
        %v3211 = vunpack.c.l.b16 %v3140
        %v3212 = vunpack.c.l.b16 %v3141
        %v3213 = vunpack.c.l.b16 %v3142
        %v3214 = vunpack.c.l.b16 %v3143
        %v3215 = vunpack.c.l.b16 %v3144
        %v3216 = vunpack.c.l.b16 %v3145
        %v3217 = vunpack.c.l.b16 %v3146
        %v3218 = vunpack.c.l.b16 %v3147
        %v3219 = vunpack.c.l.b16 %v3148
        %v3220 = vunpack.c.l.b16 %v3149
        %v3221 = vunpack.c.l.b16 %v3150
        %v3222 = vunpack.c.l.b16 %v3151
        %v3223 = vunpack.c.l.b16 %v3152
        %v3224 = vunpack.c.l.b16 %v3153
        %v3225 = vunpack.c.l.b16 %v3154
        %v3226 = vunpack.c.l.b16 %v3155
        %v3227 = vunpack.c.l.b16 %v3156
        %v3228 = vunpack.c.l.b16 %v3157
        %v3229 = vunpack.c.l.b16 %v3158
        %v3230 = vunpack.c.l.b16 %v3159
        %v3231 = vunpack.c.l.b16 %v3160
        %v3232 = vunpack.c.l.b16 %v3161
        %v3233 = vunpack.c.l.b16 %v3162
        %v3234 = vunpack.c.l.b16 %v3163
        %v3235 = vpack.c.b16 %v3204, %v3203
        %v3236 = vpack.c.b16 %v3206, %v3205
        %v3237 = vpack.c.b16 %v3208, %v3207
        %v3238 = vpack.c.b16 %v3210, %v3209
        %v3239 = vpack.c.b16 %v3212, %v3211
        %v3240 = vpack.c.b16 %v3214, %v3213
        %v3241 = vpack.c.b16 %v3216, %v3215
        %v3242 = vpack.c.b16 %v3218, %v3217
        %v3243 = vpack.c.b16 %v3220, %v3219
        %v3244 = vpack.c.b16 %v3222, %v3221
        %v3245 = vpack.c.b16 %v3224, %v3223
        %v3246 = vpack.c.b16 %v3226, %v3225
        %v3247 = vpack.c.b16 %v3228, %v3227
        %v3248 = vpack.c.b16 %v3230, %v3229
        %v3249 = vpack.c.b16 %v3232, %v3231
        %v3250 = vpack.c.b16 %v3234, %v3233
        %3267 = vmatprep.subr.bf16.mxu0 0
        %3268 = vmatpush1.bf16.msra.mxu0 %v3235
        %3269 = vmatprep.subr.bf16.mxu0 0
        %3270 = vmatpush1.bf16.msra.mxu0 %v3236
        %3271 = vmatprep.subr.bf16.mxu0 0
        %3272 = vmatpush1.bf16.msra.mxu0 %v3237
        %3273 = vmatprep.subr.bf16.mxu0 0
        %3274 = vmatpush1.bf16.msra.mxu0 %v3238
        %3275 = vmatprep.subr.bf16.mxu0 0
        %3276 = vmatpush1.bf16.msra.mxu0 %v3239
        %3277 = vmatprep.subr.bf16.mxu0 0
        %3278 = vmatpush1.bf16.msra.mxu0 %v3240
        %3279 = vmatprep.subr.bf16.mxu0 0
        %3280 = vmatpush1.bf16.msra.mxu0 %v3241
        %3281 = vmatprep.subr.bf16.mxu0 0
        %3282 = vmatpush1.bf16.msra.mxu0 %v3242
        %3283 = vmatprep.subr.bf16.mxu0 0
        %3284 = vmatpush1.bf16.msra.mxu0 %v3243
        %3285 = vmatprep.subr.bf16.mxu0 0
        %3286 = vmatpush1.bf16.msra.mxu0 %v3244
        %3287 = vmatprep.subr.bf16.mxu0 0
        %3288 = vmatpush1.bf16.msra.mxu0 %v3245
        %3289 = vmatprep.subr.bf16.mxu0 0
        %3290 = vmatpush1.bf16.msra.mxu0 %v3246
        %3291 = vmatprep.subr.bf16.mxu0 0
        %3292 = vmatpush1.bf16.msra.mxu0 %v3247
        %3293 = vmatprep.subr.bf16.mxu0 0
        %3294 = vmatpush1.bf16.msra.mxu0 %v3248
        %3295 = vmatprep.subr.bf16.mxu0 0
        %3296 = vmatpush1.bf16.msra.mxu0 %v3249
        %3297 = vmatprep.subr.bf16.mxu0 0
        %3298 = vmatpush1.bf16.msra.mxu0 %v3250
        %3299 = vmatprep.mubr.bf16.mxu0 %v3131
        %3300 = vmatmul.mubr.bf16.gmra.mrb[0].mxu0 %v3130
        %v3301 = vpop.f32.mrb[0].mxu0
        %v3302 = vadd.f32 %v3169, %v3301
        %v3303 = vpop.f32.mrb[0].mxu0
        %v3304 = vpop.f32.mrb[0].mxu0
        %v3305 = vadd.f32 %v3169, %v3304
        %v3306 = vpop.f32.mrb[0].mxu0
        %3307 = vdwg.mxu0
        %3308 = vst [vmem:[%s649] sm:$0xff] %v3302
        %3309 = vst [vmem:[%s649 + $0x8] sm:$0xff] %v3305
      $region100: #{forward.1} parent=91 // pred_fallthru
        _
      %s3310 = smul.u32 2, %s35
      %p3311 = scmp.lt.s32.totalorder %s3310, 1
      %s3312 = scalar_select %p3311, %s3310, 1
      %s3313 = smul.addr %s3312, 8
      %s3314 = scalar_lea.vmem %s18, %s3313
      %s3315 = smul.u32 2, %s35
      %p3316 = scmp.lt.s32.totalorder %s3315, 1
      %s3317 = scalar_select %p3316, %s3315, 1
      %s3318 = smul.addr %s3317, 8
      %s3319 = scalar_lea.vmem %s19, %s3318
      // Predicated region
      $region101: #{forward.1} parent=91 // pred_check
        %p3320 = pneg %p446
      $region102: #{forward.1} parent=91 // pred_check_branch
        %3322 = sbr.rel (%p3320) target = $region104
      $region103: #{forward.1} parent=91 // pred_region
        %s3323 = smul.u32 2, %s35
      $region104: #{forward.1} parent=91 // pred_fallthru
        _
      // Predicated region
      $region105: #{forward.1} parent=91 // pred_check
        %p3324 = pneg %p472
      $region106: #{forward.1} parent=91 // pred_check_branch
        %3326 = sbr.rel (%p3324) target = $region108
      $region107: #{forward.1} parent=91 // pred_region
        %s3327 = smul.u32 2, %s35
      $region108: #{forward.1} parent=91 // pred_fallthru
        _
      // Predicated region
      $region109: #{forward.1} parent=91 // pred_check
        %p3328 = pneg %p446
      $region110: #{forward.1} parent=91 // pred_check_branch
        %3330 = sbr.rel (%p3328) target = $region112
      $region111: #{forward.1} parent=91 // pred_region
        %s3331 = smul.u32 2, %s35
        %p3332 = scmp.lt.s32.totalorder %s3331, 1
        %s3333 = scalar_select %p3332, %s3331, 1
        %s3334 = smul.addr %s3333, 8
        %s3335 = scalar_lea.vmem %s18, %s3334
      $region112: #{forward.1} parent=91 // pred_fallthru
        _
      // Predicated region
      $region113: #{forward.1} parent=91 // pred_check
        %p3336 = pneg %p472
      $region114: #{forward.1} parent=91 // pred_check_branch
        %3338 = sbr.rel (%p3336) target = $region116
      $region115: #{forward.1} parent=91 // pred_region
        %s3339 = smul.u32 2, %s35
        %p3340 = scmp.lt.s32.totalorder %s3339, 1
        %s3341 = scalar_select %p3340, %s3339, 1
        %s3342 = smul.addr %s3341, 8
        %s3343 = scalar_lea.vmem %s19, %s3342
      $region116: #{forward.1} parent=91 // pred_fallthru
        _
    $region92: #{forward.1} parent=5 // pred_fallthru
      _
    %p3344 = scmp.le.s32.totalorder 2, %s26
    // Predicated region
    $region117: #{forward.1} parent=5 // pred_check
      %p3345 = pneg %p3344
    $region118: #{forward.1} parent=5 // pred_check_branch
      %3347 = sbr.rel (%p3345) target = $region120
    $region119: #{forward.1} parent=5 // pred_region
      %s3348 = ssub.s32 %s26, 2
    $region120: #{forward.1} parent=5 // pred_fallthru
      _
  $region6: #{forward.1} parent=0 // loop_footer
    %s30 = sadd.s32 1, %s26
  $region7: #{forward.1} parent=0 // loop_footer_branch
    %25 = sbr.rel target = $region3
  $region8: #{forward.1} parent=0 // loop_exit
    _

</llo_original>
